<compile_context>
chip_gen: v7x
topology: tpu7x:2x2x1
jax: 0.10.0
libtpu: 0.0.40
codegen_flags: <defaults>
</compile_context>

<pallas_src>
import functools

import jax
import jax.numpy as jnp
from jax import lax
from jax.experimental import pallas as pl
from jax.experimental.pallas import tpu as pltpu


# ---------------------------------------------------------------------------
# Fused Conv2d(5x5, pad=2) + BatchNorm2d(eval) + ReLU kernel.
# One grid step == one batch image.
# ---------------------------------------------------------------------------
def _conv5x5_bn_relu_kernel(x_ref, w_ref, scale_ref, bias_ref, o_ref, xpad_ref,
                            *, H, W, Wpp, use_bf16):
    cout = o_ref.shape[-1]
    m_rows = H * Wpp

    # Scatter the (H, W, Cin) activation tile into the zero-padded, row-major
    # flattened scratch: pixel (h, w) lives at flat row (h + 2) * Wpp + (w + 2).
    xpad_ref[...] = jnp.zeros_like(xpad_ref)
    for h in range(H):                       # H is small & static -> unrolled
        xpad_ref[pl.ds((h + 2) * Wpp + 2, W), :] = x_ref[h].astype(jnp.float32)

    # 25 shifted contiguous-slice matmuls accumulated in f32 on the MXU.
    # With row pitch Wpp, the flat offset dy*Wpp + dx realises the (dy, dx)
    # tap of the 5x5 stencil for every "wide" output row m = h*Wpp + w; the
    # junk columns w >= W are dropped before the store.
    acc = jnp.zeros((m_rows, cout), jnp.float32)
    for dy in range(5):
        for dx in range(5):
            lhs = xpad_ref[pl.ds(dy * Wpp + dx, m_rows), :]    # (m_rows, Cin)
            rhs = w_ref[dy * 5 + dx]                           # (Cin, Cout)
            if use_bf16:
                lhs = lhs.astype(jnp.bfloat16)
                rhs = rhs.astype(jnp.bfloat16)
            acc = acc + jnp.dot(lhs, rhs, preferred_element_type=jnp.float32)

    # Fused eval-mode BatchNorm + ReLU epilogue (f32); scale/bias are resident
    # (1, Cout) rows broadcast over the tile.
    y = jnp.maximum(acc * scale_ref[...] + bias_ref[...], 0.0)

    # Drop the horizontal-pad junk columns and store the dense (H, W, Cout)
    # tile.  The reshape is a layout no-op because Wpp % 8 == 0.
    y = y.reshape(H, Wpp, cout)
    o_ref[...] = y[:, :W, :].astype(o_ref.dtype)


# ---------------------------------------------------------------------------
# Wrapper-level ops (pure XLA glue)
# ---------------------------------------------------------------------------
def _maxpool2x2(x):
    """2x2 / stride-2 max pool on NHWC (floor semantics, like nn.MaxPool2d(2))."""
    n, h_in, w_in, c = x.shape
    h, w = h_in // 2, w_in // 2
    x = x[:, :2 * h, :2 * w, :]
    return jnp.max(x.reshape(n, h, 2, w, 2, c), axis=(2, 4))


def conv5x5_bn_relu(x, w, conv_b, gamma, beta, mean, var, *, down=False,
                    eps=1e-5, use_bf16_matmul=False):
    """[MaxPool2d(2)] -> Conv2d(5, pad=2) -> BatchNorm2d(eval) -> ReLU.

    x: (N, H, W, Cin) NHWC.  w: (Cout, Cin, 5, 5) (PyTorch weight layout).
    """
    if down:
        x = _maxpool2x2(x)

    N, H, W, Cin = x.shape
    Cout = w.shape[0]

    Wpp = max(8, ((W + 4 + 7) // 8) * 8)     # padded row pitch, sublane aligned
    Hp = H + 5                               # 2 pad rows on top, 3 on the bottom

    # Weight taps: (Cout, Cin, 5, 5) -> (25, Cin, Cout), tap index t = dy*5+dx.
    wt = jnp.transpose(w, (2, 3, 1, 0)).reshape(25, Cin, Cout).astype(jnp.float32)

    # Fold conv bias + eval-mode BatchNorm into per-channel scale / bias.
    scale = gamma / jnp.sqrt(var + eps)
    bias = (conv_b - mean) * scale + beta
    scale2 = scale.reshape(1, Cout).astype(jnp.float32)
    bias2 = bias.reshape(1, Cout).astype(jnp.float32)

    kernel = functools.partial(
        _conv5x5_bn_relu_kernel, H=H, W=W, Wpp=Wpp, use_bf16=use_bf16_matmul)

    out = pl.pallas_call(
        kernel,
        grid=(N,),
        in_specs=[
            pl.BlockSpec((None, H, W, Cin), lambda n: (n, 0, 0, 0)),   # per image
            pl.BlockSpec((25, Cin, Cout), lambda n: (0, 0, 0)),        # resident
            pl.BlockSpec((1, Cout), lambda n: (0, 0)),                 # resident
            pl.BlockSpec((1, Cout), lambda n: (0, 0)),                 # resident
        ],
        out_specs=pl.BlockSpec((None, H, W, Cout), lambda n: (n, 0, 0, 0)),
        out_shape=jax.ShapeDtypeStruct((N, H, W, Cout), x.dtype),
        scratch_shapes=[pltpu.VMEM((Hp * Wpp, Cin), jnp.float32)],
        compiler_params=pltpu.CompilerParams(
            dimension_semantics=("parallel",)),
    )(x, wt, scale2, bias2)
    return out


# ---------------------------------------------------------------------------
# PoseEncoder
# ---------------------------------------------------------------------------
LAYER_CFG = [  # (cin, cout, mode); cin=None -> use in_channels
    (None, 32, 'down'),
    (32, 32, None),
    (32, 64, 'down'),
    (64, 64, None),
    (64, 128, 'down'),
    (128, 128, None),
    (128, 256, 'down'),
    (256, 256, None),
]


def init_pose_encoder_params(key, in_channels):
    cfgs = [((in_channels if c is None else c), o, m) for (c, o, m) in LAYER_CFG]
    params = []
    for (cin, cout, mode) in cfgs:
        key, kw, kb = jax.random.split(key, 3)
        fan_in = cin * 5 * 5
        bound = 1.0 / (fan_in ** 0.5)
        w = jax.random.uniform(kw, (cout, cin, 5, 5), jnp.float32, -bound, bound)
        b = jax.random.uniform(kb, (cout,), jnp.float32, -bound, bound)
        params.append({
            'mode': mode,
            'w': w,
            'b': b,
            'gamma': jnp.ones((cout,), jnp.float32),
            'beta': jnp.zeros((cout,), jnp.float32),
            'mean': jnp.zeros((cout,), jnp.float32),
            'var': jnp.ones((cout,), jnp.float32),
        })
    return params


def pose_encoder_forward(params, x_nchw, *, use_bf16_matmul=False):
    # Input is NCHW (PyTorch convention); kernels run NHWC internally.
    h = jnp.transpose(x_nchw, (0, 2, 3, 1))
    outputs = []
    for p in params:
        h = conv5x5_bn_relu(h, p['w'], p['b'], p['gamma'], p['beta'],
                            p['mean'], p['var'], down=(p['mode'] == 'down'),
                            use_bf16_matmul=use_bf16_matmul)
        outputs.append(h)

    o = [jnp.transpose(t, (0, 3, 1, 2)) for t in outputs]   # back to NCHW
    # Matches: return (output[-1], [output[5], output[3], output[0]],
    #                  [output[5], output[3], output[1]])
    return (o[-1], [o[5], o[3], o[0]], [o[5], o[3], o[1]])


# ---------------------------------------------------------------------------
# Pure-JAX reference (lax.conv) for numerical validation
# ---------------------------------------------------------------------------
def _reference_block(x, w, b, gamma, beta, mean, var, *, down, eps=1e-5):
    if down:
        x = _maxpool2x2(x)
    y = lax.conv_general_dilated(
        x, jnp.transpose(w, (2, 3, 1, 0)),
        window_strides=(1, 1), padding=((2, 2), (2, 2)),
        dimension_numbers=("NHWC", "HWIO", "NHWC"),
        precision=lax.Precision.HIGHEST)
    y = y + b
    y = (y - mean) * (gamma / jnp.sqrt(var + eps)) + beta
    return jnp.maximum(y, 0.0)


def _reference_forward(params, x_nchw):
    h = jnp.transpose(x_nchw, (0, 2, 3, 1))
    outs = []
    for p in params:
        h = _reference_block(h, p['w'], p['b'], p['gamma'], p['beta'],
                             p['mean'], p['var'], down=(p['mode'] == 'down'))
        outs.append(h)
    o = [jnp.transpose(t, (0, 3, 1, 2)) for t in outs]
    return (o[-1], [o[5], o[3], o[0]], [o[5], o[3], o[1]])


if __name__ == "__main__":
    key = jax.random.PRNGKey(0)
    key, kx, kp = jax.random.split(key, 3)

    in_channels = 4
    x = jax.random.normal(kx, (2, in_channels, 16, 16), jnp.float32)

    params = init_pose_encoder_params(kp, in_channels)
    out, skips_a, skips_b = pose_encoder_forward(params, x)

    jax.block_until_ready(out)
    for t in skips_a + skips_b:
        jax.block_until_ready(t)

    # shape checks (spatial: 16 -> 8 -> 4 -> 2 -> 1)
    assert out.shape == (2, 256, 1, 1)
    assert skips_a[0].shape == (2, 128, 2, 2)   # conv6
    assert skips_a[1].shape == (2, 64, 4, 4)    # conv4
    assert skips_a[2].shape == (2, 32, 8, 8)    # conv1
    assert skips_b[2].shape == (2, 32, 8, 8)    # conv2

    # numerical check against a pure-JAX (lax.conv) reference forward pass
    ref_out, ref_a, ref_b = _reference_forward(params, x)
    got = [out] + skips_a + skips_b
    want = [ref_out] + ref_a + ref_b
    max_err = max(float(jnp.max(jnp.abs(g - r))) for g, r in zip(got, want))
    assert max_err < 1e-2, f"max abs error vs reference: {max_err}"

    print("KERNEL_OK")
</pallas_src>

<mosaic_0001>
module attributes {stable_mosaic.version = 11 : i64} {
  func.func @_conv5x5_bn_relu_kernel(%arg0: i32, %arg1: memref<1x8x8x4xf32, #tpu.memory_space<vmem>>, %arg2: memref<25x4x32xf32, #tpu.memory_space<vmem>>, %arg3: memref<1x32xf32, #tpu.memory_space<vmem>>, %arg4: memref<1x32xf32, #tpu.memory_space<vmem>>, %arg5: memref<1x8x8x32xf32, #tpu.memory_space<vmem>>, %arg6: memref<208x4xf32, #tpu.memory_space<vmem>>) attributes {dimension_semantics = [#tpu.dimension_semantics<parallel>], iteration_bounds = array<i64: 2>, scalar_prefetch = 0 : i64, scratch_operands = 1 : i64, tpu.core_type = #tpu.core_type<tc>, window_params = [{transform_indices = @transform_0, window_bounds = array<i64: 1, 8, 8, 4>}, {pipeline_mode = #tpu.pipeline_mode<synchronous>, transform_indices = @transform_1, window_bounds = array<i64: 25, 4, 32>}, {pipeline_mode = #tpu.pipeline_mode<synchronous>, transform_indices = @transform_2, window_bounds = array<i64: 1, 32>}, {pipeline_mode = #tpu.pipeline_mode<synchronous>, transform_indices = @transform_3, window_bounds = array<i64: 1, 32>}, {transform_indices = @transform_4, window_bounds = array<i64: 1, 8, 8, 32>}]} {
    %cst = arith.constant 0.000000e+00 : f32
    %0 = vector.broadcast %cst : f32 to vector<208x4xf32>
    %c0 = arith.constant 0 : index
    %c0_0 = arith.constant 0 : index
    %1 = vector.load %arg6[%c0, %c0_0] : memref<208x4xf32, #tpu.memory_space<vmem>>, vector<208x4xf32>
    tpu.vector_store %arg6[%c0, %c0_0], %0 {strides = array<i32>} : memref<208x4xf32, #tpu.memory_space<vmem>>, vector<208x4xf32>,
    %c0_1 = arith.constant 0 : index
    %c0_2 = arith.constant 0 : index
    %c0_3 = arith.constant 0 : index
    %c0_4 = arith.constant 0 : index
    %2 = vector.load %arg1[%c0_1, %c0_2, %c0_3, %c0_4] : memref<1x8x8x4xf32, #tpu.memory_space<vmem>>, vector<1x1x8x4xf32>
    %3 = vector.shape_cast %2 : vector<1x1x8x4xf32> to vector<8x4xf32>
    %c34 = arith.constant 34 : index
    %c0_5 = arith.constant 0 : index
    %4 = vector.load %arg6[%c34, %c0_5] : memref<208x4xf32, #tpu.memory_space<vmem>>, vector<8x4xf32>
    tpu.vector_store %arg6[%c34, %c0_5], %3 {strides = array<i32>} : memref<208x4xf32, #tpu.memory_space<vmem>>, vector<8x4xf32>,
    %c0_6 = arith.constant 0 : index
    %c1 = arith.constant 1 : index
    %c0_7 = arith.constant 0 : index
    %c0_8 = arith.constant 0 : index
    %5 = vector.load %arg1[%c0_6, %c1, %c0_7, %c0_8] : memref<1x8x8x4xf32, #tpu.memory_space<vmem>>, vector<1x1x8x4xf32>
    %6 = vector.shape_cast %5 : vector<1x1x8x4xf32> to vector<8x4xf32>
    %c50 = arith.constant 50 : index
    %c0_9 = arith.constant 0 : index
    %7 = vector.load %arg6[%c50, %c0_9] : memref<208x4xf32, #tpu.memory_space<vmem>>, vector<8x4xf32>
    tpu.vector_store %arg6[%c50, %c0_9], %6 {strides = array<i32>} : memref<208x4xf32, #tpu.memory_space<vmem>>, vector<8x4xf32>,
    %c0_10 = arith.constant 0 : index
    %c2 = arith.constant 2 : index
    %c0_11 = arith.constant 0 : index
    %c0_12 = arith.constant 0 : index
    %8 = vector.load %arg1[%c0_10, %c2, %c0_11, %c0_12] : memref<1x8x8x4xf32, #tpu.memory_space<vmem>>, vector<1x1x8x4xf32>
    %9 = vector.shape_cast %8 : vector<1x1x8x4xf32> to vector<8x4xf32>
    %c66 = arith.constant 66 : index
    %c0_13 = arith.constant 0 : index
    %10 = vector.load %arg6[%c66, %c0_13] : memref<208x4xf32, #tpu.memory_space<vmem>>, vector<8x4xf32>
    tpu.vector_store %arg6[%c66, %c0_13], %9 {strides = array<i32>} : memref<208x4xf32, #tpu.memory_space<vmem>>, vector<8x4xf32>,
    %c0_14 = arith.constant 0 : index
    %c3 = arith.constant 3 : index
    %c0_15 = arith.constant 0 : index
    %c0_16 = arith.constant 0 : index
    %11 = vector.load %arg1[%c0_14, %c3, %c0_15, %c0_16] : memref<1x8x8x4xf32, #tpu.memory_space<vmem>>, vector<1x1x8x4xf32>
    %12 = vector.shape_cast %11 : vector<1x1x8x4xf32> to vector<8x4xf32>
    %c82 = arith.constant 82 : index
    %c0_17 = arith.constant 0 : index
    %13 = vector.load %arg6[%c82, %c0_17] : memref<208x4xf32, #tpu.memory_space<vmem>>, vector<8x4xf32>
    tpu.vector_store %arg6[%c82, %c0_17], %12 {strides = array<i32>} : memref<208x4xf32, #tpu.memory_space<vmem>>, vector<8x4xf32>,
    %c0_18 = arith.constant 0 : index
    %c4 = arith.constant 4 : index
    %c0_19 = arith.constant 0 : index
    %c0_20 = arith.constant 0 : index
    %14 = vector.load %arg1[%c0_18, %c4, %c0_19, %c0_20] : memref<1x8x8x4xf32, #tpu.memory_space<vmem>>, vector<1x1x8x4xf32>
    %15 = vector.shape_cast %14 : vector<1x1x8x4xf32> to vector<8x4xf32>
    %c98 = arith.constant 98 : index
    %c0_21 = arith.constant 0 : index
    %16 = vector.load %arg6[%c98, %c0_21] : memref<208x4xf32, #tpu.memory_space<vmem>>, vector<8x4xf32>
    tpu.vector_store %arg6[%c98, %c0_21], %15 {strides = array<i32>} : memref<208x4xf32, #tpu.memory_space<vmem>>, vector<8x4xf32>,
    %c0_22 = arith.constant 0 : index
    %c5 = arith.constant 5 : index
    %c0_23 = arith.constant 0 : index
    %c0_24 = arith.constant 0 : index
    %17 = vector.load %arg1[%c0_22, %c5, %c0_23, %c0_24] : memref<1x8x8x4xf32, #tpu.memory_space<vmem>>, vector<1x1x8x4xf32>
    %18 = vector.shape_cast %17 : vector<1x1x8x4xf32> to vector<8x4xf32>
    %c114 = arith.constant 114 : index
    %c0_25 = arith.constant 0 : index
    %19 = vector.load %arg6[%c114, %c0_25] : memref<208x4xf32, #tpu.memory_space<vmem>>, vector<8x4xf32>
    tpu.vector_store %arg6[%c114, %c0_25], %18 {strides = array<i32>} : memref<208x4xf32, #tpu.memory_space<vmem>>, vector<8x4xf32>,
    %c0_26 = arith.constant 0 : index
    %c6 = arith.constant 6 : index
    %c0_27 = arith.constant 0 : index
    %c0_28 = arith.constant 0 : index
    %20 = vector.load %arg1[%c0_26, %c6, %c0_27, %c0_28] : memref<1x8x8x4xf32, #tpu.memory_space<vmem>>, vector<1x1x8x4xf32>
    %21 = vector.shape_cast %20 : vector<1x1x8x4xf32> to vector<8x4xf32>
    %c130 = arith.constant 130 : index
    %c0_29 = arith.constant 0 : index
    %22 = vector.load %arg6[%c130, %c0_29] : memref<208x4xf32, #tpu.memory_space<vmem>>, vector<8x4xf32>
    tpu.vector_store %arg6[%c130, %c0_29], %21 {strides = array<i32>} : memref<208x4xf32, #tpu.memory_space<vmem>>, vector<8x4xf32>,
    %c0_30 = arith.constant 0 : index
    %c7 = arith.constant 7 : index
    %c0_31 = arith.constant 0 : index
    %c0_32 = arith.constant 0 : index
    %23 = vector.load %arg1[%c0_30, %c7, %c0_31, %c0_32] : memref<1x8x8x4xf32, #tpu.memory_space<vmem>>, vector<1x1x8x4xf32>
    %24 = vector.shape_cast %23 : vector<1x1x8x4xf32> to vector<8x4xf32>
    %c146 = arith.constant 146 : index
    %c0_33 = arith.constant 0 : index
    %25 = vector.load %arg6[%c146, %c0_33] : memref<208x4xf32, #tpu.memory_space<vmem>>, vector<8x4xf32>
    tpu.vector_store %arg6[%c146, %c0_33], %24 {strides = array<i32>} : memref<208x4xf32, #tpu.memory_space<vmem>>, vector<8x4xf32>,
    %cst_34 = arith.constant 0.000000e+00 : f32
    %26 = vector.broadcast %cst_34 : f32 to vector<128x32xf32>
    %c0_35 = arith.constant 0 : index
    %c0_36 = arith.constant 0 : index
    %27 = vector.load %arg6[%c0_35, %c0_36] : memref<208x4xf32, #tpu.memory_space<vmem>>, vector<128x4xf32>
    %c0_37 = arith.constant 0 : index
    %c0_38 = arith.constant 0 : index
    %c0_39 = arith.constant 0 : index
    %28 = vector.load %arg2[%c0_37, %c0_38, %c0_39] : memref<25x4x32xf32, #tpu.memory_space<vmem>>, vector<1x4x32xf32>
    %29 = vector.shape_cast %28 : vector<1x4x32xf32> to vector<4x32xf32>
    %cst_40 = arith.constant dense<0.000000e+00> : vector<128x32xf32>
    %30 = tpu.matmul %27, %29, %cst_40 {dimension_numbers = #tpu.dot_dimension_numbers<[1], [0], [0], [1], [0, 0, 1, 1], [], []>} : vector<128x4xf32>, vector<4x32xf32>, vector<128x32xf32> -> vector<128x32xf32>
    %31 = arith.addf %26, %30 : vector<128x32xf32>
    %c1_41 = arith.constant 1 : index
    %c0_42 = arith.constant 0 : index
    %32 = vector.load %arg6[%c1_41, %c0_42] : memref<208x4xf32, #tpu.memory_space<vmem>>, vector<128x4xf32>
    %c1_43 = arith.constant 1 : index
    %c0_44 = arith.constant 0 : index
    %c0_45 = arith.constant 0 : index
    %33 = vector.load %arg2[%c1_43, %c0_44, %c0_45] : memref<25x4x32xf32, #tpu.memory_space<vmem>>, vector<1x4x32xf32>
    %34 = vector.shape_cast %33 : vector<1x4x32xf32> to vector<4x32xf32>
    %cst_46 = arith.constant dense<0.000000e+00> : vector<128x32xf32>
    %35 = tpu.matmul %32, %34, %cst_46 {dimension_numbers = #tpu.dot_dimension_numbers<[1], [0], [0], [1], [0, 0, 1, 1], [], []>} : vector<128x4xf32>, vector<4x32xf32>, vector<128x32xf32> -> vector<128x32xf32>
    %36 = arith.addf %31, %35 : vector<128x32xf32>
    %c2_47 = arith.constant 2 : index
    %c0_48 = arith.constant 0 : index
    %37 = vector.load %arg6[%c2_47, %c0_48] : memref<208x4xf32, #tpu.memory_space<vmem>>, vector<128x4xf32>
    %c2_49 = arith.constant 2 : index
    %c0_50 = arith.constant 0 : index
    %c0_51 = arith.constant 0 : index
    %38 = vector.load %arg2[%c2_49, %c0_50, %c0_51] : memref<25x4x32xf32, #tpu.memory_space<vmem>>, vector<1x4x32xf32>
    %39 = vector.shape_cast %38 : vector<1x4x32xf32> to vector<4x32xf32>
    %cst_52 = arith.constant dense<0.000000e+00> : vector<128x32xf32>
    %40 = tpu.matmul %37, %39, %cst_52 {dimension_numbers = #tpu.dot_dimension_numbers<[1], [0], [0], [1], [0, 0, 1, 1], [], []>} : vector<128x4xf32>, vector<4x32xf32>, vector<128x32xf32> -> vector<128x32xf32>
    %41 = arith.addf %36, %40 : vector<128x32xf32>
    %c3_53 = arith.constant 3 : index
    %c0_54 = arith.constant 0 : index
    %42 = vector.load %arg6[%c3_53, %c0_54] : memref<208x4xf32, #tpu.memory_space<vmem>>, vector<128x4xf32>
    %c3_55 = arith.constant 3 : index
    %c0_56 = arith.constant 0 : index
    %c0_57 = arith.constant 0 : index
    %43 = vector.load %arg2[%c3_55, %c0_56, %c0_57] : memref<25x4x32xf32, #tpu.memory_space<vmem>>, vector<1x4x32xf32>
    %44 = vector.shape_cast %43 : vector<1x4x32xf32> to vector<4x32xf32>
    %cst_58 = arith.constant dense<0.000000e+00> : vector<128x32xf32>
    %45 = tpu.matmul %42, %44, %cst_58 {dimension_numbers = #tpu.dot_dimension_numbers<[1], [0], [0], [1], [0, 0, 1, 1], [], []>} : vector<128x4xf32>, vector<4x32xf32>, vector<128x32xf32> -> vector<128x32xf32>
    %46 = arith.addf %41, %45 : vector<128x32xf32>
    %c4_59 = arith.constant 4 : index
    %c0_60 = arith.constant 0 : index
    %47 = vector.load %arg6[%c4_59, %c0_60] : memref<208x4xf32, #tpu.memory_space<vmem>>, vector<128x4xf32>
    %c4_61 = arith.constant 4 : index
    %c0_62 = arith.constant 0 : index
    %c0_63 = arith.constant 0 : index
    %48 = vector.load %arg2[%c4_61, %c0_62, %c0_63] : memref<25x4x32xf32, #tpu.memory_space<vmem>>, vector<1x4x32xf32>
    %49 = vector.shape_cast %48 : vector<1x4x32xf32> to vector<4x32xf32>
    %cst_64 = arith.constant dense<0.000000e+00> : vector<128x32xf32>
    %50 = tpu.matmul %47, %49, %cst_64 {dimension_numbers = #tpu.dot_dimension_numbers<[1], [0], [0], [1], [0, 0, 1, 1], [], []>} : vector<128x4xf32>, vector<4x32xf32>, vector<128x32xf32> -> vector<128x32xf32>
    %51 = arith.addf %46, %50 : vector<128x32xf32>
    %c16 = arith.constant 16 : index
    %c0_65 = arith.constant 0 : index
    %52 = vector.load %arg6[%c16, %c0_65] : memref<208x4xf32, #tpu.memory_space<vmem>>, vector<128x4xf32>
    %c5_66 = arith.constant 5 : index
    %c0_67 = arith.constant 0 : index
    %c0_68 = arith.constant 0 : index
    %53 = vector.load %arg2[%c5_66, %c0_67, %c0_68] : memref<25x4x32xf32, #tpu.memory_space<vmem>>, vector<1x4x32xf32>
    %54 = vector.shape_cast %53 : vector<1x4x32xf32> to vector<4x32xf32>
    %cst_69 = arith.constant dense<0.000000e+00> : vector<128x32xf32>
    %55 = tpu.matmul %52, %54, %cst_69 {dimension_numbers = #tpu.dot_dimension_numbers<[1], [0], [0], [1], [0, 0, 1, 1], [], []>} : vector<128x4xf32>, vector<4x32xf32>, vector<128x32xf32> -> vector<128x32xf32>
    %56 = arith.addf %51, %55 : vector<128x32xf32>
    %c17 = arith.constant 17 : index
    %c0_70 = arith.constant 0 : index
    %57 = vector.load %arg6[%c17, %c0_70] : memref<208x4xf32, #tpu.memory_space<vmem>>, vector<128x4xf32>
    %c6_71 = arith.constant 6 : index
    %c0_72 = arith.constant 0 : index
    %c0_73 = arith.constant 0 : index
    %58 = vector.load %arg2[%c6_71, %c0_72, %c0_73] : memref<25x4x32xf32, #tpu.memory_space<vmem>>, vector<1x4x32xf32>
    %59 = vector.shape_cast %58 : vector<1x4x32xf32> to vector<4x32xf32>
    %cst_74 = arith.constant dense<0.000000e+00> : vector<128x32xf32>
    %60 = tpu.matmul %57, %59, %cst_74 {dimension_numbers = #tpu.dot_dimension_numbers<[1], [0], [0], [1], [0, 0, 1, 1], [], []>} : vector<128x4xf32>, vector<4x32xf32>, vector<128x32xf32> -> vector<128x32xf32>
    %61 = arith.addf %56, %60 : vector<128x32xf32>
    %c18 = arith.constant 18 : index
    %c0_75 = arith.constant 0 : index
    %62 = vector.load %arg6[%c18, %c0_75] : memref<208x4xf32, #tpu.memory_space<vmem>>, vector<128x4xf32>
    %c7_76 = arith.constant 7 : index
    %c0_77 = arith.constant 0 : index
    %c0_78 = arith.constant 0 : index
    %63 = vector.load %arg2[%c7_76, %c0_77, %c0_78] : memref<25x4x32xf32, #tpu.memory_space<vmem>>, vector<1x4x32xf32>
    %64 = vector.shape_cast %63 : vector<1x4x32xf32> to vector<4x32xf32>
    %cst_79 = arith.constant dense<0.000000e+00> : vector<128x32xf32>
    %65 = tpu.matmul %62, %64, %cst_79 {dimension_numbers = #tpu.dot_dimension_numbers<[1], [0], [0], [1], [0, 0, 1, 1], [], []>} : vector<128x4xf32>, vector<4x32xf32>, vector<128x32xf32> -> vector<128x32xf32>
    %66 = arith.addf %61, %65 : vector<128x32xf32>
    %c19 = arith.constant 19 : index
    %c0_80 = arith.constant 0 : index
    %67 = vector.load %arg6[%c19, %c0_80] : memref<208x4xf32, #tpu.memory_space<vmem>>, vector<128x4xf32>
    %c8 = arith.constant 8 : index
    %c0_81 = arith.constant 0 : index
    %c0_82 = arith.constant 0 : index
    %68 = vector.load %arg2[%c8, %c0_81, %c0_82] : memref<25x4x32xf32, #tpu.memory_space<vmem>>, vector<1x4x32xf32>
    %69 = vector.shape_cast %68 : vector<1x4x32xf32> to vector<4x32xf32>
    %cst_83 = arith.constant dense<0.000000e+00> : vector<128x32xf32>
    %70 = tpu.matmul %67, %69, %cst_83 {dimension_numbers = #tpu.dot_dimension_numbers<[1], [0], [0], [1], [0, 0, 1, 1], [], []>} : vector<128x4xf32>, vector<4x32xf32>, vector<128x32xf32> -> vector<128x32xf32>
    %71 = arith.addf %66, %70 : vector<128x32xf32>
    %c20 = arith.constant 20 : index
    %c0_84 = arith.constant 0 : index
    %72 = vector.load %arg6[%c20, %c0_84] : memref<208x4xf32, #tpu.memory_space<vmem>>, vector<128x4xf32>
    %c9 = arith.constant 9 : index
    %c0_85 = arith.constant 0 : index
    %c0_86 = arith.constant 0 : index
    %73 = vector.load %arg2[%c9, %c0_85, %c0_86] : memref<25x4x32xf32, #tpu.memory_space<vmem>>, vector<1x4x32xf32>
    %74 = vector.shape_cast %73 : vector<1x4x32xf32> to vector<4x32xf32>
    %cst_87 = arith.constant dense<0.000000e+00> : vector<128x32xf32>
    %75 = tpu.matmul %72, %74, %cst_87 {dimension_numbers = #tpu.dot_dimension_numbers<[1], [0], [0], [1], [0, 0, 1, 1], [], []>} : vector<128x4xf32>, vector<4x32xf32>, vector<128x32xf32> -> vector<128x32xf32>
    %76 = arith.addf %71, %75 : vector<128x32xf32>
    %c32 = arith.constant 32 : index
    %c0_88 = arith.constant 0 : index
    %77 = vector.load %arg6[%c32, %c0_88] : memref<208x4xf32, #tpu.memory_space<vmem>>, vector<128x4xf32>
    %c10 = arith.constant 10 : index
    %c0_89 = arith.constant 0 : index
    %c0_90 = arith.constant 0 : index
    %78 = vector.load %arg2[%c10, %c0_89, %c0_90] : memref<25x4x32xf32, #tpu.memory_space<vmem>>, vector<1x4x32xf32>
    %79 = vector.shape_cast %78 : vector<1x4x32xf32> to vector<4x32xf32>
    %cst_91 = arith.constant dense<0.000000e+00> : vector<128x32xf32>
    %80 = tpu.matmul %77, %79, %cst_91 {dimension_numbers = #tpu.dot_dimension_numbers<[1], [0], [0], [1], [0, 0, 1, 1], [], []>} : vector<128x4xf32>, vector<4x32xf32>, vector<128x32xf32> -> vector<128x32xf32>
    %81 = arith.addf %76, %80 : vector<128x32xf32>
    %c33 = arith.constant 33 : index
    %c0_92 = arith.constant 0 : index
    %82 = vector.load %arg6[%c33, %c0_92] : memref<208x4xf32, #tpu.memory_space<vmem>>, vector<128x4xf32>
    %c11 = arith.constant 11 : index
    %c0_93 = arith.constant 0 : index
    %c0_94 = arith.constant 0 : index
    %83 = vector.load %arg2[%c11, %c0_93, %c0_94] : memref<25x4x32xf32, #tpu.memory_space<vmem>>, vector<1x4x32xf32>
    %84 = vector.shape_cast %83 : vector<1x4x32xf32> to vector<4x32xf32>
    %cst_95 = arith.constant dense<0.000000e+00> : vector<128x32xf32>
    %85 = tpu.matmul %82, %84, %cst_95 {dimension_numbers = #tpu.dot_dimension_numbers<[1], [0], [0], [1], [0, 0, 1, 1], [], []>} : vector<128x4xf32>, vector<4x32xf32>, vector<128x32xf32> -> vector<128x32xf32>
    %86 = arith.addf %81, %85 : vector<128x32xf32>
    %c34_96 = arith.constant 34 : index
    %c0_97 = arith.constant 0 : index
    %87 = vector.load %arg6[%c34_96, %c0_97] : memref<208x4xf32, #tpu.memory_space<vmem>>, vector<128x4xf32>
    %c12 = arith.constant 12 : index
    %c0_98 = arith.constant 0 : index
    %c0_99 = arith.constant 0 : index
    %88 = vector.load %arg2[%c12, %c0_98, %c0_99] : memref<25x4x32xf32, #tpu.memory_space<vmem>>, vector<1x4x32xf32>
    %89 = vector.shape_cast %88 : vector<1x4x32xf32> to vector<4x32xf32>
    %cst_100 = arith.constant dense<0.000000e+00> : vector<128x32xf32>
    %90 = tpu.matmul %87, %89, %cst_100 {dimension_numbers = #tpu.dot_dimension_numbers<[1], [0], [0], [1], [0, 0, 1, 1], [], []>} : vector<128x4xf32>, vector<4x32xf32>, vector<128x32xf32> -> vector<128x32xf32>
    %91 = arith.addf %86, %90 : vector<128x32xf32>
    %c35 = arith.constant 35 : index
    %c0_101 = arith.constant 0 : index
    %92 = vector.load %arg6[%c35, %c0_101] : memref<208x4xf32, #tpu.memory_space<vmem>>, vector<128x4xf32>
    %c13 = arith.constant 13 : index
    %c0_102 = arith.constant 0 : index
    %c0_103 = arith.constant 0 : index
    %93 = vector.load %arg2[%c13, %c0_102, %c0_103] : memref<25x4x32xf32, #tpu.memory_space<vmem>>, vector<1x4x32xf32>
    %94 = vector.shape_cast %93 : vector<1x4x32xf32> to vector<4x32xf32>
    %cst_104 = arith.constant dense<0.000000e+00> : vector<128x32xf32>
    %95 = tpu.matmul %92, %94, %cst_104 {dimension_numbers = #tpu.dot_dimension_numbers<[1], [0], [0], [1], [0, 0, 1, 1], [], []>} : vector<128x4xf32>, vector<4x32xf32>, vector<128x32xf32> -> vector<128x32xf32>
    %96 = arith.addf %91, %95 : vector<128x32xf32>
    %c36 = arith.constant 36 : index
    %c0_105 = arith.constant 0 : index
    %97 = vector.load %arg6[%c36, %c0_105] : memref<208x4xf32, #tpu.memory_space<vmem>>, vector<128x4xf32>
    %c14 = arith.constant 14 : index
    %c0_106 = arith.constant 0 : index
    %c0_107 = arith.constant 0 : index
    %98 = vector.load %arg2[%c14, %c0_106, %c0_107] : memref<25x4x32xf32, #tpu.memory_space<vmem>>, vector<1x4x32xf32>
    %99 = vector.shape_cast %98 : vector<1x4x32xf32> to vector<4x32xf32>
    %cst_108 = arith.constant dense<0.000000e+00> : vector<128x32xf32>
    %100 = tpu.matmul %97, %99, %cst_108 {dimension_numbers = #tpu.dot_dimension_numbers<[1], [0], [0], [1], [0, 0, 1, 1], [], []>} : vector<128x4xf32>, vector<4x32xf32>, vector<128x32xf32> -> vector<128x32xf32>
    %101 = arith.addf %96, %100 : vector<128x32xf32>
    %c48 = arith.constant 48 : index
    %c0_109 = arith.constant 0 : index
    %102 = vector.load %arg6[%c48, %c0_109] : memref<208x4xf32, #tpu.memory_space<vmem>>, vector<128x4xf32>
    %c15 = arith.constant 15 : index
    %c0_110 = arith.constant 0 : index
    %c0_111 = arith.constant 0 : index
    %103 = vector.load %arg2[%c15, %c0_110, %c0_111] : memref<25x4x32xf32, #tpu.memory_space<vmem>>, vector<1x4x32xf32>
    %104 = vector.shape_cast %103 : vector<1x4x32xf32> to vector<4x32xf32>
    %cst_112 = arith.constant dense<0.000000e+00> : vector<128x32xf32>
    %105 = tpu.matmul %102, %104, %cst_112 {dimension_numbers = #tpu.dot_dimension_numbers<[1], [0], [0], [1], [0, 0, 1, 1], [], []>} : vector<128x4xf32>, vector<4x32xf32>, vector<128x32xf32> -> vector<128x32xf32>
    %106 = arith.addf %101, %105 : vector<128x32xf32>
    %c49 = arith.constant 49 : index
    %c0_113 = arith.constant 0 : index
    %107 = vector.load %arg6[%c49, %c0_113] : memref<208x4xf32, #tpu.memory_space<vmem>>, vector<128x4xf32>
    %c16_114 = arith.constant 16 : index
    %c0_115 = arith.constant 0 : index
    %c0_116 = arith.constant 0 : index
    %108 = vector.load %arg2[%c16_114, %c0_115, %c0_116] : memref<25x4x32xf32, #tpu.memory_space<vmem>>, vector<1x4x32xf32>
    %109 = vector.shape_cast %108 : vector<1x4x32xf32> to vector<4x32xf32>
    %cst_117 = arith.constant dense<0.000000e+00> : vector<128x32xf32>
    %110 = tpu.matmul %107, %109, %cst_117 {dimension_numbers = #tpu.dot_dimension_numbers<[1], [0], [0], [1], [0, 0, 1, 1], [], []>} : vector<128x4xf32>, vector<4x32xf32>, vector<128x32xf32> -> vector<128x32xf32>
    %111 = arith.addf %106, %110 : vector<128x32xf32>
    %c50_118 = arith.constant 50 : index
    %c0_119 = arith.constant 0 : index
    %112 = vector.load %arg6[%c50_118, %c0_119] : memref<208x4xf32, #tpu.memory_space<vmem>>, vector<128x4xf32>
    %c17_120 = arith.constant 17 : index
    %c0_121 = arith.constant 0 : index
    %c0_122 = arith.constant 0 : index
    %113 = vector.load %arg2[%c17_120, %c0_121, %c0_122] : memref<25x4x32xf32, #tpu.memory_space<vmem>>, vector<1x4x32xf32>
    %114 = vector.shape_cast %113 : vector<1x4x32xf32> to vector<4x32xf32>
    %cst_123 = arith.constant dense<0.000000e+00> : vector<128x32xf32>
    %115 = tpu.matmul %112, %114, %cst_123 {dimension_numbers = #tpu.dot_dimension_numbers<[1], [0], [0], [1], [0, 0, 1, 1], [], []>} : vector<128x4xf32>, vector<4x32xf32>, vector<128x32xf32> -> vector<128x32xf32>
    %116 = arith.addf %111, %115 : vector<128x32xf32>
    %c51 = arith.constant 51 : index
    %c0_124 = arith.constant 0 : index
    %117 = vector.load %arg6[%c51, %c0_124] : memref<208x4xf32, #tpu.memory_space<vmem>>, vector<128x4xf32>
    %c18_125 = arith.constant 18 : index
    %c0_126 = arith.constant 0 : index
    %c0_127 = arith.constant 0 : index
    %118 = vector.load %arg2[%c18_125, %c0_126, %c0_127] : memref<25x4x32xf32, #tpu.memory_space<vmem>>, vector<1x4x32xf32>
    %119 = vector.shape_cast %118 : vector<1x4x32xf32> to vector<4x32xf32>
    %cst_128 = arith.constant dense<0.000000e+00> : vector<128x32xf32>
    %120 = tpu.matmul %117, %119, %cst_128 {dimension_numbers = #tpu.dot_dimension_numbers<[1], [0], [0], [1], [0, 0, 1, 1], [], []>} : vector<128x4xf32>, vector<4x32xf32>, vector<128x32xf32> -> vector<128x32xf32>
    %121 = arith.addf %116, %120 : vector<128x32xf32>
    %c52 = arith.constant 52 : index
    %c0_129 = arith.constant 0 : index
    %122 = vector.load %arg6[%c52, %c0_129] : memref<208x4xf32, #tpu.memory_space<vmem>>, vector<128x4xf32>
    %c19_130 = arith.constant 19 : index
    %c0_131 = arith.constant 0 : index
    %c0_132 = arith.constant 0 : index
    %123 = vector.load %arg2[%c19_130, %c0_131, %c0_132] : memref<25x4x32xf32, #tpu.memory_space<vmem>>, vector<1x4x32xf32>
    %124 = vector.shape_cast %123 : vector<1x4x32xf32> to vector<4x32xf32>
    %cst_133 = arith.constant dense<0.000000e+00> : vector<128x32xf32>
    %125 = tpu.matmul %122, %124, %cst_133 {dimension_numbers = #tpu.dot_dimension_numbers<[1], [0], [0], [1], [0, 0, 1, 1], [], []>} : vector<128x4xf32>, vector<4x32xf32>, vector<128x32xf32> -> vector<128x32xf32>
    %126 = arith.addf %121, %125 : vector<128x32xf32>
    %c64 = arith.constant 64 : index
    %c0_134 = arith.constant 0 : index
    %127 = vector.load %arg6[%c64, %c0_134] : memref<208x4xf32, #tpu.memory_space<vmem>>, vector<128x4xf32>
    %c20_135 = arith.constant 20 : index
    %c0_136 = arith.constant 0 : index
    %c0_137 = arith.constant 0 : index
    %128 = vector.load %arg2[%c20_135, %c0_136, %c0_137] : memref<25x4x32xf32, #tpu.memory_space<vmem>>, vector<1x4x32xf32>
    %129 = vector.shape_cast %128 : vector<1x4x32xf32> to vector<4x32xf32>
    %cst_138 = arith.constant dense<0.000000e+00> : vector<128x32xf32>
    %130 = tpu.matmul %127, %129, %cst_138 {dimension_numbers = #tpu.dot_dimension_numbers<[1], [0], [0], [1], [0, 0, 1, 1], [], []>} : vector<128x4xf32>, vector<4x32xf32>, vector<128x32xf32> -> vector<128x32xf32>
    %131 = arith.addf %126, %130 : vector<128x32xf32>
    %c65 = arith.constant 65 : index
    %c0_139 = arith.constant 0 : index
    %132 = vector.load %arg6[%c65, %c0_139] : memref<208x4xf32, #tpu.memory_space<vmem>>, vector<128x4xf32>
    %c21 = arith.constant 21 : index
    %c0_140 = arith.constant 0 : index
    %c0_141 = arith.constant 0 : index
    %133 = vector.load %arg2[%c21, %c0_140, %c0_141] : memref<25x4x32xf32, #tpu.memory_space<vmem>>, vector<1x4x32xf32>
    %134 = vector.shape_cast %133 : vector<1x4x32xf32> to vector<4x32xf32>
    %cst_142 = arith.constant dense<0.000000e+00> : vector<128x32xf32>
    %135 = tpu.matmul %132, %134, %cst_142 {dimension_numbers = #tpu.dot_dimension_numbers<[1], [0], [0], [1], [0, 0, 1, 1], [], []>} : vector<128x4xf32>, vector<4x32xf32>, vector<128x32xf32> -> vector<128x32xf32>
    %136 = arith.addf %131, %135 : vector<128x32xf32>
    %c66_143 = arith.constant 66 : index
    %c0_144 = arith.constant 0 : index
    %137 = vector.load %arg6[%c66_143, %c0_144] : memref<208x4xf32, #tpu.memory_space<vmem>>, vector<128x4xf32>
    %c22 = arith.constant 22 : index
    %c0_145 = arith.constant 0 : index
    %c0_146 = arith.constant 0 : index
    %138 = vector.load %arg2[%c22, %c0_145, %c0_146] : memref<25x4x32xf32, #tpu.memory_space<vmem>>, vector<1x4x32xf32>
    %139 = vector.shape_cast %138 : vector<1x4x32xf32> to vector<4x32xf32>
    %cst_147 = arith.constant dense<0.000000e+00> : vector<128x32xf32>
    %140 = tpu.matmul %137, %139, %cst_147 {dimension_numbers = #tpu.dot_dimension_numbers<[1], [0], [0], [1], [0, 0, 1, 1], [], []>} : vector<128x4xf32>, vector<4x32xf32>, vector<128x32xf32> -> vector<128x32xf32>
    %141 = arith.addf %136, %140 : vector<128x32xf32>
    %c67 = arith.constant 67 : index
    %c0_148 = arith.constant 0 : index
    %142 = vector.load %arg6[%c67, %c0_148] : memref<208x4xf32, #tpu.memory_space<vmem>>, vector<128x4xf32>
    %c23 = arith.constant 23 : index
    %c0_149 = arith.constant 0 : index
    %c0_150 = arith.constant 0 : index
    %143 = vector.load %arg2[%c23, %c0_149, %c0_150] : memref<25x4x32xf32, #tpu.memory_space<vmem>>, vector<1x4x32xf32>
    %144 = vector.shape_cast %143 : vector<1x4x32xf32> to vector<4x32xf32>
    %cst_151 = arith.constant dense<0.000000e+00> : vector<128x32xf32>
    %145 = tpu.matmul %142, %144, %cst_151 {dimension_numbers = #tpu.dot_dimension_numbers<[1], [0], [0], [1], [0, 0, 1, 1], [], []>} : vector<128x4xf32>, vector<4x32xf32>, vector<128x32xf32> -> vector<128x32xf32>
    %146 = arith.addf %141, %145 : vector<128x32xf32>
    %c68 = arith.constant 68 : index
    %c0_152 = arith.constant 0 : index
    %147 = vector.load %arg6[%c68, %c0_152] : memref<208x4xf32, #tpu.memory_space<vmem>>, vector<128x4xf32>
    %c24 = arith.constant 24 : index
    %c0_153 = arith.constant 0 : index
    %c0_154 = arith.constant 0 : index
    %148 = vector.load %arg2[%c24, %c0_153, %c0_154] : memref<25x4x32xf32, #tpu.memory_space<vmem>>, vector<1x4x32xf32>
    %149 = vector.shape_cast %148 : vector<1x4x32xf32> to vector<4x32xf32>
    %cst_155 = arith.constant dense<0.000000e+00> : vector<128x32xf32>
    %150 = tpu.matmul %147, %149, %cst_155 {dimension_numbers = #tpu.dot_dimension_numbers<[1], [0], [0], [1], [0, 0, 1, 1], [], []>} : vector<128x4xf32>, vector<4x32xf32>, vector<128x32xf32> -> vector<128x32xf32>
    %151 = arith.addf %146, %150 : vector<128x32xf32>
    %c0_156 = arith.constant 0 : index
    %c0_157 = arith.constant 0 : index
    %152 = vector.load %arg3[%c0_156, %c0_157] : memref<1x32xf32, #tpu.memory_space<vmem>>, vector<1x32xf32>
    %153 = vector.broadcast %152 : vector<1x32xf32> to vector<128x32xf32>
    %154 = arith.mulf %151, %153 : vector<128x32xf32>
    %c0_158 = arith.constant 0 : index
    %c0_159 = arith.constant 0 : index
    %155 = vector.load %arg4[%c0_158, %c0_159] : memref<1x32xf32, #tpu.memory_space<vmem>>, vector<1x32xf32>
    %156 = vector.broadcast %155 : vector<1x32xf32> to vector<128x32xf32>
    %157 = arith.addf %154, %156 : vector<128x32xf32>
    %cst_160 = arith.constant 0.000000e+00 : f32
    %158 = vector.broadcast %cst_160 : f32 to vector<128x32xf32>
    %159 = arith.maximumf %157, %158 : vector<128x32xf32>
    %160 = vector.shape_cast %159 : vector<128x32xf32> to vector<8x16x32xf32>
    %161 = vector.extract_strided_slice %160 {offsets = [0, 0, 0], sizes = [8, 8, 32], strides = [1, 1, 1]} : vector<8x16x32xf32> to vector<8x8x32xf32>
    %c0_161 = arith.constant 0 : index
    %c0_162 = arith.constant 0 : index
    %c0_163 = arith.constant 0 : index
    %c0_164 = arith.constant 0 : index
    %162 = vector.load %arg5[%c0_161, %c0_162, %c0_163, %c0_164] : memref<1x8x8x32xf32, #tpu.memory_space<vmem>>, vector<1x8x8x32xf32>
    %163 = vector.shape_cast %162 : vector<1x8x8x32xf32> to vector<8x8x32xf32>
    %164 = vector.shape_cast %161 : vector<8x8x32xf32> to vector<1x8x8x32xf32>
    tpu.vector_store %arg5[%c0_161, %c0_162, %c0_163, %c0_164], %164 {strides = array<i32>} : memref<1x8x8x32xf32, #tpu.memory_space<vmem>>, vector<1x8x8x32xf32>,
    return
  }
  func.func @transform_0(%arg0: i32) -> (i32, i32, i32, i32) {
    %c0_i32 = arith.constant 0 : i32
    %c0_i32_0 = arith.constant 0 : i32
    %c0_i32_1 = arith.constant 0 : i32
    %c0_i32_2 = arith.constant 0 : i32
    return %arg0, %c0_i32, %c0_i32_0, %c0_i32_1 : i32, i32, i32, i32
  }
  func.func @transform_1(%arg0: i32) -> (i32, i32, i32) {
    %c0_i32 = arith.constant 0 : i32
    %c0_i32_0 = arith.constant 0 : i32
    %c0_i32_1 = arith.constant 0 : i32
    %c0_i32_2 = arith.constant 0 : i32
    return %c0_i32, %c0_i32_0, %c0_i32_1 : i32, i32, i32
  }
  func.func @transform_2(%arg0: i32) -> (i32, i32) {
    %c0_i32 = arith.constant 0 : i32
    %c0_i32_0 = arith.constant 0 : i32
    %c0_i32_1 = arith.constant 0 : i32
    return %c0_i32, %c0_i32_0 : i32, i32
  }
  func.func @transform_3(%arg0: i32) -> (i32, i32) {
    %c0_i32 = arith.constant 0 : i32
    %c0_i32_0 = arith.constant 0 : i32
    %c0_i32_1 = arith.constant 0 : i32
    return %c0_i32, %c0_i32_0 : i32, i32
  }
  func.func @transform_4(%arg0: i32) -> (i32, i32, i32, i32) {
    %c0_i32 = arith.constant 0 : i32
    %c0_i32_0 = arith.constant 0 : i32
    %c0_i32_1 = arith.constant 0 : i32
    %c0_i32_2 = arith.constant 0 : i32
    return %arg0, %c0_i32, %c0_i32_0, %c0_i32_1 : i32, i32, i32, i32
  }
}

</mosaic_0001>

<llo_original>
// kernel: tpu_custom_call.1
$region0: #{tpu_custom_call.1}
  #allocation0 [shape = 'u32[]', space=smem, size = 0x4, offset = 0x4, fixed_abs, tag = 'smem constant byte address 0x4 - core index']
  #allocation1 [shape = 'u32[144,128]{1,0:T(1,128)}', space=vmem, size = 0x12000, scoped, tag = 'internal scratch']
  #allocation2 [shape = 'f32[208,4]{1,0:T(8,128)}', space=vmem, size = 0x1a000, scoped, tag = 'scratch operand']
  %s0 = inlined_call_operand.vmem [shape: f32[2,8,8,4], index: 0, kind: input, shape index: {}]
  %s1 = inlined_call_operand.vmem [shape: f32[25,4,32], index: 1, kind: input, shape index: {}]
  %s2 = inlined_call_operand.vmem [shape: f32[1,32], index: 2, kind: input, shape index: {}]
  %s3 = inlined_call_operand.vmem [shape: f32[1,32], index: 3, kind: input, shape index: {}]
  %s4 = inlined_call_operand.hbm [shape: f32[2,8,8,32], index: 4, kind: output, shape index: {}]
  %s5 = sld [smem:[#allocation0]]
  $region49: #{tpu_custom_call.1} parent=0
    _
  %s7 = ssub.s32 1, %s5
  %s8 = scalar_select 0, %s7, %s5
  $region1: #{tpu_custom_call.1} parent=0
    #allocation3 [shape = 'u8[65536]{0}', space=vmem, size = 0x10000, scoped, tag = 'output window, operand 0']
    #allocation4 [shape = 's32[2]{0}', space=sflag, size = 0x8, scoped, tag = 'scoped memory for tpu_custom_call.1']
    %9 = vsyncpa [#allocation4], 0
    %s10 = scalar_lea.sflag [#allocation4], 1
    %11 = vsyncpa %s10, 0
    loop: start=0, step=1, limit=4
    $region2: #{tpu_custom_call.1} parent=1 // loop_pre_header
      _
    $region3: #{tpu_custom_call.1} parent=1 // loop_header
      %s13 = sphi 0, %s17
      %p14 = scmp.ge.s32.totalorder %s13, 4
      %s23 = sphi 0, %s25
      %s26 = sphi 0, %s23
      %s27 = sphi 0, %s26
      %s43 = sphi 0, %s27
      %s47 = sphi 0, %s47
      %s49 = sphi 0, %s47
      %s50 = sphi 0, %s49
      %s64 = sphi 0, %s50
      %s68 = sphi 0, %s68
      %s70 = sphi 0, %s68
      %s71 = sphi 0, %s70
      %s85 = sphi 0, %s71
      %s89 = sphi 0, %s89
      %s91 = sphi 0, %s89
      %s92 = sphi 0, %s91
      %s106 = sphi 0, %s92
      %s112 = sphi 0, %s114
      %s115 = sphi 0, %s112
      %s116 = sphi 0, %s115
      %s132 = sphi 0, %s116
    $region4: #{tpu_custom_call.1} parent=1 // loop_header_branch
      %16 = sbr.rel (%p14) target = $region8
    $region5: #{tpu_custom_call.1} parent=1 // loop_body
      %s18 = ssub.s32 %s13, 1
      %s19 = ssub.s32 %s13, 2
      %s20 = sadd.s32 %s13, 1
      %s21 = ssub.s32 %s13, %s20
      %p22 = scmp.eq.s32.totalorder %s21, 0
      %s24 = sadd.s32 %s23, 1
      %s25 = scalar_select %p22, %s23, %s24
      %p28 = pneg %p22
      %p29 = scmp.eq.s32.totalorder %s13, 1
      %p30 = por %p28, %p29
      %p31 = scmp.ne.s32.totalorder %s23, %s26
      %p32 = scmp.eq.s32.totalorder %s13, 0
      %p33 = por %p31, %p32
      %p34 = scmp.ne.s32.totalorder %s23, %s26
      %p35 = scmp.eq.s32.totalorder %s18, 1
      %p36 = por %p34, %p35
      %p37 = scmp.ne.s32.totalorder %s26, %s27
      %p38 = scmp.eq.s32.totalorder %s18, 0
      %p39 = por %p37, %p38
      %p40 = scmp.ne.s32.totalorder %s26, %s27
      %p41 = scmp.eq.s32.totalorder %s19, 1
      %p42 = por %p40, %p41
      %p44 = scmp.ne.s32.totalorder %s27, %s43
      %p45 = scmp.eq.s32.totalorder %s19, 0
      %p46 = por %p44, %p45
      %s48 = sadd.s32 %s47, 1
      %p51 = scmp.eq.s32.totalorder %s13, 1
      %p52 = scmp.ne.s32.totalorder %s47, %s49
      %p53 = scmp.eq.s32.totalorder %s13, 0
      %p54 = por %p52, %p53
      %p55 = scmp.ne.s32.totalorder %s47, %s49
      %p56 = scmp.eq.s32.totalorder %s18, 1
      %p57 = por %p55, %p56
      %p58 = scmp.ne.s32.totalorder %s49, %s50
      %p59 = scmp.eq.s32.totalorder %s18, 0
      %p60 = por %p58, %p59
      %p61 = scmp.ne.s32.totalorder %s49, %s50
      %p62 = scmp.eq.s32.totalorder %s19, 1
      %p63 = por %p61, %p62
      %p65 = scmp.ne.s32.totalorder %s50, %s64
      %p66 = scmp.eq.s32.totalorder %s19, 0
      %p67 = por %p65, %p66
      %s69 = sadd.s32 %s68, 1
      %p72 = scmp.eq.s32.totalorder %s13, 1
      %p73 = scmp.ne.s32.totalorder %s68, %s70
      %p74 = scmp.eq.s32.totalorder %s13, 0
      %p75 = por %p73, %p74
      %p76 = scmp.ne.s32.totalorder %s68, %s70
      %p77 = scmp.eq.s32.totalorder %s18, 1
      %p78 = por %p76, %p77
      %p79 = scmp.ne.s32.totalorder %s70, %s71
      %p80 = scmp.eq.s32.totalorder %s18, 0
      %p81 = por %p79, %p80
      %p82 = scmp.ne.s32.totalorder %s70, %s71
      %p83 = scmp.eq.s32.totalorder %s19, 1
      %p84 = por %p82, %p83
      %p86 = scmp.ne.s32.totalorder %s71, %s85
      %p87 = scmp.eq.s32.totalorder %s19, 0
      %p88 = por %p86, %p87
      %s90 = sadd.s32 %s89, 1
      %p93 = scmp.eq.s32.totalorder %s13, 1
      %p94 = scmp.ne.s32.totalorder %s89, %s91
      %p95 = scmp.eq.s32.totalorder %s13, 0
      %p96 = por %p94, %p95
      %p97 = scmp.ne.s32.totalorder %s89, %s91
      %p98 = scmp.eq.s32.totalorder %s18, 1
      %p99 = por %p97, %p98
      %p100 = scmp.ne.s32.totalorder %s91, %s92
      %p101 = scmp.eq.s32.totalorder %s18, 0
      %p102 = por %p100, %p101
      %p103 = scmp.ne.s32.totalorder %s91, %s92
      %p104 = scmp.eq.s32.totalorder %s19, 1
      %p105 = por %p103, %p104
      %p107 = scmp.ne.s32.totalorder %s92, %s106
      %p108 = scmp.eq.s32.totalorder %s19, 0
      %p109 = por %p107, %p108
      %s110 = ssub.s32 %s13, %s20
      %p111 = scmp.eq.s32.totalorder %s110, 0
      %s113 = sadd.s32 %s112, 1
      %s114 = scalar_select %p111, %s112, %s113
      %p117 = pneg %p111
      %p118 = scmp.eq.s32.totalorder %s13, 1
      %p119 = por %p117, %p118
      %p120 = scmp.ne.s32.totalorder %s112, %s115
      %p121 = scmp.eq.s32.totalorder %s13, 0
      %p122 = por %p120, %p121
      %p123 = scmp.ne.s32.totalorder %s112, %s115
      %p124 = scmp.eq.s32.totalorder %s18, 1
      %p125 = por %p123, %p124
      %p126 = scmp.ne.s32.totalorder %s115, %s116
      %p127 = scmp.eq.s32.totalorder %s18, 0
      %p128 = por %p126, %p127
      %p129 = scmp.ne.s32.totalorder %s115, %s116
      %p130 = scmp.eq.s32.totalorder %s19, 1
      %p131 = por %p129, %p130
      %p133 = scmp.ne.s32.totalorder %s116, %s132
      %p134 = scmp.eq.s32.totalorder %s19, 0
      %p135 = por %p133, %p134
      %p136 = scmp.le.s32.totalorder 1, %s13
      %p137 = scmp.lt.s32.totalorder %s13, 3
      %p138 = pnand %p136, %p137
      %p139 = pneg %p138
      // Predicated region
      $region9: #{tpu_custom_call.1} parent=5 // pred_check
        _
      $region10: #{tpu_custom_call.1} parent=5 // pred_check_branch
        %141 = sbr.rel (%p138) target = $region12
      $region11: #{tpu_custom_call.1} parent=5 // pred_region
        %s142 = ssub.s32 %s13, 1
        // Predicated region
        $region13: #{tpu_custom_call.1} parent=11 // pred_check
          %p143 = pneg %p60
        $region14: #{tpu_custom_call.1} parent=11 // pred_check_branch
          %145 = sbr.rel (%p143) target = $region16
        $region15: #{tpu_custom_call.1} parent=11 // pred_region
          _
        $region16: #{tpu_custom_call.1} parent=11 // pred_fallthru
          _
        // Predicated region
        $region17: #{tpu_custom_call.1} parent=11 // pred_check
          %p146 = pneg %p81
        $region18: #{tpu_custom_call.1} parent=11 // pred_check_branch
          %148 = sbr.rel (%p146) target = $region20
        $region19: #{tpu_custom_call.1} parent=11 // pred_region
          _
        $region20: #{tpu_custom_call.1} parent=11 // pred_fallthru
          _
        // Predicated region
        $region21: #{tpu_custom_call.1} parent=11 // pred_check
          %p149 = pneg %p102
        $region22: #{tpu_custom_call.1} parent=11 // pred_check_branch
          %151 = sbr.rel (%p149) target = $region24
        $region23: #{tpu_custom_call.1} parent=11 // pred_region
          _
        $region24: #{tpu_custom_call.1} parent=11 // pred_fallthru
          _
      $region12: #{tpu_custom_call.1} parent=5 // pred_fallthru
        _
      %p152 = scmp.lt.s32.totalorder %s13, 2
      // Predicated region
      $region25: #{tpu_custom_call.1} parent=5 // pred_check
        %p153 = pneg %p152
      $region26: #{tpu_custom_call.1} parent=5 // pred_check_branch
        %155 = sbr.rel (%p153) target = $region28
      $region27: #{tpu_custom_call.1} parent=5 // pred_region
        // Predicated region
        $region29: #{tpu_custom_call.1} parent=27 // pred_check
          %p156 = pneg %p33
        $region30: #{tpu_custom_call.1} parent=27 // pred_check_branch
          %158 = sbr.rel (%p156) target = $region32
        $region31: #{tpu_custom_call.1} parent=27 // pred_region
          %p159 = scmp.lt.s32.totalorder %s13, 1
          %s160 = scalar_select %p159, %s13, 1
          %s161 = smul.addr %s160, 8
          %s162 = smul.addr %s161, 8
          %s163 = scalar_lea.vmem %s0, %s162
        $region32: #{tpu_custom_call.1} parent=27 // pred_fallthru
          _
      $region28: #{tpu_custom_call.1} parent=5 // pred_fallthru
        _
      %p164 = scmp.le.s32.totalorder 1, %s13
      %p165 = scmp.lt.s32.totalorder %s13, 3
      %p166 = pnand %p164, %p165
      %p167 = pneg %p166
      // Predicated region
      $region33: #{tpu_custom_call.1} parent=5 // pred_check
        _
      $region34: #{tpu_custom_call.1} parent=5 // pred_check_branch
        %169 = sbr.rel (%p166) target = $region36
      $region35: #{tpu_custom_call.1} parent=5 // pred_region
        %s170 = ssub.s32 %s13, 1
        %p171 = scmp.lt.s32.totalorder %s18, 1
        %s172 = scalar_select %p171, %s18, 1
        %s173 = smul.addr %s172, 8
        %s174 = smul.addr %s173, 8
        %s175 = scalar_lea.vmem %s0, %s174
        %p176 = pneg %p39
        %p177 = pneg %p36
        %p178 = pneg %p60
        %p179 = pneg %p57
        %p180 = pneg %p81
        %p181 = pneg %p78
        %p182 = pneg %p102
        %p183 = pneg %p99
        %p184 = pneg %p128
        %p185 = pneg %p125
        %s186 = sand.u32 %s115, 1
        %s187 = scalar_lea.sflag [#allocation4], %s186
        %s188 = sand.u32 %s115, 1
        %s189 = smul.addr %s188, 64
        %s190 = scalar_lea.vmem [#allocation3], %s189
        %p191 = scmp.lt.s32.totalorder %s18, 1
        %s192 = scalar_select %p191, %s18, 1
        %s193 = smul.addr %s192, 8
        %s194 = smul.addr %s193, 8
        %s195 = scalar_lea.vmem %s0, %s194
        %vm196 = vcmask 31744
        %197 = vst.msk [vmem:[#allocation2] sm:$0xff] %vm196, 0.0
        %198 = vst.msk [vmem:[#allocation2 + $0x8] sm:$0xff] %vm196, 0.0
        %199 = vst.msk [vmem:[#allocation2 + $0x10] sm:$0xff] %vm196, 0.0
        %200 = vst.msk [vmem:[#allocation2 + $0x18] sm:$0xff] %vm196, 0.0
        %201 = vst.msk [vmem:[#allocation2 + $0x20] sm:$0xff] %vm196, 0.0
        %202 = vst.msk [vmem:[#allocation2 + $0x28] sm:$0xff] %vm196, 0.0
        %203 = vst.msk [vmem:[#allocation2 + $0x30] sm:$0xff] %vm196, 0.0
        %204 = vst.msk [vmem:[#allocation2 + $0x38] sm:$0xff] %vm196, 0.0
        %205 = vst.msk [vmem:[#allocation2 + $0x40] sm:$0xff] %vm196, 0.0
        %206 = vst.msk [vmem:[#allocation2 + $0x48] sm:$0xff] %vm196, 0.0
        %207 = vst.msk [vmem:[#allocation2 + $0x50] sm:$0xff] %vm196, 0.0
        %208 = vst.msk [vmem:[#allocation2 + $0x58] sm:$0xff] %vm196, 0.0
        %209 = vst.msk [vmem:[#allocation2 + $0x60] sm:$0xff] %vm196, 0.0
        %210 = vst.msk [vmem:[#allocation2 + $0x68] sm:$0xff] %vm196, 0.0
        %211 = vst.msk [vmem:[#allocation2 + $0x70] sm:$0xff] %vm196, 0.0
        %212 = vst.msk [vmem:[#allocation2 + $0x78] sm:$0xff] %vm196, 0.0
        %213 = vst.msk [vmem:[#allocation2 + $0x80] sm:$0xff] %vm196, 0.0
        %214 = vst.msk [vmem:[#allocation2 + $0x88] sm:$0xff] %vm196, 0.0
        %215 = vst.msk [vmem:[#allocation2 + $0x90] sm:$0xff] %vm196, 0.0
        %216 = vst.msk [vmem:[#allocation2 + $0x98] sm:$0xff] %vm196, 0.0
        %217 = vst.msk [vmem:[#allocation2 + $0xa0] sm:$0xff] %vm196, 0.0
        %218 = vst.msk [vmem:[#allocation2 + $0xa8] sm:$0xff] %vm196, 0.0
        %219 = vst.msk [vmem:[#allocation2 + $0xb0] sm:$0xff] %vm196, 0.0
        %220 = vst.msk [vmem:[#allocation2 + $0xb8] sm:$0xff] %vm196, 0.0
        %221 = vst.msk [vmem:[#allocation2 + $0xc0] sm:$0xff] %vm196, 0.0
        %222 = vst.msk [vmem:[#allocation2 + $0xc8] sm:$0xff] %vm196, 0.0
        %v223 = vld [vmem:[%s195] sm:$0xff]
        %224 = vst.msk [vmem:[#allocation2 + $0x22] sm:$0xff] %vm196, %v223
        %s225 = scalar_lea.vmem %s195, 8
        %v226 = vld [vmem:[%s225] sm:$0xff]
        %227 = vst.msk [vmem:[#allocation2 + $0x32] sm:$0xff] %vm196, %v226
        %s228 = scalar_lea.vmem %s195, 16
        %v229 = vld [vmem:[%s228] sm:$0xff]
        %230 = vst.msk [vmem:[#allocation2 + $0x42] sm:$0xff] %vm196, %v229
        %s231 = scalar_lea.vmem %s195, 24
        %v232 = vld [vmem:[%s231] sm:$0xff]
        %233 = vst.msk [vmem:[#allocation2 + $0x52] sm:$0xff] %vm196, %v232
        %s234 = scalar_lea.vmem %s195, 32
        %v235 = vld [vmem:[%s234] sm:$0xff]
        %236 = vst.msk [vmem:[#allocation2 + $0x62] sm:$0xff] %vm196, %v235
        %s237 = scalar_lea.vmem %s195, 40
        %v238 = vld [vmem:[%s237] sm:$0xff]
        %239 = vst.msk [vmem:[#allocation2 + $0x72] sm:$0xff] %vm196, %v238
        %s240 = scalar_lea.vmem %s195, 48
        %v241 = vld [vmem:[%s240] sm:$0xff]
        %242 = vst.msk [vmem:[#allocation2 + $0x82] sm:$0xff] %vm196, %v241
        %s243 = scalar_lea.vmem %s195, 56
        %v244 = vld [vmem:[%s243] sm:$0xff]
        %245 = vst.msk [vmem:[#allocation2 + $0x92] sm:$0xff] %vm196, %v244
        %v246 = vld [vmem:[#allocation2] sm:$0xff]
        %v247 = vld [vmem:[#allocation2 + $0x8] sm:$0xff]
        %v248 = vld [vmem:[#allocation2 + $0x10] sm:$0xff]
        %v249 = vld [vmem:[#allocation2 + $0x18] sm:$0xff]
        %v250 = vld [vmem:[#allocation2 + $0x20] sm:$0xff]
        %v251 = vld [vmem:[#allocation2 + $0x28] sm:$0xff]
        %v252 = vld [vmem:[#allocation2 + $0x30] sm:$0xff]
        %v253 = vld [vmem:[#allocation2 + $0x38] sm:$0xff]
        %v254 = vld [vmem:[#allocation2 + $0x40] sm:$0xff]
        %v255 = vld [vmem:[#allocation2 + $0x48] sm:$0xff]
        %v256 = vld [vmem:[#allocation2 + $0x50] sm:$0xff]
        %v257 = vld [vmem:[#allocation2 + $0x58] sm:$0xff]
        %v258 = vld [vmem:[#allocation2 + $0x60] sm:$0xff]
        %v259 = vld [vmem:[#allocation2 + $0x68] sm:$0xff]
        %v260 = vld [vmem:[#allocation2 + $0x70] sm:$0xff]
        %v261 = vld [vmem:[#allocation2 + $0x78] sm:$0xff]
        %v262 = vld [vmem:[%s1] sm:$0xf]
        %v263 = vld [vmem:[#allocation2 + $0x1] sm:$0xff]
        %v264 = vld [vmem:[#allocation2 + $0x9] sm:$0xff]
        %v265 = vld [vmem:[#allocation2 + $0x11] sm:$0xff]
        %v266 = vld [vmem:[#allocation2 + $0x19] sm:$0xff]
        %v267 = vld [vmem:[#allocation2 + $0x21] sm:$0xff]
        %v268 = vld [vmem:[#allocation2 + $0x29] sm:$0xff]
        %v269 = vld [vmem:[#allocation2 + $0x31] sm:$0xff]
        %v270 = vld [vmem:[#allocation2 + $0x39] sm:$0xff]
        %v271 = vld [vmem:[#allocation2 + $0x41] sm:$0xff]
        %v272 = vld [vmem:[#allocation2 + $0x49] sm:$0xff]
        %v273 = vld [vmem:[#allocation2 + $0x51] sm:$0xff]
        %v274 = vld [vmem:[#allocation2 + $0x59] sm:$0xff]
        %v275 = vld [vmem:[#allocation2 + $0x61] sm:$0xff]
        %v276 = vld [vmem:[#allocation2 + $0x69] sm:$0xff]
        %v277 = vld [vmem:[#allocation2 + $0x71] sm:$0xff]
        %v278 = vld [vmem:[#allocation2 + $0x79] sm:$0xff]
        %s279 = scalar_lea.vmem %s1, 4
        %v280 = vld [vmem:[%s279] sm:$0xf]
        %v282 = vsel %vm196, %v263, 0
        %v285 = vsel %vm196, %v264, 0
        %v288 = vsel %vm196, %v265, 0
        %v291 = vsel %vm196, %v266, 0
        %v294 = vsel %vm196, %v267, 0
        %v297 = vsel %vm196, %v268, 0
        %v300 = vsel %vm196, %v269, 0
        %v303 = vsel %vm196, %v270, 0
        %v306 = vsel %vm196, %v271, 0
        %v309 = vsel %vm196, %v272, 0
        %v312 = vsel %vm196, %v273, 0
        %v315 = vsel %vm196, %v274, 0
        %v318 = vsel %vm196, %v275, 0
        %v321 = vsel %vm196, %v276, 0
        %v324 = vsel %vm196, %v277, 0
        %v327 = vsel %vm196, %v278, 0
        %vm329 = vcmask 1043456
        %v331 = vsel %vm329, %v280, 0
        %333 = vmatprep.subr.mxu0 0.0
        %334 = vmatpush1.msra.mxu0 %v331
        %335 = vmatprep.subr.mxu0 0.0
        %336 = vmatpush1.msra.mxu0 0.0
        %337 = vmatprep.subr.mxu0 0.0
        %338 = vmatpush1.msra.mxu0 0.0
        %339 = vmatprep.subr.mxu0 0.0
        %340 = vmatpush1.msra.mxu0 0.0
        %341 = vmatprep.subr.mxu0 0.0
        %342 = vmatpush1.msra.mxu0 0.0
        %343 = vmatprep.subr.mxu0 0.0
        %344 = vmatpush1.msra.mxu0 0.0
        %345 = vmatprep.subr.mxu0 0.0
        %346 = vmatpush1.msra.mxu0 0.0
        %347 = vmatprep.subr.mxu0 0.0
        %348 = vmatpush1.msra.mxu0 0.0
        %349 = vmatprep.subr.mxu0 0.0
        %350 = vmatpush1.msra.mxu0 0.0
        %351 = vmatprep.subr.mxu0 0.0
        %352 = vmatpush1.msra.mxu0 0.0
        %353 = vmatprep.subr.mxu0 0.0
        %354 = vmatpush1.msra.mxu0 0.0
        %355 = vmatprep.subr.mxu0 0.0
        %356 = vmatpush1.msra.mxu0 0.0
        %357 = vmatprep.subr.mxu0 0.0
        %358 = vmatpush1.msra.mxu0 0.0
        %359 = vmatprep.subr.mxu0 0.0
        %360 = vmatpush1.msra.mxu0 0.0
        %361 = vmatprep.subr.mxu0 0.0
        %362 = vmatpush1.msra.mxu0 0.0
        %363 = vmatprep.subr.mxu0 0.0
        %364 = vmatpush1.msra.mxu0 0.0
        %365 = vmatprep.subr.mxu0 0.0
        %366 = vmatpush1.msra.mxu0 0.0
        %367 = vmatprep.subr.mxu0 0.0
        %368 = vmatpush1.msra.mxu0 0.0
        %369 = vmatprep.subr.mxu0 0.0
        %370 = vmatpush1.msra.mxu0 0.0
        %371 = vmatprep.subr.mxu0 0.0
        %372 = vmatpush1.msra.mxu0 0.0
        %373 = vmatprep.subr.mxu0 0.0
        %374 = vmatpush1.msra.mxu0 0.0
        %375 = vmatprep.subr.mxu0 0.0
        %376 = vmatpush1.msra.mxu0 0.0
        %377 = vmatprep.subr.mxu0 0.0
        %378 = vmatpush1.msra.mxu0 0.0
        %379 = vmatprep.subr.mxu0 0.0
        %380 = vmatpush1.msra.mxu0 0.0
        %381 = vmatprep.subr.mxu0 0.0
        %382 = vmatpush1.msra.mxu0 0.0
        %383 = vmatprep.subr.mxu0 0.0
        %384 = vmatpush1.msra.mxu0 0.0
        %385 = vmatprep.subr.mxu0 0.0
        %386 = vmatpush1.msra.mxu0 0.0
        %387 = vmatprep.subr.mxu0 0.0
        %388 = vmatpush1.msra.mxu0 0.0
        %389 = vmatprep.subr.mxu0 0.0
        %390 = vmatpush1.msra.mxu0 0.0
        %391 = vmatprep.subr.mxu0 0.0
        %392 = vmatpush1.msra.mxu0 0.0
        %393 = vmatprep.subr.mxu0 0.0
        %394 = vmatpush1.msra.mxu0 0.0
        %395 = vmatprep.subr.mxu0 0.0
        %396 = vmatpush1.msra.mxu0 0.0
        %397 = vmatprep.mubr.f32.mxu0 0.0
        %398 = vmatmul.mubr.f32.gmra.mrb[0].mxu0 %v282
        %v399 = vpop.f32.mrb[0].mxu0
        %v400 = vadd.f32 0.0, %v399
        %v401 = vpop.f32.mrb[0].mxu0
        %402 = vmatprep.mubr.f32.mxu0 0.0
        %403 = vmatmul.mubr.f32.gmra.mrb[0].mxu0 %v285
        %v404 = vpop.f32.mrb[0].mxu0
        %v405 = vpop.f32.mrb[0].mxu0
        %406 = vmatprep.mubr.f32.mxu0 0.0
        %407 = vmatmul.mubr.f32.gmra.mrb[0].mxu0 %v288
        %v408 = vpop.f32.mrb[0].mxu0
        %v409 = vadd.f32 0.0, %v408
        %v410 = vpop.f32.mrb[0].mxu0
        %411 = vmatprep.mubr.f32.mxu0 0.0
        %412 = vmatmul.mubr.f32.gmra.mrb[0].mxu0 %v291
        %v413 = vpop.f32.mrb[0].mxu0
        %v414 = vpop.f32.mrb[0].mxu0
        %415 = vmatprep.mubr.f32.mxu0 0.0
        %416 = vmatmul.mubr.f32.gmra.mrb[0].mxu0 %v294
        %v417 = vpop.f32.mrb[0].mxu0
        %v418 = vadd.f32 0.0, %v417
        %v419 = vpop.f32.mrb[0].mxu0
        %420 = vmatprep.mubr.f32.mxu0 0.0
        %421 = vmatmul.mubr.f32.gmra.mrb[0].mxu0 %v297
        %v422 = vpop.f32.mrb[0].mxu0
        %v423 = vpop.f32.mrb[0].mxu0
        %424 = vmatprep.mubr.f32.mxu0 0.0
        %425 = vmatmul.mubr.f32.gmra.mrb[0].mxu0 %v300
        %v426 = vpop.f32.mrb[0].mxu0
        %v427 = vadd.f32 0.0, %v426
        %v428 = vpop.f32.mrb[0].mxu0
        %429 = vmatprep.mubr.f32.mxu0 0.0
        %430 = vmatmul.mubr.f32.gmra.mrb[0].mxu0 %v303
        %v431 = vpop.f32.mrb[0].mxu0
        %v432 = vpop.f32.mrb[0].mxu0
        %433 = vmatprep.mubr.f32.mxu0 0.0
        %434 = vmatmul.mubr.f32.gmra.mrb[0].mxu0 %v306
        %v435 = vpop.f32.mrb[0].mxu0
        %v436 = vadd.f32 0.0, %v435
        %v437 = vpop.f32.mrb[0].mxu0
        %438 = vmatprep.mubr.f32.mxu0 0.0
        %439 = vmatmul.mubr.f32.gmra.mrb[0].mxu0 %v309
        %v440 = vpop.f32.mrb[0].mxu0
        %v441 = vpop.f32.mrb[0].mxu0
        %442 = vmatprep.mubr.f32.mxu0 0.0
        %443 = vmatmul.mubr.f32.gmra.mrb[0].mxu0 %v312
        %v444 = vpop.f32.mrb[0].mxu0
        %v445 = vadd.f32 0.0, %v444
        %v446 = vpop.f32.mrb[0].mxu0
        %447 = vmatprep.mubr.f32.mxu0 0.0
        %448 = vmatmul.mubr.f32.gmra.mrb[0].mxu0 %v315
        %v449 = vpop.f32.mrb[0].mxu0
        %v450 = vpop.f32.mrb[0].mxu0
        %451 = vmatprep.mubr.f32.mxu0 0.0
        %452 = vmatmul.mubr.f32.gmra.mrb[0].mxu0 %v318
        %v453 = vpop.f32.mrb[0].mxu0
        %v454 = vadd.f32 0.0, %v453
        %v455 = vpop.f32.mrb[0].mxu0
        %456 = vmatprep.mubr.f32.mxu0 0.0
        %457 = vmatmul.mubr.f32.gmra.mrb[0].mxu0 %v321
        %v458 = vpop.f32.mrb[0].mxu0
        %v459 = vpop.f32.mrb[0].mxu0
        %460 = vmatprep.mubr.f32.mxu0 0.0
        %461 = vmatmul.mubr.f32.gmra.mrb[0].mxu0 %v324
        %v462 = vpop.f32.mrb[0].mxu0
        %v463 = vadd.f32 0.0, %v462
        %v464 = vpop.f32.mrb[0].mxu0
        %465 = vmatprep.mubr.f32.mxu0 0.0
        %466 = vmatmul.mubr.f32.gmra.mrb[0].mxu0 %v327
        %v467 = vpop.f32.mrb[0].mxu0
        %v468 = vpop.f32.mrb[0].mxu0
        %469 = vdwg.mxu0
        %v471 = vsel %vm196, %v246, 0
        %v474 = vsel %vm196, %v247, 0
        %v477 = vsel %vm196, %v248, 0
        %v480 = vsel %vm196, %v249, 0
        %v483 = vsel %vm196, %v250, 0
        %v486 = vsel %vm196, %v251, 0
        %v489 = vsel %vm196, %v252, 0
        %v492 = vsel %vm196, %v253, 0
        %v495 = vsel %vm196, %v254, 0
        %v498 = vsel %vm196, %v255, 0
        %v501 = vsel %vm196, %v256, 0
        %v504 = vsel %vm196, %v257, 0
        %v507 = vsel %vm196, %v258, 0
        %v510 = vsel %vm196, %v259, 0
        %v513 = vsel %vm196, %v260, 0
        %v516 = vsel %vm196, %v261, 0
        %v519 = vsel %vm329, %v262, 0
        %521 = vmatprep.subr.mxu0 0.0
        %522 = vmatpush1.msra.mxu0 %v519
        %523 = vmatprep.subr.mxu0 0.0
        %524 = vmatpush1.msra.mxu0 0.0
        %525 = vmatprep.subr.mxu0 0.0
        %526 = vmatpush1.msra.mxu0 0.0
        %527 = vmatprep.subr.mxu0 0.0
        %528 = vmatpush1.msra.mxu0 0.0
        %529 = vmatprep.subr.mxu0 0.0
        %530 = vmatpush1.msra.mxu0 0.0
        %531 = vmatprep.subr.mxu0 0.0
        %532 = vmatpush1.msra.mxu0 0.0
        %533 = vmatprep.subr.mxu0 0.0
        %534 = vmatpush1.msra.mxu0 0.0
        %535 = vmatprep.subr.mxu0 0.0
        %536 = vmatpush1.msra.mxu0 0.0
        %537 = vmatprep.subr.mxu0 0.0
        %538 = vmatpush1.msra.mxu0 0.0
        %539 = vmatprep.subr.mxu0 0.0
        %540 = vmatpush1.msra.mxu0 0.0
        %541 = vmatprep.subr.mxu0 0.0
        %542 = vmatpush1.msra.mxu0 0.0
        %543 = vmatprep.subr.mxu0 0.0
        %544 = vmatpush1.msra.mxu0 0.0
        %545 = vmatprep.subr.mxu0 0.0
        %546 = vmatpush1.msra.mxu0 0.0
        %547 = vmatprep.subr.mxu0 0.0
        %548 = vmatpush1.msra.mxu0 0.0
        %549 = vmatprep.subr.mxu0 0.0
        %550 = vmatpush1.msra.mxu0 0.0
        %551 = vmatprep.subr.mxu0 0.0
        %552 = vmatpush1.msra.mxu0 0.0
        %553 = vmatprep.subr.mxu0 0.0
        %554 = vmatpush1.msra.mxu0 0.0
        %555 = vmatprep.subr.mxu0 0.0
        %556 = vmatpush1.msra.mxu0 0.0
        %557 = vmatprep.subr.mxu0 0.0
        %558 = vmatpush1.msra.mxu0 0.0
        %559 = vmatprep.subr.mxu0 0.0
        %560 = vmatpush1.msra.mxu0 0.0
        %561 = vmatprep.subr.mxu0 0.0
        %562 = vmatpush1.msra.mxu0 0.0
        %563 = vmatprep.subr.mxu0 0.0
        %564 = vmatpush1.msra.mxu0 0.0
        %565 = vmatprep.subr.mxu0 0.0
        %566 = vmatpush1.msra.mxu0 0.0
        %567 = vmatprep.subr.mxu0 0.0
        %568 = vmatpush1.msra.mxu0 0.0
        %569 = vmatprep.subr.mxu0 0.0
        %570 = vmatpush1.msra.mxu0 0.0
        %571 = vmatprep.subr.mxu0 0.0
        %572 = vmatpush1.msra.mxu0 0.0
        %573 = vmatprep.subr.mxu0 0.0
        %574 = vmatpush1.msra.mxu0 0.0
        %575 = vmatprep.subr.mxu0 0.0
        %576 = vmatpush1.msra.mxu0 0.0
        %577 = vmatprep.subr.mxu0 0.0
        %578 = vmatpush1.msra.mxu0 0.0
        %579 = vmatprep.subr.mxu0 0.0
        %580 = vmatpush1.msra.mxu0 0.0
        %581 = vmatprep.subr.mxu0 0.0
        %582 = vmatpush1.msra.mxu0 0.0
        %583 = vmatprep.subr.mxu0 0.0
        %584 = vmatpush1.msra.mxu0 0.0
        %585 = vmatprep.mubr.f32.mxu0 0.0
        %586 = vmatmul.mubr.f32.gmra.mrb[0].mxu0 %v471
        %v587 = vpop.f32.mrb[0].mxu0
        %v588 = vadd.f32 %v400, %v587
        %v589 = vpop.f32.mrb[0].mxu0
        %590 = vmatprep.mubr.f32.mxu0 0.0
        %591 = vmatmul.mubr.f32.gmra.mrb[0].mxu0 %v474
        %v592 = vpop.f32.mrb[0].mxu0
        %v593 = vpop.f32.mrb[0].mxu0
        %594 = vmatprep.mubr.f32.mxu0 0.0
        %595 = vmatmul.mubr.f32.gmra.mrb[0].mxu0 %v477
        %v596 = vpop.f32.mrb[0].mxu0
        %v597 = vadd.f32 %v409, %v596
        %v598 = vpop.f32.mrb[0].mxu0
        %599 = vmatprep.mubr.f32.mxu0 0.0
        %600 = vmatmul.mubr.f32.gmra.mrb[0].mxu0 %v480
        %v601 = vpop.f32.mrb[0].mxu0
        %v602 = vpop.f32.mrb[0].mxu0
        %603 = vmatprep.mubr.f32.mxu0 0.0
        %604 = vmatmul.mubr.f32.gmra.mrb[0].mxu0 %v483
        %v605 = vpop.f32.mrb[0].mxu0
        %v606 = vadd.f32 %v418, %v605
        %v607 = vpop.f32.mrb[0].mxu0
        %608 = vmatprep.mubr.f32.mxu0 0.0
        %609 = vmatmul.mubr.f32.gmra.mrb[0].mxu0 %v486
        %v610 = vpop.f32.mrb[0].mxu0
        %v611 = vpop.f32.mrb[0].mxu0
        %612 = vmatprep.mubr.f32.mxu0 0.0
        %613 = vmatmul.mubr.f32.gmra.mrb[0].mxu0 %v489
        %v614 = vpop.f32.mrb[0].mxu0
        %v615 = vadd.f32 %v427, %v614
        %v616 = vpop.f32.mrb[0].mxu0
        %617 = vmatprep.mubr.f32.mxu0 0.0
        %618 = vmatmul.mubr.f32.gmra.mrb[0].mxu0 %v492
        %v619 = vpop.f32.mrb[0].mxu0
        %v620 = vpop.f32.mrb[0].mxu0
        %621 = vmatprep.mubr.f32.mxu0 0.0
        %622 = vmatmul.mubr.f32.gmra.mrb[0].mxu0 %v495
        %v623 = vpop.f32.mrb[0].mxu0
        %v624 = vadd.f32 %v436, %v623
        %v625 = vpop.f32.mrb[0].mxu0
        %626 = vmatprep.mubr.f32.mxu0 0.0
        %627 = vmatmul.mubr.f32.gmra.mrb[0].mxu0 %v498
        %v628 = vpop.f32.mrb[0].mxu0
        %v629 = vpop.f32.mrb[0].mxu0
        %630 = vmatprep.mubr.f32.mxu0 0.0
        %631 = vmatmul.mubr.f32.gmra.mrb[0].mxu0 %v501
        %v632 = vpop.f32.mrb[0].mxu0
        %v633 = vadd.f32 %v445, %v632
        %v634 = vpop.f32.mrb[0].mxu0
        %635 = vmatprep.mubr.f32.mxu0 0.0
        %636 = vmatmul.mubr.f32.gmra.mrb[0].mxu0 %v504
        %v637 = vpop.f32.mrb[0].mxu0
        %v638 = vpop.f32.mrb[0].mxu0
        %639 = vmatprep.mubr.f32.mxu0 0.0
        %640 = vmatmul.mubr.f32.gmra.mrb[0].mxu0 %v507
        %v641 = vpop.f32.mrb[0].mxu0
        %v642 = vadd.f32 %v454, %v641
        %v643 = vpop.f32.mrb[0].mxu0
        %644 = vmatprep.mubr.f32.mxu0 0.0
        %645 = vmatmul.mubr.f32.gmra.mrb[0].mxu0 %v510
        %v646 = vpop.f32.mrb[0].mxu0
        %v647 = vpop.f32.mrb[0].mxu0
        %648 = vmatprep.mubr.f32.mxu0 0.0
        %649 = vmatmul.mubr.f32.gmra.mrb[0].mxu0 %v513
        %v650 = vpop.f32.mrb[0].mxu0
        %v651 = vadd.f32 %v463, %v650
        %v652 = vpop.f32.mrb[0].mxu0
        %653 = vmatprep.mubr.f32.mxu0 0.0
        %654 = vmatmul.mubr.f32.gmra.mrb[0].mxu0 %v516
        %v655 = vpop.f32.mrb[0].mxu0
        %v656 = vpop.f32.mrb[0].mxu0
        %657 = vdwg.mxu0
        %v658 = vld [vmem:[#allocation2 + $0x2] sm:$0xff]
        %v659 = vld [vmem:[#allocation2 + $0xa] sm:$0xff]
        %v660 = vld [vmem:[#allocation2 + $0x12] sm:$0xff]
        %v661 = vld [vmem:[#allocation2 + $0x1a] sm:$0xff]
        %v662 = vld [vmem:[#allocation2 + $0x22] sm:$0xff]
        %v663 = vld [vmem:[#allocation2 + $0x2a] sm:$0xff]
        %v664 = vld [vmem:[#allocation2 + $0x32] sm:$0xff]
        %v665 = vld [vmem:[#allocation2 + $0x3a] sm:$0xff]
        %v666 = vld [vmem:[#allocation2 + $0x42] sm:$0xff]
        %v667 = vld [vmem:[#allocation2 + $0x4a] sm:$0xff]
        %v668 = vld [vmem:[#allocation2 + $0x52] sm:$0xff]
        %v669 = vld [vmem:[#allocation2 + $0x5a] sm:$0xff]
        %v670 = vld [vmem:[#allocation2 + $0x62] sm:$0xff]
        %v671 = vld [vmem:[#allocation2 + $0x6a] sm:$0xff]
        %v672 = vld [vmem:[#allocation2 + $0x72] sm:$0xff]
        %v673 = vld [vmem:[#allocation2 + $0x7a] sm:$0xff]
        %s674 = scalar_lea.vmem %s1, 8
        %v675 = vld [vmem:[%s674] sm:$0xf]
        %v677 = vsel %vm196, %v658, 0
        %v680 = vsel %vm196, %v659, 0
        %v683 = vsel %vm196, %v660, 0
        %v686 = vsel %vm196, %v661, 0
        %v689 = vsel %vm196, %v662, 0
        %v692 = vsel %vm196, %v663, 0
        %v695 = vsel %vm196, %v664, 0
        %v698 = vsel %vm196, %v665, 0
        %v701 = vsel %vm196, %v666, 0
        %v704 = vsel %vm196, %v667, 0
        %v707 = vsel %vm196, %v668, 0
        %v710 = vsel %vm196, %v669, 0
        %v713 = vsel %vm196, %v670, 0
        %v716 = vsel %vm196, %v671, 0
        %v719 = vsel %vm196, %v672, 0
        %v722 = vsel %vm196, %v673, 0
        %v725 = vsel %vm329, %v675, 0
        %727 = vmatprep.subr.mxu0 0.0
        %728 = vmatpush1.msra.mxu0 %v725
        %729 = vmatprep.subr.mxu0 0.0
        %730 = vmatpush1.msra.mxu0 0.0
        %731 = vmatprep.subr.mxu0 0.0
        %732 = vmatpush1.msra.mxu0 0.0
        %733 = vmatprep.subr.mxu0 0.0
        %734 = vmatpush1.msra.mxu0 0.0
        %735 = vmatprep.subr.mxu0 0.0
        %736 = vmatpush1.msra.mxu0 0.0
        %737 = vmatprep.subr.mxu0 0.0
        %738 = vmatpush1.msra.mxu0 0.0
        %739 = vmatprep.subr.mxu0 0.0
        %740 = vmatpush1.msra.mxu0 0.0
        %741 = vmatprep.subr.mxu0 0.0
        %742 = vmatpush1.msra.mxu0 0.0
        %743 = vmatprep.subr.mxu0 0.0
        %744 = vmatpush1.msra.mxu0 0.0
        %745 = vmatprep.subr.mxu0 0.0
        %746 = vmatpush1.msra.mxu0 0.0
        %747 = vmatprep.subr.mxu0 0.0
        %748 = vmatpush1.msra.mxu0 0.0
        %749 = vmatprep.subr.mxu0 0.0
        %750 = vmatpush1.msra.mxu0 0.0
        %751 = vmatprep.subr.mxu0 0.0
        %752 = vmatpush1.msra.mxu0 0.0
        %753 = vmatprep.subr.mxu0 0.0
        %754 = vmatpush1.msra.mxu0 0.0
        %755 = vmatprep.subr.mxu0 0.0
        %756 = vmatpush1.msra.mxu0 0.0
        %757 = vmatprep.subr.mxu0 0.0
        %758 = vmatpush1.msra.mxu0 0.0
        %759 = vmatprep.subr.mxu0 0.0
        %760 = vmatpush1.msra.mxu0 0.0
        %761 = vmatprep.subr.mxu0 0.0
        %762 = vmatpush1.msra.mxu0 0.0
        %763 = vmatprep.subr.mxu0 0.0
        %764 = vmatpush1.msra.mxu0 0.0
        %765 = vmatprep.subr.mxu0 0.0
        %766 = vmatpush1.msra.mxu0 0.0
        %767 = vmatprep.subr.mxu0 0.0
        %768 = vmatpush1.msra.mxu0 0.0
        %769 = vmatprep.subr.mxu0 0.0
        %770 = vmatpush1.msra.mxu0 0.0
        %771 = vmatprep.subr.mxu0 0.0
        %772 = vmatpush1.msra.mxu0 0.0
        %773 = vmatprep.subr.mxu0 0.0
        %774 = vmatpush1.msra.mxu0 0.0
        %775 = vmatprep.subr.mxu0 0.0
        %776 = vmatpush1.msra.mxu0 0.0
        %777 = vmatprep.subr.mxu0 0.0
        %778 = vmatpush1.msra.mxu0 0.0
        %779 = vmatprep.subr.mxu0 0.0
        %780 = vmatpush1.msra.mxu0 0.0
        %781 = vmatprep.subr.mxu0 0.0
        %782 = vmatpush1.msra.mxu0 0.0
        %783 = vmatprep.subr.mxu0 0.0
        %784 = vmatpush1.msra.mxu0 0.0
        %785 = vmatprep.subr.mxu0 0.0
        %786 = vmatpush1.msra.mxu0 0.0
        %787 = vmatprep.subr.mxu0 0.0
        %788 = vmatpush1.msra.mxu0 0.0
        %789 = vmatprep.subr.mxu0 0.0
        %790 = vmatpush1.msra.mxu0 0.0
        %791 = vmatprep.mubr.f32.mxu0 0.0
        %792 = vmatmul.mubr.f32.gmra.mrb[0].mxu0 %v677
        %v793 = vpop.f32.mrb[0].mxu0
        %v794 = vadd.f32 0.0, %v793
        %v795 = vpop.f32.mrb[0].mxu0
        %796 = vmatprep.mubr.f32.mxu0 0.0
        %797 = vmatmul.mubr.f32.gmra.mrb[0].mxu0 %v680
        %v798 = vpop.f32.mrb[0].mxu0
        %v799 = vpop.f32.mrb[0].mxu0
        %800 = vmatprep.mubr.f32.mxu0 0.0
        %801 = vmatmul.mubr.f32.gmra.mrb[0].mxu0 %v683
        %v802 = vpop.f32.mrb[0].mxu0
        %v803 = vadd.f32 0.0, %v802
        %v804 = vpop.f32.mrb[0].mxu0
        %805 = vmatprep.mubr.f32.mxu0 0.0
        %806 = vmatmul.mubr.f32.gmra.mrb[0].mxu0 %v686
        %v807 = vpop.f32.mrb[0].mxu0
        %v808 = vpop.f32.mrb[0].mxu0
        %809 = vmatprep.mubr.f32.mxu0 0.0
        %810 = vmatmul.mubr.f32.gmra.mrb[0].mxu0 %v689
        %v811 = vpop.f32.mrb[0].mxu0
        %v812 = vadd.f32 0.0, %v811
        %v813 = vpop.f32.mrb[0].mxu0
        %814 = vmatprep.mubr.f32.mxu0 0.0
        %815 = vmatmul.mubr.f32.gmra.mrb[0].mxu0 %v692
        %v816 = vpop.f32.mrb[0].mxu0
        %v817 = vpop.f32.mrb[0].mxu0
        %818 = vmatprep.mubr.f32.mxu0 0.0
        %819 = vmatmul.mubr.f32.gmra.mrb[0].mxu0 %v695
        %v820 = vpop.f32.mrb[0].mxu0
        %v821 = vadd.f32 0.0, %v820
        %v822 = vpop.f32.mrb[0].mxu0
        %823 = vmatprep.mubr.f32.mxu0 0.0
        %824 = vmatmul.mubr.f32.gmra.mrb[0].mxu0 %v698
        %v825 = vpop.f32.mrb[0].mxu0
        %v826 = vpop.f32.mrb[0].mxu0
        %827 = vmatprep.mubr.f32.mxu0 0.0
        %828 = vmatmul.mubr.f32.gmra.mrb[0].mxu0 %v701
        %v829 = vpop.f32.mrb[0].mxu0
        %v830 = vadd.f32 0.0, %v829
        %v831 = vpop.f32.mrb[0].mxu0
        %832 = vmatprep.mubr.f32.mxu0 0.0
        %833 = vmatmul.mubr.f32.gmra.mrb[0].mxu0 %v704
        %v834 = vpop.f32.mrb[0].mxu0
        %v835 = vpop.f32.mrb[0].mxu0
        %836 = vmatprep.mubr.f32.mxu0 0.0
        %837 = vmatmul.mubr.f32.gmra.mrb[0].mxu0 %v707
        %v838 = vpop.f32.mrb[0].mxu0
        %v839 = vadd.f32 0.0, %v838
        %v840 = vpop.f32.mrb[0].mxu0
        %841 = vmatprep.mubr.f32.mxu0 0.0
        %842 = vmatmul.mubr.f32.gmra.mrb[0].mxu0 %v710
        %v843 = vpop.f32.mrb[0].mxu0
        %v844 = vpop.f32.mrb[0].mxu0
        %845 = vmatprep.mubr.f32.mxu0 0.0
        %846 = vmatmul.mubr.f32.gmra.mrb[0].mxu0 %v713
        %v847 = vpop.f32.mrb[0].mxu0
        %v848 = vadd.f32 0.0, %v847
        %v849 = vpop.f32.mrb[0].mxu0
        %850 = vmatprep.mubr.f32.mxu0 0.0
        %851 = vmatmul.mubr.f32.gmra.mrb[0].mxu0 %v716
        %v852 = vpop.f32.mrb[0].mxu0
        %v853 = vpop.f32.mrb[0].mxu0
        %854 = vmatprep.mubr.f32.mxu0 0.0
        %855 = vmatmul.mubr.f32.gmra.mrb[0].mxu0 %v719
        %v856 = vpop.f32.mrb[0].mxu0
        %v857 = vadd.f32 0.0, %v856
        %v858 = vpop.f32.mrb[0].mxu0
        %859 = vmatprep.mubr.f32.mxu0 0.0
        %860 = vmatmul.mubr.f32.gmra.mrb[0].mxu0 %v722
        %v861 = vpop.f32.mrb[0].mxu0
        %v862 = vpop.f32.mrb[0].mxu0
        %863 = vdwg.mxu0
        %v864 = vadd.f32 %v588, %v794
        %v865 = vadd.f32 %v597, %v803
        %v866 = vadd.f32 %v606, %v812
        %v867 = vadd.f32 %v615, %v821
        %v868 = vadd.f32 %v624, %v830
        %v869 = vadd.f32 %v633, %v839
        %v870 = vadd.f32 %v642, %v848
        %v871 = vadd.f32 %v651, %v857
        %v872 = vld [vmem:[#allocation2 + $0x3] sm:$0xff]
        %v873 = vld [vmem:[#allocation2 + $0xb] sm:$0xff]
        %v874 = vld [vmem:[#allocation2 + $0x13] sm:$0xff]
        %v875 = vld [vmem:[#allocation2 + $0x1b] sm:$0xff]
        %v876 = vld [vmem:[#allocation2 + $0x23] sm:$0xff]
        %v877 = vld [vmem:[#allocation2 + $0x2b] sm:$0xff]
        %v878 = vld [vmem:[#allocation2 + $0x33] sm:$0xff]
        %v879 = vld [vmem:[#allocation2 + $0x3b] sm:$0xff]
        %v880 = vld [vmem:[#allocation2 + $0x43] sm:$0xff]
        %v881 = vld [vmem:[#allocation2 + $0x4b] sm:$0xff]
        %v882 = vld [vmem:[#allocation2 + $0x53] sm:$0xff]
        %v883 = vld [vmem:[#allocation2 + $0x5b] sm:$0xff]
        %v884 = vld [vmem:[#allocation2 + $0x63] sm:$0xff]
        %v885 = vld [vmem:[#allocation2 + $0x6b] sm:$0xff]
        %v886 = vld [vmem:[#allocation2 + $0x73] sm:$0xff]
        %v887 = vld [vmem:[#allocation2 + $0x7b] sm:$0xff]
        %s888 = scalar_lea.vmem %s1, 12
        %v889 = vld [vmem:[%s888] sm:$0xf]
        %v891 = vsel %vm196, %v872, 0
        %v894 = vsel %vm196, %v873, 0
        %v897 = vsel %vm196, %v874, 0
        %v900 = vsel %vm196, %v875, 0
        %v903 = vsel %vm196, %v876, 0
        %v906 = vsel %vm196, %v877, 0
        %v909 = vsel %vm196, %v878, 0
        %v912 = vsel %vm196, %v879, 0
        %v915 = vsel %vm196, %v880, 0
        %v918 = vsel %vm196, %v881, 0
        %v921 = vsel %vm196, %v882, 0
        %v924 = vsel %vm196, %v883, 0
        %v927 = vsel %vm196, %v884, 0
        %v930 = vsel %vm196, %v885, 0
        %v933 = vsel %vm196, %v886, 0
        %v936 = vsel %vm196, %v887, 0
        %v939 = vsel %vm329, %v889, 0
        %941 = vmatprep.subr.mxu0 0.0
        %942 = vmatpush1.msra.mxu0 %v939
        %943 = vmatprep.subr.mxu0 0.0
        %944 = vmatpush1.msra.mxu0 0.0
        %945 = vmatprep.subr.mxu0 0.0
        %946 = vmatpush1.msra.mxu0 0.0
        %947 = vmatprep.subr.mxu0 0.0
        %948 = vmatpush1.msra.mxu0 0.0
        %949 = vmatprep.subr.mxu0 0.0
        %950 = vmatpush1.msra.mxu0 0.0
        %951 = vmatprep.subr.mxu0 0.0
        %952 = vmatpush1.msra.mxu0 0.0
        %953 = vmatprep.subr.mxu0 0.0
        %954 = vmatpush1.msra.mxu0 0.0
        %955 = vmatprep.subr.mxu0 0.0
        %956 = vmatpush1.msra.mxu0 0.0
        %957 = vmatprep.subr.mxu0 0.0
        %958 = vmatpush1.msra.mxu0 0.0
        %959 = vmatprep.subr.mxu0 0.0
        %960 = vmatpush1.msra.mxu0 0.0
        %961 = vmatprep.subr.mxu0 0.0
        %962 = vmatpush1.msra.mxu0 0.0
        %963 = vmatprep.subr.mxu0 0.0
        %964 = vmatpush1.msra.mxu0 0.0
        %965 = vmatprep.subr.mxu0 0.0
        %966 = vmatpush1.msra.mxu0 0.0
        %967 = vmatprep.subr.mxu0 0.0
        %968 = vmatpush1.msra.mxu0 0.0
        %969 = vmatprep.subr.mxu0 0.0
        %970 = vmatpush1.msra.mxu0 0.0
        %971 = vmatprep.subr.mxu0 0.0
        %972 = vmatpush1.msra.mxu0 0.0
        %973 = vmatprep.subr.mxu0 0.0
        %974 = vmatpush1.msra.mxu0 0.0
        %975 = vmatprep.subr.mxu0 0.0
        %976 = vmatpush1.msra.mxu0 0.0
        %977 = vmatprep.subr.mxu0 0.0
        %978 = vmatpush1.msra.mxu0 0.0
        %979 = vmatprep.subr.mxu0 0.0
        %980 = vmatpush1.msra.mxu0 0.0
        %981 = vmatprep.subr.mxu0 0.0
        %982 = vmatpush1.msra.mxu0 0.0
        %983 = vmatprep.subr.mxu0 0.0
        %984 = vmatpush1.msra.mxu0 0.0
        %985 = vmatprep.subr.mxu0 0.0
        %986 = vmatpush1.msra.mxu0 0.0
        %987 = vmatprep.subr.mxu0 0.0
        %988 = vmatpush1.msra.mxu0 0.0
        %989 = vmatprep.subr.mxu0 0.0
        %990 = vmatpush1.msra.mxu0 0.0
        %991 = vmatprep.subr.mxu0 0.0
        %992 = vmatpush1.msra.mxu0 0.0
        %993 = vmatprep.subr.mxu0 0.0
        %994 = vmatpush1.msra.mxu0 0.0
        %995 = vmatprep.subr.mxu0 0.0
        %996 = vmatpush1.msra.mxu0 0.0
        %997 = vmatprep.subr.mxu0 0.0
        %998 = vmatpush1.msra.mxu0 0.0
        %999 = vmatprep.subr.mxu0 0.0
        %1000 = vmatpush1.msra.mxu0 0.0
        %1001 = vmatprep.subr.mxu0 0.0
        %1002 = vmatpush1.msra.mxu0 0.0
        %1003 = vmatprep.subr.mxu0 0.0
        %1004 = vmatpush1.msra.mxu0 0.0
        %1005 = vmatprep.mubr.f32.mxu0 0.0
        %1006 = vmatmul.mubr.f32.gmra.mrb[0].mxu0 %v891
        %v1007 = vpop.f32.mrb[0].mxu0
        %v1008 = vadd.f32 0.0, %v1007
        %v1009 = vpop.f32.mrb[0].mxu0
        %1010 = vmatprep.mubr.f32.mxu0 0.0
        %1011 = vmatmul.mubr.f32.gmra.mrb[0].mxu0 %v894
        %v1012 = vpop.f32.mrb[0].mxu0
        %v1013 = vpop.f32.mrb[0].mxu0
        %1014 = vmatprep.mubr.f32.mxu0 0.0
        %1015 = vmatmul.mubr.f32.gmra.mrb[0].mxu0 %v897
        %v1016 = vpop.f32.mrb[0].mxu0
        %v1017 = vadd.f32 0.0, %v1016
        %v1018 = vpop.f32.mrb[0].mxu0
        %1019 = vmatprep.mubr.f32.mxu0 0.0
        %1020 = vmatmul.mubr.f32.gmra.mrb[0].mxu0 %v900
        %v1021 = vpop.f32.mrb[0].mxu0
        %v1022 = vpop.f32.mrb[0].mxu0
        %1023 = vmatprep.mubr.f32.mxu0 0.0
        %1024 = vmatmul.mubr.f32.gmra.mrb[0].mxu0 %v903
        %v1025 = vpop.f32.mrb[0].mxu0
        %v1026 = vadd.f32 0.0, %v1025
        %v1027 = vpop.f32.mrb[0].mxu0
        %1028 = vmatprep.mubr.f32.mxu0 0.0
        %1029 = vmatmul.mubr.f32.gmra.mrb[0].mxu0 %v906
        %v1030 = vpop.f32.mrb[0].mxu0
        %v1031 = vpop.f32.mrb[0].mxu0
        %1032 = vmatprep.mubr.f32.mxu0 0.0
        %1033 = vmatmul.mubr.f32.gmra.mrb[0].mxu0 %v909
        %v1034 = vpop.f32.mrb[0].mxu0
        %v1035 = vadd.f32 0.0, %v1034
        %v1036 = vpop.f32.mrb[0].mxu0
        %1037 = vmatprep.mubr.f32.mxu0 0.0
        %1038 = vmatmul.mubr.f32.gmra.mrb[0].mxu0 %v912
        %v1039 = vpop.f32.mrb[0].mxu0
        %v1040 = vpop.f32.mrb[0].mxu0
        %1041 = vmatprep.mubr.f32.mxu0 0.0
        %1042 = vmatmul.mubr.f32.gmra.mrb[0].mxu0 %v915
        %v1043 = vpop.f32.mrb[0].mxu0
        %v1044 = vadd.f32 0.0, %v1043
        %v1045 = vpop.f32.mrb[0].mxu0
        %1046 = vmatprep.mubr.f32.mxu0 0.0
        %1047 = vmatmul.mubr.f32.gmra.mrb[0].mxu0 %v918
        %v1048 = vpop.f32.mrb[0].mxu0
        %v1049 = vpop.f32.mrb[0].mxu0
        %1050 = vmatprep.mubr.f32.mxu0 0.0
        %1051 = vmatmul.mubr.f32.gmra.mrb[0].mxu0 %v921
        %v1052 = vpop.f32.mrb[0].mxu0
        %v1053 = vadd.f32 0.0, %v1052
        %v1054 = vpop.f32.mrb[0].mxu0
        %1055 = vmatprep.mubr.f32.mxu0 0.0
        %1056 = vmatmul.mubr.f32.gmra.mrb[0].mxu0 %v924
        %v1057 = vpop.f32.mrb[0].mxu0
        %v1058 = vpop.f32.mrb[0].mxu0
        %1059 = vmatprep.mubr.f32.mxu0 0.0
        %1060 = vmatmul.mubr.f32.gmra.mrb[0].mxu0 %v927
        %v1061 = vpop.f32.mrb[0].mxu0
        %v1062 = vadd.f32 0.0, %v1061
        %v1063 = vpop.f32.mrb[0].mxu0
        %1064 = vmatprep.mubr.f32.mxu0 0.0
        %1065 = vmatmul.mubr.f32.gmra.mrb[0].mxu0 %v930
        %v1066 = vpop.f32.mrb[0].mxu0
        %v1067 = vpop.f32.mrb[0].mxu0
        %1068 = vmatprep.mubr.f32.mxu0 0.0
        %1069 = vmatmul.mubr.f32.gmra.mrb[0].mxu0 %v933
        %v1070 = vpop.f32.mrb[0].mxu0
        %v1071 = vadd.f32 0.0, %v1070
        %v1072 = vpop.f32.mrb[0].mxu0
        %1073 = vmatprep.mubr.f32.mxu0 0.0
        %1074 = vmatmul.mubr.f32.gmra.mrb[0].mxu0 %v936
        %v1075 = vpop.f32.mrb[0].mxu0
        %v1076 = vpop.f32.mrb[0].mxu0
        %1077 = vdwg.mxu0
        %v1078 = vadd.f32 %v864, %v1008
        %v1079 = vadd.f32 %v865, %v1017
        %v1080 = vadd.f32 %v866, %v1026
        %v1081 = vadd.f32 %v867, %v1035
        %v1082 = vadd.f32 %v868, %v1044
        %v1083 = vadd.f32 %v869, %v1053
        %v1084 = vadd.f32 %v870, %v1062
        %v1085 = vadd.f32 %v871, %v1071
        %v1086 = vld [vmem:[#allocation2 + $0x4] sm:$0xff]
        %v1087 = vld [vmem:[#allocation2 + $0xc] sm:$0xff]
        %v1088 = vld [vmem:[#allocation2 + $0x14] sm:$0xff]
        %v1089 = vld [vmem:[#allocation2 + $0x1c] sm:$0xff]
        %v1090 = vld [vmem:[#allocation2 + $0x24] sm:$0xff]
        %v1091 = vld [vmem:[#allocation2 + $0x2c] sm:$0xff]
        %v1092 = vld [vmem:[#allocation2 + $0x34] sm:$0xff]
        %v1093 = vld [vmem:[#allocation2 + $0x3c] sm:$0xff]
        %v1094 = vld [vmem:[#allocation2 + $0x44] sm:$0xff]
        %v1095 = vld [vmem:[#allocation2 + $0x4c] sm:$0xff]
        %v1096 = vld [vmem:[#allocation2 + $0x54] sm:$0xff]
        %v1097 = vld [vmem:[#allocation2 + $0x5c] sm:$0xff]
        %v1098 = vld [vmem:[#allocation2 + $0x64] sm:$0xff]
        %v1099 = vld [vmem:[#allocation2 + $0x6c] sm:$0xff]
        %v1100 = vld [vmem:[#allocation2 + $0x74] sm:$0xff]
        %v1101 = vld [vmem:[#allocation2 + $0x7c] sm:$0xff]
        %s1102 = scalar_lea.vmem %s1, 16
        %v1103 = vld [vmem:[%s1102] sm:$0xf]
        %v1105 = vsel %vm196, %v1086, 0
        %v1108 = vsel %vm196, %v1087, 0
        %v1111 = vsel %vm196, %v1088, 0
        %v1114 = vsel %vm196, %v1089, 0
        %v1117 = vsel %vm196, %v1090, 0
        %v1120 = vsel %vm196, %v1091, 0
        %v1123 = vsel %vm196, %v1092, 0
        %v1126 = vsel %vm196, %v1093, 0
        %v1129 = vsel %vm196, %v1094, 0
        %v1132 = vsel %vm196, %v1095, 0
        %v1135 = vsel %vm196, %v1096, 0
        %v1138 = vsel %vm196, %v1097, 0
        %v1141 = vsel %vm196, %v1098, 0
        %v1144 = vsel %vm196, %v1099, 0
        %v1147 = vsel %vm196, %v1100, 0
        %v1150 = vsel %vm196, %v1101, 0
        %v1153 = vsel %vm329, %v1103, 0
        %1155 = vmatprep.subr.mxu0 0.0
        %1156 = vmatpush1.msra.mxu0 %v1153
        %1157 = vmatprep.subr.mxu0 0.0
        %1158 = vmatpush1.msra.mxu0 0.0
        %1159 = vmatprep.subr.mxu0 0.0
        %1160 = vmatpush1.msra.mxu0 0.0
        %1161 = vmatprep.subr.mxu0 0.0
        %1162 = vmatpush1.msra.mxu0 0.0
        %1163 = vmatprep.subr.mxu0 0.0
        %1164 = vmatpush1.msra.mxu0 0.0
        %1165 = vmatprep.subr.mxu0 0.0
        %1166 = vmatpush1.msra.mxu0 0.0
        %1167 = vmatprep.subr.mxu0 0.0
        %1168 = vmatpush1.msra.mxu0 0.0
        %1169 = vmatprep.subr.mxu0 0.0
        %1170 = vmatpush1.msra.mxu0 0.0
        %1171 = vmatprep.subr.mxu0 0.0
        %1172 = vmatpush1.msra.mxu0 0.0
        %1173 = vmatprep.subr.mxu0 0.0
        %1174 = vmatpush1.msra.mxu0 0.0
        %1175 = vmatprep.subr.mxu0 0.0
        %1176 = vmatpush1.msra.mxu0 0.0
        %1177 = vmatprep.subr.mxu0 0.0
        %1178 = vmatpush1.msra.mxu0 0.0
        %1179 = vmatprep.subr.mxu0 0.0
        %1180 = vmatpush1.msra.mxu0 0.0
        %1181 = vmatprep.subr.mxu0 0.0
        %1182 = vmatpush1.msra.mxu0 0.0
        %1183 = vmatprep.subr.mxu0 0.0
        %1184 = vmatpush1.msra.mxu0 0.0
        %1185 = vmatprep.subr.mxu0 0.0
        %1186 = vmatpush1.msra.mxu0 0.0
        %1187 = vmatprep.subr.mxu0 0.0
        %1188 = vmatpush1.msra.mxu0 0.0
        %1189 = vmatprep.subr.mxu0 0.0
        %1190 = vmatpush1.msra.mxu0 0.0
        %1191 = vmatprep.subr.mxu0 0.0
        %1192 = vmatpush1.msra.mxu0 0.0
        %1193 = vmatprep.subr.mxu0 0.0
        %1194 = vmatpush1.msra.mxu0 0.0
        %1195 = vmatprep.subr.mxu0 0.0
        %1196 = vmatpush1.msra.mxu0 0.0
        %1197 = vmatprep.subr.mxu0 0.0
        %1198 = vmatpush1.msra.mxu0 0.0
        %1199 = vmatprep.subr.mxu0 0.0
        %1200 = vmatpush1.msra.mxu0 0.0
        %1201 = vmatprep.subr.mxu0 0.0
        %1202 = vmatpush1.msra.mxu0 0.0
        %1203 = vmatprep.subr.mxu0 0.0
        %1204 = vmatpush1.msra.mxu0 0.0
        %1205 = vmatprep.subr.mxu0 0.0
        %1206 = vmatpush1.msra.mxu0 0.0
        %1207 = vmatprep.subr.mxu0 0.0
        %1208 = vmatpush1.msra.mxu0 0.0
        %1209 = vmatprep.subr.mxu0 0.0
        %1210 = vmatpush1.msra.mxu0 0.0
        %1211 = vmatprep.subr.mxu0 0.0
        %1212 = vmatpush1.msra.mxu0 0.0
        %1213 = vmatprep.subr.mxu0 0.0
        %1214 = vmatpush1.msra.mxu0 0.0
        %1215 = vmatprep.subr.mxu0 0.0
        %1216 = vmatpush1.msra.mxu0 0.0
        %1217 = vmatprep.subr.mxu0 0.0
        %1218 = vmatpush1.msra.mxu0 0.0
        %1219 = vmatprep.mubr.f32.mxu0 0.0
        %1220 = vmatmul.mubr.f32.gmra.mrb[0].mxu0 %v1105
        %v1221 = vpop.f32.mrb[0].mxu0
        %v1222 = vadd.f32 0.0, %v1221
        %v1223 = vpop.f32.mrb[0].mxu0
        %1224 = vmatprep.mubr.f32.mxu0 0.0
        %1225 = vmatmul.mubr.f32.gmra.mrb[0].mxu0 %v1108
        %v1226 = vpop.f32.mrb[0].mxu0
        %v1227 = vpop.f32.mrb[0].mxu0
        %1228 = vmatprep.mubr.f32.mxu0 0.0
        %1229 = vmatmul.mubr.f32.gmra.mrb[0].mxu0 %v1111
        %v1230 = vpop.f32.mrb[0].mxu0
        %v1231 = vadd.f32 0.0, %v1230
        %v1232 = vpop.f32.mrb[0].mxu0
        %1233 = vmatprep.mubr.f32.mxu0 0.0
        %1234 = vmatmul.mubr.f32.gmra.mrb[0].mxu0 %v1114
        %v1235 = vpop.f32.mrb[0].mxu0
        %v1236 = vpop.f32.mrb[0].mxu0
        %1237 = vmatprep.mubr.f32.mxu0 0.0
        %1238 = vmatmul.mubr.f32.gmra.mrb[0].mxu0 %v1117
        %v1239 = vpop.f32.mrb[0].mxu0
        %v1240 = vadd.f32 0.0, %v1239
        %v1241 = vpop.f32.mrb[0].mxu0
        %1242 = vmatprep.mubr.f32.mxu0 0.0
        %1243 = vmatmul.mubr.f32.gmra.mrb[0].mxu0 %v1120
        %v1244 = vpop.f32.mrb[0].mxu0
        %v1245 = vpop.f32.mrb[0].mxu0
        %1246 = vmatprep.mubr.f32.mxu0 0.0
        %1247 = vmatmul.mubr.f32.gmra.mrb[0].mxu0 %v1123
        %v1248 = vpop.f32.mrb[0].mxu0
        %v1249 = vadd.f32 0.0, %v1248
        %v1250 = vpop.f32.mrb[0].mxu0
        %1251 = vmatprep.mubr.f32.mxu0 0.0
        %1252 = vmatmul.mubr.f32.gmra.mrb[0].mxu0 %v1126
        %v1253 = vpop.f32.mrb[0].mxu0
        %v1254 = vpop.f32.mrb[0].mxu0
        %1255 = vmatprep.mubr.f32.mxu0 0.0
        %1256 = vmatmul.mubr.f32.gmra.mrb[0].mxu0 %v1129
        %v1257 = vpop.f32.mrb[0].mxu0
        %v1258 = vadd.f32 0.0, %v1257
        %v1259 = vpop.f32.mrb[0].mxu0
        %1260 = vmatprep.mubr.f32.mxu0 0.0
        %1261 = vmatmul.mubr.f32.gmra.mrb[0].mxu0 %v1132
        %v1262 = vpop.f32.mrb[0].mxu0
        %v1263 = vpop.f32.mrb[0].mxu0
        %1264 = vmatprep.mubr.f32.mxu0 0.0
        %1265 = vmatmul.mubr.f32.gmra.mrb[0].mxu0 %v1135
        %v1266 = vpop.f32.mrb[0].mxu0
        %v1267 = vadd.f32 0.0, %v1266
        %v1268 = vpop.f32.mrb[0].mxu0
        %1269 = vmatprep.mubr.f32.mxu0 0.0
        %1270 = vmatmul.mubr.f32.gmra.mrb[0].mxu0 %v1138
        %v1271 = vpop.f32.mrb[0].mxu0
        %v1272 = vpop.f32.mrb[0].mxu0
        %1273 = vmatprep.mubr.f32.mxu0 0.0
        %1274 = vmatmul.mubr.f32.gmra.mrb[0].mxu0 %v1141
        %v1275 = vpop.f32.mrb[0].mxu0
        %v1276 = vadd.f32 0.0, %v1275
        %v1277 = vpop.f32.mrb[0].mxu0
        %1278 = vmatprep.mubr.f32.mxu0 0.0
        %1279 = vmatmul.mubr.f32.gmra.mrb[0].mxu0 %v1144
        %v1280 = vpop.f32.mrb[0].mxu0
        %v1281 = vpop.f32.mrb[0].mxu0
        %1282 = vmatprep.mubr.f32.mxu0 0.0
        %1283 = vmatmul.mubr.f32.gmra.mrb[0].mxu0 %v1147
        %v1284 = vpop.f32.mrb[0].mxu0
        %v1285 = vadd.f32 0.0, %v1284
        %v1286 = vpop.f32.mrb[0].mxu0
        %1287 = vmatprep.mubr.f32.mxu0 0.0
        %1288 = vmatmul.mubr.f32.gmra.mrb[0].mxu0 %v1150
        %v1289 = vpop.f32.mrb[0].mxu0
        %v1290 = vpop.f32.mrb[0].mxu0
        %1291 = vdwg.mxu0
        %v1292 = vadd.f32 %v1078, %v1222
        %v1293 = vadd.f32 %v1079, %v1231
        %v1294 = vadd.f32 %v1080, %v1240
        %v1295 = vadd.f32 %v1081, %v1249
        %v1296 = vadd.f32 %v1082, %v1258
        %v1297 = vadd.f32 %v1083, %v1267
        %v1298 = vadd.f32 %v1084, %v1276
        %v1299 = vadd.f32 %v1085, %v1285
        %v1300 = vld [vmem:[#allocation2 + $0x10] sm:$0xff]
        %v1301 = vld [vmem:[#allocation2 + $0x18] sm:$0xff]
        %v1302 = vld [vmem:[#allocation2 + $0x20] sm:$0xff]
        %v1303 = vld [vmem:[#allocation2 + $0x28] sm:$0xff]
        %v1304 = vld [vmem:[#allocation2 + $0x30] sm:$0xff]
        %v1305 = vld [vmem:[#allocation2 + $0x38] sm:$0xff]
        %v1306 = vld [vmem:[#allocation2 + $0x40] sm:$0xff]
        %v1307 = vld [vmem:[#allocation2 + $0x48] sm:$0xff]
        %v1308 = vld [vmem:[#allocation2 + $0x50] sm:$0xff]
        %v1309 = vld [vmem:[#allocation2 + $0x58] sm:$0xff]
        %v1310 = vld [vmem:[#allocation2 + $0x60] sm:$0xff]
        %v1311 = vld [vmem:[#allocation2 + $0x68] sm:$0xff]
        %v1312 = vld [vmem:[#allocation2 + $0x70] sm:$0xff]
        %v1313 = vld [vmem:[#allocation2 + $0x78] sm:$0xff]
        %v1314 = vld [vmem:[#allocation2 + $0x80] sm:$0xff]
        %v1315 = vld [vmem:[#allocation2 + $0x88] sm:$0xff]
        %s1316 = scalar_lea.vmem %s1, 20
        %v1317 = vld [vmem:[%s1316] sm:$0xf]
        %v1319 = vsel %vm196, %v1300, 0
        %v1322 = vsel %vm196, %v1301, 0
        %v1325 = vsel %vm196, %v1302, 0
        %v1328 = vsel %vm196, %v1303, 0
        %v1331 = vsel %vm196, %v1304, 0
        %v1334 = vsel %vm196, %v1305, 0
        %v1337 = vsel %vm196, %v1306, 0
        %v1340 = vsel %vm196, %v1307, 0
        %v1343 = vsel %vm196, %v1308, 0
        %v1346 = vsel %vm196, %v1309, 0
        %v1349 = vsel %vm196, %v1310, 0
        %v1352 = vsel %vm196, %v1311, 0
        %v1355 = vsel %vm196, %v1312, 0
        %v1358 = vsel %vm196, %v1313, 0
        %v1361 = vsel %vm196, %v1314, 0
        %v1364 = vsel %vm196, %v1315, 0
        %v1367 = vsel %vm329, %v1317, 0
        %1369 = vmatprep.subr.mxu0 0.0
        %1370 = vmatpush1.msra.mxu0 %v1367
        %1371 = vmatprep.subr.mxu0 0.0
        %1372 = vmatpush1.msra.mxu0 0.0
        %1373 = vmatprep.subr.mxu0 0.0
        %1374 = vmatpush1.msra.mxu0 0.0
        %1375 = vmatprep.subr.mxu0 0.0
        %1376 = vmatpush1.msra.mxu0 0.0
        %1377 = vmatprep.subr.mxu0 0.0
        %1378 = vmatpush1.msra.mxu0 0.0
        %1379 = vmatprep.subr.mxu0 0.0
        %1380 = vmatpush1.msra.mxu0 0.0
        %1381 = vmatprep.subr.mxu0 0.0
        %1382 = vmatpush1.msra.mxu0 0.0
        %1383 = vmatprep.subr.mxu0 0.0
        %1384 = vmatpush1.msra.mxu0 0.0
        %1385 = vmatprep.subr.mxu0 0.0
        %1386 = vmatpush1.msra.mxu0 0.0
        %1387 = vmatprep.subr.mxu0 0.0
        %1388 = vmatpush1.msra.mxu0 0.0
        %1389 = vmatprep.subr.mxu0 0.0
        %1390 = vmatpush1.msra.mxu0 0.0
        %1391 = vmatprep.subr.mxu0 0.0
        %1392 = vmatpush1.msra.mxu0 0.0
        %1393 = vmatprep.subr.mxu0 0.0
        %1394 = vmatpush1.msra.mxu0 0.0
        %1395 = vmatprep.subr.mxu0 0.0
        %1396 = vmatpush1.msra.mxu0 0.0
        %1397 = vmatprep.subr.mxu0 0.0
        %1398 = vmatpush1.msra.mxu0 0.0
        %1399 = vmatprep.subr.mxu0 0.0
        %1400 = vmatpush1.msra.mxu0 0.0
        %1401 = vmatprep.subr.mxu0 0.0
        %1402 = vmatpush1.msra.mxu0 0.0
        %1403 = vmatprep.subr.mxu0 0.0
        %1404 = vmatpush1.msra.mxu0 0.0
        %1405 = vmatprep.subr.mxu0 0.0
        %1406 = vmatpush1.msra.mxu0 0.0
        %1407 = vmatprep.subr.mxu0 0.0
        %1408 = vmatpush1.msra.mxu0 0.0
        %1409 = vmatprep.subr.mxu0 0.0
        %1410 = vmatpush1.msra.mxu0 0.0
        %1411 = vmatprep.subr.mxu0 0.0
        %1412 = vmatpush1.msra.mxu0 0.0
        %1413 = vmatprep.subr.mxu0 0.0
        %1414 = vmatpush1.msra.mxu0 0.0
        %1415 = vmatprep.subr.mxu0 0.0
        %1416 = vmatpush1.msra.mxu0 0.0
        %1417 = vmatprep.subr.mxu0 0.0
        %1418 = vmatpush1.msra.mxu0 0.0
        %1419 = vmatprep.subr.mxu0 0.0
        %1420 = vmatpush1.msra.mxu0 0.0
        %1421 = vmatprep.subr.mxu0 0.0
        %1422 = vmatpush1.msra.mxu0 0.0
        %1423 = vmatprep.subr.mxu0 0.0
        %1424 = vmatpush1.msra.mxu0 0.0
        %1425 = vmatprep.subr.mxu0 0.0
        %1426 = vmatpush1.msra.mxu0 0.0
        %1427 = vmatprep.subr.mxu0 0.0
        %1428 = vmatpush1.msra.mxu0 0.0
        %1429 = vmatprep.subr.mxu0 0.0
        %1430 = vmatpush1.msra.mxu0 0.0
        %1431 = vmatprep.subr.mxu0 0.0
        %1432 = vmatpush1.msra.mxu0 0.0
        %1433 = vmatprep.mubr.f32.mxu0 0.0
        %1434 = vmatmul.mubr.f32.gmra.mrb[0].mxu0 %v1319
        %v1435 = vpop.f32.mrb[0].mxu0
        %v1436 = vadd.f32 0.0, %v1435
        %v1437 = vpop.f32.mrb[0].mxu0
        %1438 = vmatprep.mubr.f32.mxu0 0.0
        %1439 = vmatmul.mubr.f32.gmra.mrb[0].mxu0 %v1322
        %v1440 = vpop.f32.mrb[0].mxu0
        %v1441 = vpop.f32.mrb[0].mxu0
        %1442 = vmatprep.mubr.f32.mxu0 0.0
        %1443 = vmatmul.mubr.f32.gmra.mrb[0].mxu0 %v1325
        %v1444 = vpop.f32.mrb[0].mxu0
        %v1445 = vadd.f32 0.0, %v1444
        %v1446 = vpop.f32.mrb[0].mxu0
        %1447 = vmatprep.mubr.f32.mxu0 0.0
        %1448 = vmatmul.mubr.f32.gmra.mrb[0].mxu0 %v1328
        %v1449 = vpop.f32.mrb[0].mxu0
        %v1450 = vpop.f32.mrb[0].mxu0
        %1451 = vmatprep.mubr.f32.mxu0 0.0
        %1452 = vmatmul.mubr.f32.gmra.mrb[0].mxu0 %v1331
        %v1453 = vpop.f32.mrb[0].mxu0
        %v1454 = vadd.f32 0.0, %v1453
        %v1455 = vpop.f32.mrb[0].mxu0
        %1456 = vmatprep.mubr.f32.mxu0 0.0
        %1457 = vmatmul.mubr.f32.gmra.mrb[0].mxu0 %v1334
        %v1458 = vpop.f32.mrb[0].mxu0
        %v1459 = vpop.f32.mrb[0].mxu0
        %1460 = vmatprep.mubr.f32.mxu0 0.0
        %1461 = vmatmul.mubr.f32.gmra.mrb[0].mxu0 %v1337
        %v1462 = vpop.f32.mrb[0].mxu0
        %v1463 = vadd.f32 0.0, %v1462
        %v1464 = vpop.f32.mrb[0].mxu0
        %1465 = vmatprep.mubr.f32.mxu0 0.0
        %1466 = vmatmul.mubr.f32.gmra.mrb[0].mxu0 %v1340
        %v1467 = vpop.f32.mrb[0].mxu0
        %v1468 = vpop.f32.mrb[0].mxu0
        %1469 = vmatprep.mubr.f32.mxu0 0.0
        %1470 = vmatmul.mubr.f32.gmra.mrb[0].mxu0 %v1343
        %v1471 = vpop.f32.mrb[0].mxu0
        %v1472 = vadd.f32 0.0, %v1471
        %v1473 = vpop.f32.mrb[0].mxu0
        %1474 = vmatprep.mubr.f32.mxu0 0.0
        %1475 = vmatmul.mubr.f32.gmra.mrb[0].mxu0 %v1346
        %v1476 = vpop.f32.mrb[0].mxu0
        %v1477 = vpop.f32.mrb[0].mxu0
        %1478 = vmatprep.mubr.f32.mxu0 0.0
        %1479 = vmatmul.mubr.f32.gmra.mrb[0].mxu0 %v1349
        %v1480 = vpop.f32.mrb[0].mxu0
        %v1481 = vadd.f32 0.0, %v1480
        %v1482 = vpop.f32.mrb[0].mxu0
        %1483 = vmatprep.mubr.f32.mxu0 0.0
        %1484 = vmatmul.mubr.f32.gmra.mrb[0].mxu0 %v1352
        %v1485 = vpop.f32.mrb[0].mxu0
        %v1486 = vpop.f32.mrb[0].mxu0
        %1487 = vmatprep.mubr.f32.mxu0 0.0
        %1488 = vmatmul.mubr.f32.gmra.mrb[0].mxu0 %v1355
        %v1489 = vpop.f32.mrb[0].mxu0
        %v1490 = vadd.f32 0.0, %v1489
        %v1491 = vpop.f32.mrb[0].mxu0
        %1492 = vmatprep.mubr.f32.mxu0 0.0
        %1493 = vmatmul.mubr.f32.gmra.mrb[0].mxu0 %v1358
        %v1494 = vpop.f32.mrb[0].mxu0
        %v1495 = vpop.f32.mrb[0].mxu0
        %1496 = vmatprep.mubr.f32.mxu0 0.0
        %1497 = vmatmul.mubr.f32.gmra.mrb[0].mxu0 %v1361
        %v1498 = vpop.f32.mrb[0].mxu0
        %v1499 = vadd.f32 0.0, %v1498
        %v1500 = vpop.f32.mrb[0].mxu0
        %1501 = vmatprep.mubr.f32.mxu0 0.0
        %1502 = vmatmul.mubr.f32.gmra.mrb[0].mxu0 %v1364
        %v1503 = vpop.f32.mrb[0].mxu0
        %v1504 = vpop.f32.mrb[0].mxu0
        %1505 = vdwg.mxu0
        %v1506 = vadd.f32 %v1292, %v1436
        %v1507 = vadd.f32 %v1293, %v1445
        %v1508 = vadd.f32 %v1294, %v1454
        %v1509 = vadd.f32 %v1295, %v1463
        %v1510 = vadd.f32 %v1296, %v1472
        %v1511 = vadd.f32 %v1297, %v1481
        %v1512 = vadd.f32 %v1298, %v1490
        %v1513 = vadd.f32 %v1299, %v1499
        %v1514 = vld [vmem:[#allocation2 + $0x11] sm:$0xff]
        %v1515 = vld [vmem:[#allocation2 + $0x19] sm:$0xff]
        %v1516 = vld [vmem:[#allocation2 + $0x21] sm:$0xff]
        %v1517 = vld [vmem:[#allocation2 + $0x29] sm:$0xff]
        %v1518 = vld [vmem:[#allocation2 + $0x31] sm:$0xff]
        %v1519 = vld [vmem:[#allocation2 + $0x39] sm:$0xff]
        %v1520 = vld [vmem:[#allocation2 + $0x41] sm:$0xff]
        %v1521 = vld [vmem:[#allocation2 + $0x49] sm:$0xff]
        %v1522 = vld [vmem:[#allocation2 + $0x51] sm:$0xff]
        %v1523 = vld [vmem:[#allocation2 + $0x59] sm:$0xff]
        %v1524 = vld [vmem:[#allocation2 + $0x61] sm:$0xff]
        %v1525 = vld [vmem:[#allocation2 + $0x69] sm:$0xff]
        %v1526 = vld [vmem:[#allocation2 + $0x71] sm:$0xff]
        %v1527 = vld [vmem:[#allocation2 + $0x79] sm:$0xff]
        %v1528 = vld [vmem:[#allocation2 + $0x81] sm:$0xff]
        %v1529 = vld [vmem:[#allocation2 + $0x89] sm:$0xff]
        %s1530 = scalar_lea.vmem %s1, 24
        %v1531 = vld [vmem:[%s1530] sm:$0xf]
        %v1533 = vsel %vm196, %v1514, 0
        %v1536 = vsel %vm196, %v1515, 0
        %v1539 = vsel %vm196, %v1516, 0
        %v1542 = vsel %vm196, %v1517, 0
        %v1545 = vsel %vm196, %v1518, 0
        %v1548 = vsel %vm196, %v1519, 0
        %v1551 = vsel %vm196, %v1520, 0
        %v1554 = vsel %vm196, %v1521, 0
        %v1557 = vsel %vm196, %v1522, 0
        %v1560 = vsel %vm196, %v1523, 0
        %v1563 = vsel %vm196, %v1524, 0
        %v1566 = vsel %vm196, %v1525, 0
        %v1569 = vsel %vm196, %v1526, 0
        %v1572 = vsel %vm196, %v1527, 0
        %v1575 = vsel %vm196, %v1528, 0
        %v1578 = vsel %vm196, %v1529, 0
        %v1581 = vsel %vm329, %v1531, 0
        %1583 = vmatprep.subr.mxu0 0.0
        %1584 = vmatpush1.msra.mxu0 %v1581
        %1585 = vmatprep.subr.mxu0 0.0
        %1586 = vmatpush1.msra.mxu0 0.0
        %1587 = vmatprep.subr.mxu0 0.0
        %1588 = vmatpush1.msra.mxu0 0.0
        %1589 = vmatprep.subr.mxu0 0.0
        %1590 = vmatpush1.msra.mxu0 0.0
        %1591 = vmatprep.subr.mxu0 0.0
        %1592 = vmatpush1.msra.mxu0 0.0
        %1593 = vmatprep.subr.mxu0 0.0
        %1594 = vmatpush1.msra.mxu0 0.0
        %1595 = vmatprep.subr.mxu0 0.0
        %1596 = vmatpush1.msra.mxu0 0.0
        %1597 = vmatprep.subr.mxu0 0.0
        %1598 = vmatpush1.msra.mxu0 0.0
        %1599 = vmatprep.subr.mxu0 0.0
        %1600 = vmatpush1.msra.mxu0 0.0
        %1601 = vmatprep.subr.mxu0 0.0
        %1602 = vmatpush1.msra.mxu0 0.0
        %1603 = vmatprep.subr.mxu0 0.0
        %1604 = vmatpush1.msra.mxu0 0.0
        %1605 = vmatprep.subr.mxu0 0.0
        %1606 = vmatpush1.msra.mxu0 0.0
        %1607 = vmatprep.subr.mxu0 0.0
        %1608 = vmatpush1.msra.mxu0 0.0
        %1609 = vmatprep.subr.mxu0 0.0
        %1610 = vmatpush1.msra.mxu0 0.0
        %1611 = vmatprep.subr.mxu0 0.0
        %1612 = vmatpush1.msra.mxu0 0.0
        %1613 = vmatprep.subr.mxu0 0.0
        %1614 = vmatpush1.msra.mxu0 0.0
        %1615 = vmatprep.subr.mxu0 0.0
        %1616 = vmatpush1.msra.mxu0 0.0
        %1617 = vmatprep.subr.mxu0 0.0
        %1618 = vmatpush1.msra.mxu0 0.0
        %1619 = vmatprep.subr.mxu0 0.0
        %1620 = vmatpush1.msra.mxu0 0.0
        %1621 = vmatprep.subr.mxu0 0.0
        %1622 = vmatpush1.msra.mxu0 0.0
        %1623 = vmatprep.subr.mxu0 0.0
        %1624 = vmatpush1.msra.mxu0 0.0
        %1625 = vmatprep.subr.mxu0 0.0
        %1626 = vmatpush1.msra.mxu0 0.0
        %1627 = vmatprep.subr.mxu0 0.0
        %1628 = vmatpush1.msra.mxu0 0.0
        %1629 = vmatprep.subr.mxu0 0.0
        %1630 = vmatpush1.msra.mxu0 0.0
        %1631 = vmatprep.subr.mxu0 0.0
        %1632 = vmatpush1.msra.mxu0 0.0
        %1633 = vmatprep.subr.mxu0 0.0
        %1634 = vmatpush1.msra.mxu0 0.0
        %1635 = vmatprep.subr.mxu0 0.0
        %1636 = vmatpush1.msra.mxu0 0.0
        %1637 = vmatprep.subr.mxu0 0.0
        %1638 = vmatpush1.msra.mxu0 0.0
        %1639 = vmatprep.subr.mxu0 0.0
        %1640 = vmatpush1.msra.mxu0 0.0
        %1641 = vmatprep.subr.mxu0 0.0
        %1642 = vmatpush1.msra.mxu0 0.0
        %1643 = vmatprep.subr.mxu0 0.0
        %1644 = vmatpush1.msra.mxu0 0.0
        %1645 = vmatprep.subr.mxu0 0.0
        %1646 = vmatpush1.msra.mxu0 0.0
        %1647 = vmatprep.mubr.f32.mxu0 0.0
        %1648 = vmatmul.mubr.f32.gmra.mrb[0].mxu0 %v1533
        %v1649 = vpop.f32.mrb[0].mxu0
        %v1650 = vadd.f32 0.0, %v1649
        %v1651 = vpop.f32.mrb[0].mxu0
        %1652 = vmatprep.mubr.f32.mxu0 0.0
        %1653 = vmatmul.mubr.f32.gmra.mrb[0].mxu0 %v1536
        %v1654 = vpop.f32.mrb[0].mxu0
        %v1655 = vpop.f32.mrb[0].mxu0
        %1656 = vmatprep.mubr.f32.mxu0 0.0
        %1657 = vmatmul.mubr.f32.gmra.mrb[0].mxu0 %v1539
        %v1658 = vpop.f32.mrb[0].mxu0
        %v1659 = vadd.f32 0.0, %v1658
        %v1660 = vpop.f32.mrb[0].mxu0
        %1661 = vmatprep.mubr.f32.mxu0 0.0
        %1662 = vmatmul.mubr.f32.gmra.mrb[0].mxu0 %v1542
        %v1663 = vpop.f32.mrb[0].mxu0
        %v1664 = vpop.f32.mrb[0].mxu0
        %1665 = vmatprep.mubr.f32.mxu0 0.0
        %1666 = vmatmul.mubr.f32.gmra.mrb[0].mxu0 %v1545
        %v1667 = vpop.f32.mrb[0].mxu0
        %v1668 = vadd.f32 0.0, %v1667
        %v1669 = vpop.f32.mrb[0].mxu0
        %1670 = vmatprep.mubr.f32.mxu0 0.0
        %1671 = vmatmul.mubr.f32.gmra.mrb[0].mxu0 %v1548
        %v1672 = vpop.f32.mrb[0].mxu0
        %v1673 = vpop.f32.mrb[0].mxu0
        %1674 = vmatprep.mubr.f32.mxu0 0.0
        %1675 = vmatmul.mubr.f32.gmra.mrb[0].mxu0 %v1551
        %v1676 = vpop.f32.mrb[0].mxu0
        %v1677 = vadd.f32 0.0, %v1676
        %v1678 = vpop.f32.mrb[0].mxu0
        %1679 = vmatprep.mubr.f32.mxu0 0.0
        %1680 = vmatmul.mubr.f32.gmra.mrb[0].mxu0 %v1554
        %v1681 = vpop.f32.mrb[0].mxu0
        %v1682 = vpop.f32.mrb[0].mxu0
        %1683 = vmatprep.mubr.f32.mxu0 0.0
        %1684 = vmatmul.mubr.f32.gmra.mrb[0].mxu0 %v1557
        %v1685 = vpop.f32.mrb[0].mxu0
        %v1686 = vadd.f32 0.0, %v1685
        %v1687 = vpop.f32.mrb[0].mxu0
        %1688 = vmatprep.mubr.f32.mxu0 0.0
        %1689 = vmatmul.mubr.f32.gmra.mrb[0].mxu0 %v1560
        %v1690 = vpop.f32.mrb[0].mxu0
        %v1691 = vpop.f32.mrb[0].mxu0
        %1692 = vmatprep.mubr.f32.mxu0 0.0
        %1693 = vmatmul.mubr.f32.gmra.mrb[0].mxu0 %v1563
        %v1694 = vpop.f32.mrb[0].mxu0
        %v1695 = vadd.f32 0.0, %v1694
        %v1696 = vpop.f32.mrb[0].mxu0
        %1697 = vmatprep.mubr.f32.mxu0 0.0
        %1698 = vmatmul.mubr.f32.gmra.mrb[0].mxu0 %v1566
        %v1699 = vpop.f32.mrb[0].mxu0
        %v1700 = vpop.f32.mrb[0].mxu0
        %1701 = vmatprep.mubr.f32.mxu0 0.0
        %1702 = vmatmul.mubr.f32.gmra.mrb[0].mxu0 %v1569
        %v1703 = vpop.f32.mrb[0].mxu0
        %v1704 = vadd.f32 0.0, %v1703
        %v1705 = vpop.f32.mrb[0].mxu0
        %1706 = vmatprep.mubr.f32.mxu0 0.0
        %1707 = vmatmul.mubr.f32.gmra.mrb[0].mxu0 %v1572
        %v1708 = vpop.f32.mrb[0].mxu0
        %v1709 = vpop.f32.mrb[0].mxu0
        %1710 = vmatprep.mubr.f32.mxu0 0.0
        %1711 = vmatmul.mubr.f32.gmra.mrb[0].mxu0 %v1575
        %v1712 = vpop.f32.mrb[0].mxu0
        %v1713 = vadd.f32 0.0, %v1712
        %v1714 = vpop.f32.mrb[0].mxu0
        %1715 = vmatprep.mubr.f32.mxu0 0.0
        %1716 = vmatmul.mubr.f32.gmra.mrb[0].mxu0 %v1578
        %v1717 = vpop.f32.mrb[0].mxu0
        %v1718 = vpop.f32.mrb[0].mxu0
        %1719 = vdwg.mxu0
        %v1720 = vadd.f32 %v1506, %v1650
        %v1721 = vadd.f32 %v1507, %v1659
        %v1722 = vadd.f32 %v1508, %v1668
        %v1723 = vadd.f32 %v1509, %v1677
        %v1724 = vadd.f32 %v1510, %v1686
        %v1725 = vadd.f32 %v1511, %v1695
        %v1726 = vadd.f32 %v1512, %v1704
        %v1727 = vadd.f32 %v1513, %v1713
        %v1728 = vld [vmem:[#allocation2 + $0x12] sm:$0xff]
        %v1729 = vld [vmem:[#allocation2 + $0x1a] sm:$0xff]
        %v1730 = vld [vmem:[#allocation2 + $0x22] sm:$0xff]
        %v1731 = vld [vmem:[#allocation2 + $0x2a] sm:$0xff]
        %v1732 = vld [vmem:[#allocation2 + $0x32] sm:$0xff]
        %v1733 = vld [vmem:[#allocation2 + $0x3a] sm:$0xff]
        %v1734 = vld [vmem:[#allocation2 + $0x42] sm:$0xff]
        %v1735 = vld [vmem:[#allocation2 + $0x4a] sm:$0xff]
        %v1736 = vld [vmem:[#allocation2 + $0x52] sm:$0xff]
        %v1737 = vld [vmem:[#allocation2 + $0x5a] sm:$0xff]
        %v1738 = vld [vmem:[#allocation2 + $0x62] sm:$0xff]
        %v1739 = vld [vmem:[#allocation2 + $0x6a] sm:$0xff]
        %v1740 = vld [vmem:[#allocation2 + $0x72] sm:$0xff]
        %v1741 = vld [vmem:[#allocation2 + $0x7a] sm:$0xff]
        %v1742 = vld [vmem:[#allocation2 + $0x82] sm:$0xff]
        %v1743 = vld [vmem:[#allocation2 + $0x8a] sm:$0xff]
        %s1744 = scalar_lea.vmem %s1, 28
        %v1745 = vld [vmem:[%s1744] sm:$0xf]
        %v1747 = vsel %vm196, %v1728, 0
        %v1750 = vsel %vm196, %v1729, 0
        %v1753 = vsel %vm196, %v1730, 0
        %v1756 = vsel %vm196, %v1731, 0
        %v1759 = vsel %vm196, %v1732, 0
        %v1762 = vsel %vm196, %v1733, 0
        %v1765 = vsel %vm196, %v1734, 0
        %v1768 = vsel %vm196, %v1735, 0
        %v1771 = vsel %vm196, %v1736, 0
        %v1774 = vsel %vm196, %v1737, 0
        %v1777 = vsel %vm196, %v1738, 0
        %v1780 = vsel %vm196, %v1739, 0
        %v1783 = vsel %vm196, %v1740, 0
        %v1786 = vsel %vm196, %v1741, 0
        %v1789 = vsel %vm196, %v1742, 0
        %v1792 = vsel %vm196, %v1743, 0
        %v1795 = vsel %vm329, %v1745, 0
        %1797 = vmatprep.subr.mxu0 0.0
        %1798 = vmatpush1.msra.mxu0 %v1795
        %1799 = vmatprep.subr.mxu0 0.0
        %1800 = vmatpush1.msra.mxu0 0.0
        %1801 = vmatprep.subr.mxu0 0.0
        %1802 = vmatpush1.msra.mxu0 0.0
        %1803 = vmatprep.subr.mxu0 0.0
        %1804 = vmatpush1.msra.mxu0 0.0
        %1805 = vmatprep.subr.mxu0 0.0
        %1806 = vmatpush1.msra.mxu0 0.0
        %1807 = vmatprep.subr.mxu0 0.0
        %1808 = vmatpush1.msra.mxu0 0.0
        %1809 = vmatprep.subr.mxu0 0.0
        %1810 = vmatpush1.msra.mxu0 0.0
        %1811 = vmatprep.subr.mxu0 0.0
        %1812 = vmatpush1.msra.mxu0 0.0
        %1813 = vmatprep.subr.mxu0 0.0
        %1814 = vmatpush1.msra.mxu0 0.0
        %1815 = vmatprep.subr.mxu0 0.0
        %1816 = vmatpush1.msra.mxu0 0.0
        %1817 = vmatprep.subr.mxu0 0.0
        %1818 = vmatpush1.msra.mxu0 0.0
        %1819 = vmatprep.subr.mxu0 0.0
        %1820 = vmatpush1.msra.mxu0 0.0
        %1821 = vmatprep.subr.mxu0 0.0
        %1822 = vmatpush1.msra.mxu0 0.0
        %1823 = vmatprep.subr.mxu0 0.0
        %1824 = vmatpush1.msra.mxu0 0.0
        %1825 = vmatprep.subr.mxu0 0.0
        %1826 = vmatpush1.msra.mxu0 0.0
        %1827 = vmatprep.subr.mxu0 0.0
        %1828 = vmatpush1.msra.mxu0 0.0
        %1829 = vmatprep.subr.mxu0 0.0
        %1830 = vmatpush1.msra.mxu0 0.0
        %1831 = vmatprep.subr.mxu0 0.0
        %1832 = vmatpush1.msra.mxu0 0.0
        %1833 = vmatprep.subr.mxu0 0.0
        %1834 = vmatpush1.msra.mxu0 0.0
        %1835 = vmatprep.subr.mxu0 0.0
        %1836 = vmatpush1.msra.mxu0 0.0
        %1837 = vmatprep.subr.mxu0 0.0
        %1838 = vmatpush1.msra.mxu0 0.0
        %1839 = vmatprep.subr.mxu0 0.0
        %1840 = vmatpush1.msra.mxu0 0.0
        %1841 = vmatprep.subr.mxu0 0.0
        %1842 = vmatpush1.msra.mxu0 0.0
        %1843 = vmatprep.subr.mxu0 0.0
        %1844 = vmatpush1.msra.mxu0 0.0
        %1845 = vmatprep.subr.mxu0 0.0
        %1846 = vmatpush1.msra.mxu0 0.0
        %1847 = vmatprep.subr.mxu0 0.0
        %1848 = vmatpush1.msra.mxu0 0.0
        %1849 = vmatprep.subr.mxu0 0.0
        %1850 = vmatpush1.msra.mxu0 0.0
        %1851 = vmatprep.subr.mxu0 0.0
        %1852 = vmatpush1.msra.mxu0 0.0
        %1853 = vmatprep.subr.mxu0 0.0
        %1854 = vmatpush1.msra.mxu0 0.0
        %1855 = vmatprep.subr.mxu0 0.0
        %1856 = vmatpush1.msra.mxu0 0.0
        %1857 = vmatprep.subr.mxu0 0.0
        %1858 = vmatpush1.msra.mxu0 0.0
        %1859 = vmatprep.subr.mxu0 0.0
        %1860 = vmatpush1.msra.mxu0 0.0
        %1861 = vmatprep.mubr.f32.mxu0 0.0
        %1862 = vmatmul.mubr.f32.gmra.mrb[0].mxu0 %v1747
        %v1863 = vpop.f32.mrb[0].mxu0
        %v1864 = vadd.f32 0.0, %v1863
        %v1865 = vpop.f32.mrb[0].mxu0
        %1866 = vmatprep.mubr.f32.mxu0 0.0
        %1867 = vmatmul.mubr.f32.gmra.mrb[0].mxu0 %v1750
        %v1868 = vpop.f32.mrb[0].mxu0
        %v1869 = vpop.f32.mrb[0].mxu0
        %1870 = vmatprep.mubr.f32.mxu0 0.0
        %1871 = vmatmul.mubr.f32.gmra.mrb[0].mxu0 %v1753
        %v1872 = vpop.f32.mrb[0].mxu0
        %v1873 = vadd.f32 0.0, %v1872
        %v1874 = vpop.f32.mrb[0].mxu0
        %1875 = vmatprep.mubr.f32.mxu0 0.0
        %1876 = vmatmul.mubr.f32.gmra.mrb[0].mxu0 %v1756
        %v1877 = vpop.f32.mrb[0].mxu0
        %v1878 = vpop.f32.mrb[0].mxu0
        %1879 = vmatprep.mubr.f32.mxu0 0.0
        %1880 = vmatmul.mubr.f32.gmra.mrb[0].mxu0 %v1759
        %v1881 = vpop.f32.mrb[0].mxu0
        %v1882 = vadd.f32 0.0, %v1881
        %v1883 = vpop.f32.mrb[0].mxu0
        %1884 = vmatprep.mubr.f32.mxu0 0.0
        %1885 = vmatmul.mubr.f32.gmra.mrb[0].mxu0 %v1762
        %v1886 = vpop.f32.mrb[0].mxu0
        %v1887 = vpop.f32.mrb[0].mxu0
        %1888 = vmatprep.mubr.f32.mxu0 0.0
        %1889 = vmatmul.mubr.f32.gmra.mrb[0].mxu0 %v1765
        %v1890 = vpop.f32.mrb[0].mxu0
        %v1891 = vadd.f32 0.0, %v1890
        %v1892 = vpop.f32.mrb[0].mxu0
        %1893 = vmatprep.mubr.f32.mxu0 0.0
        %1894 = vmatmul.mubr.f32.gmra.mrb[0].mxu0 %v1768
        %v1895 = vpop.f32.mrb[0].mxu0
        %v1896 = vpop.f32.mrb[0].mxu0
        %1897 = vmatprep.mubr.f32.mxu0 0.0
        %1898 = vmatmul.mubr.f32.gmra.mrb[0].mxu0 %v1771
        %v1899 = vpop.f32.mrb[0].mxu0
        %v1900 = vadd.f32 0.0, %v1899
        %v1901 = vpop.f32.mrb[0].mxu0
        %1902 = vmatprep.mubr.f32.mxu0 0.0
        %1903 = vmatmul.mubr.f32.gmra.mrb[0].mxu0 %v1774
        %v1904 = vpop.f32.mrb[0].mxu0
        %v1905 = vpop.f32.mrb[0].mxu0
        %1906 = vmatprep.mubr.f32.mxu0 0.0
        %1907 = vmatmul.mubr.f32.gmra.mrb[0].mxu0 %v1777
        %v1908 = vpop.f32.mrb[0].mxu0
        %v1909 = vadd.f32 0.0, %v1908
        %v1910 = vpop.f32.mrb[0].mxu0
        %1911 = vmatprep.mubr.f32.mxu0 0.0
        %1912 = vmatmul.mubr.f32.gmra.mrb[0].mxu0 %v1780
        %v1913 = vpop.f32.mrb[0].mxu0
        %v1914 = vpop.f32.mrb[0].mxu0
        %1915 = vmatprep.mubr.f32.mxu0 0.0
        %1916 = vmatmul.mubr.f32.gmra.mrb[0].mxu0 %v1783
        %v1917 = vpop.f32.mrb[0].mxu0
        %v1918 = vadd.f32 0.0, %v1917
        %v1919 = vpop.f32.mrb[0].mxu0
        %1920 = vmatprep.mubr.f32.mxu0 0.0
        %1921 = vmatmul.mubr.f32.gmra.mrb[0].mxu0 %v1786
        %v1922 = vpop.f32.mrb[0].mxu0
        %v1923 = vpop.f32.mrb[0].mxu0
        %1924 = vmatprep.mubr.f32.mxu0 0.0
        %1925 = vmatmul.mubr.f32.gmra.mrb[0].mxu0 %v1789
        %v1926 = vpop.f32.mrb[0].mxu0
        %v1927 = vadd.f32 0.0, %v1926
        %v1928 = vpop.f32.mrb[0].mxu0
        %1929 = vmatprep.mubr.f32.mxu0 0.0
        %1930 = vmatmul.mubr.f32.gmra.mrb[0].mxu0 %v1792
        %v1931 = vpop.f32.mrb[0].mxu0
        %v1932 = vpop.f32.mrb[0].mxu0
        %1933 = vdwg.mxu0
        %v1934 = vadd.f32 %v1720, %v1864
        %v1935 = vadd.f32 %v1721, %v1873
        %v1936 = vadd.f32 %v1722, %v1882
        %v1937 = vadd.f32 %v1723, %v1891
        %v1938 = vadd.f32 %v1724, %v1900
        %v1939 = vadd.f32 %v1725, %v1909
        %v1940 = vadd.f32 %v1726, %v1918
        %v1941 = vadd.f32 %v1727, %v1927
        %v1942 = vld [vmem:[#allocation2 + $0x13] sm:$0xff]
        %v1943 = vld [vmem:[#allocation2 + $0x1b] sm:$0xff]
        %v1944 = vld [vmem:[#allocation2 + $0x23] sm:$0xff]
        %v1945 = vld [vmem:[#allocation2 + $0x2b] sm:$0xff]
        %v1946 = vld [vmem:[#allocation2 + $0x33] sm:$0xff]
        %v1947 = vld [vmem:[#allocation2 + $0x3b] sm:$0xff]
        %v1948 = vld [vmem:[#allocation2 + $0x43] sm:$0xff]
        %v1949 = vld [vmem:[#allocation2 + $0x4b] sm:$0xff]
        %v1950 = vld [vmem:[#allocation2 + $0x53] sm:$0xff]
        %v1951 = vld [vmem:[#allocation2 + $0x5b] sm:$0xff]
        %v1952 = vld [vmem:[#allocation2 + $0x63] sm:$0xff]
        %v1953 = vld [vmem:[#allocation2 + $0x6b] sm:$0xff]
        %v1954 = vld [vmem:[#allocation2 + $0x73] sm:$0xff]
        %v1955 = vld [vmem:[#allocation2 + $0x7b] sm:$0xff]
        %v1956 = vld [vmem:[#allocation2 + $0x83] sm:$0xff]
        %v1957 = vld [vmem:[#allocation2 + $0x8b] sm:$0xff]
        %s1958 = scalar_lea.vmem %s1, 32
        %v1959 = vld [vmem:[%s1958] sm:$0xf]
        %v1961 = vsel %vm196, %v1942, 0
        %v1964 = vsel %vm196, %v1943, 0
        %v1967 = vsel %vm196, %v1944, 0
        %v1970 = vsel %vm196, %v1945, 0
        %v1973 = vsel %vm196, %v1946, 0
        %v1976 = vsel %vm196, %v1947, 0
        %v1979 = vsel %vm196, %v1948, 0
        %v1982 = vsel %vm196, %v1949, 0
        %v1985 = vsel %vm196, %v1950, 0
        %v1988 = vsel %vm196, %v1951, 0
        %v1991 = vsel %vm196, %v1952, 0
        %v1994 = vsel %vm196, %v1953, 0
        %v1997 = vsel %vm196, %v1954, 0
        %v2000 = vsel %vm196, %v1955, 0
        %v2003 = vsel %vm196, %v1956, 0
        %v2006 = vsel %vm196, %v1957, 0
        %v2009 = vsel %vm329, %v1959, 0
        %2011 = vmatprep.subr.mxu0 0.0
        %2012 = vmatpush1.msra.mxu0 %v2009
        %2013 = vmatprep.subr.mxu0 0.0
        %2014 = vmatpush1.msra.mxu0 0.0
        %2015 = vmatprep.subr.mxu0 0.0
        %2016 = vmatpush1.msra.mxu0 0.0
        %2017 = vmatprep.subr.mxu0 0.0
        %2018 = vmatpush1.msra.mxu0 0.0
        %2019 = vmatprep.subr.mxu0 0.0
        %2020 = vmatpush1.msra.mxu0 0.0
        %2021 = vmatprep.subr.mxu0 0.0
        %2022 = vmatpush1.msra.mxu0 0.0
        %2023 = vmatprep.subr.mxu0 0.0
        %2024 = vmatpush1.msra.mxu0 0.0
        %2025 = vmatprep.subr.mxu0 0.0
        %2026 = vmatpush1.msra.mxu0 0.0
        %2027 = vmatprep.subr.mxu0 0.0
        %2028 = vmatpush1.msra.mxu0 0.0
        %2029 = vmatprep.subr.mxu0 0.0
        %2030 = vmatpush1.msra.mxu0 0.0
        %2031 = vmatprep.subr.mxu0 0.0
        %2032 = vmatpush1.msra.mxu0 0.0
        %2033 = vmatprep.subr.mxu0 0.0
        %2034 = vmatpush1.msra.mxu0 0.0
        %2035 = vmatprep.subr.mxu0 0.0
        %2036 = vmatpush1.msra.mxu0 0.0
        %2037 = vmatprep.subr.mxu0 0.0
        %2038 = vmatpush1.msra.mxu0 0.0
        %2039 = vmatprep.subr.mxu0 0.0
        %2040 = vmatpush1.msra.mxu0 0.0
        %2041 = vmatprep.subr.mxu0 0.0
        %2042 = vmatpush1.msra.mxu0 0.0
        %2043 = vmatprep.subr.mxu0 0.0
        %2044 = vmatpush1.msra.mxu0 0.0
        %2045 = vmatprep.subr.mxu0 0.0
        %2046 = vmatpush1.msra.mxu0 0.0
        %2047 = vmatprep.subr.mxu0 0.0
        %2048 = vmatpush1.msra.mxu0 0.0
        %2049 = vmatprep.subr.mxu0 0.0
        %2050 = vmatpush1.msra.mxu0 0.0
        %2051 = vmatprep.subr.mxu0 0.0
        %2052 = vmatpush1.msra.mxu0 0.0
        %2053 = vmatprep.subr.mxu0 0.0
        %2054 = vmatpush1.msra.mxu0 0.0
        %2055 = vmatprep.subr.mxu0 0.0
        %2056 = vmatpush1.msra.mxu0 0.0
        %2057 = vmatprep.subr.mxu0 0.0
        %2058 = vmatpush1.msra.mxu0 0.0
        %2059 = vmatprep.subr.mxu0 0.0
        %2060 = vmatpush1.msra.mxu0 0.0
        %2061 = vmatprep.subr.mxu0 0.0
        %2062 = vmatpush1.msra.mxu0 0.0
        %2063 = vmatprep.subr.mxu0 0.0
        %2064 = vmatpush1.msra.mxu0 0.0
        %2065 = vmatprep.subr.mxu0 0.0
        %2066 = vmatpush1.msra.mxu0 0.0
        %2067 = vmatprep.subr.mxu0 0.0
        %2068 = vmatpush1.msra.mxu0 0.0
        %2069 = vmatprep.subr.mxu0 0.0
        %2070 = vmatpush1.msra.mxu0 0.0
        %2071 = vmatprep.subr.mxu0 0.0
        %2072 = vmatpush1.msra.mxu0 0.0
        %2073 = vmatprep.subr.mxu0 0.0
        %2074 = vmatpush1.msra.mxu0 0.0
        %2075 = vmatprep.mubr.f32.mxu0 0.0
        %2076 = vmatmul.mubr.f32.gmra.mrb[0].mxu0 %v1961
        %v2077 = vpop.f32.mrb[0].mxu0
        %v2078 = vadd.f32 0.0, %v2077
        %v2079 = vpop.f32.mrb[0].mxu0
        %2080 = vmatprep.mubr.f32.mxu0 0.0
        %2081 = vmatmul.mubr.f32.gmra.mrb[0].mxu0 %v1964
        %v2082 = vpop.f32.mrb[0].mxu0
        %v2083 = vpop.f32.mrb[0].mxu0
        %2084 = vmatprep.mubr.f32.mxu0 0.0
        %2085 = vmatmul.mubr.f32.gmra.mrb[0].mxu0 %v1967
        %v2086 = vpop.f32.mrb[0].mxu0
        %v2087 = vadd.f32 0.0, %v2086
        %v2088 = vpop.f32.mrb[0].mxu0
        %2089 = vmatprep.mubr.f32.mxu0 0.0
        %2090 = vmatmul.mubr.f32.gmra.mrb[0].mxu0 %v1970
        %v2091 = vpop.f32.mrb[0].mxu0
        %v2092 = vpop.f32.mrb[0].mxu0
        %2093 = vmatprep.mubr.f32.mxu0 0.0
        %2094 = vmatmul.mubr.f32.gmra.mrb[0].mxu0 %v1973
        %v2095 = vpop.f32.mrb[0].mxu0
        %v2096 = vadd.f32 0.0, %v2095
        %v2097 = vpop.f32.mrb[0].mxu0
        %2098 = vmatprep.mubr.f32.mxu0 0.0
        %2099 = vmatmul.mubr.f32.gmra.mrb[0].mxu0 %v1976
        %v2100 = vpop.f32.mrb[0].mxu0
        %v2101 = vpop.f32.mrb[0].mxu0
        %2102 = vmatprep.mubr.f32.mxu0 0.0
        %2103 = vmatmul.mubr.f32.gmra.mrb[0].mxu0 %v1979
        %v2104 = vpop.f32.mrb[0].mxu0
        %v2105 = vadd.f32 0.0, %v2104
        %v2106 = vpop.f32.mrb[0].mxu0
        %2107 = vmatprep.mubr.f32.mxu0 0.0
        %2108 = vmatmul.mubr.f32.gmra.mrb[0].mxu0 %v1982
        %v2109 = vpop.f32.mrb[0].mxu0
        %v2110 = vpop.f32.mrb[0].mxu0
        %2111 = vmatprep.mubr.f32.mxu0 0.0
        %2112 = vmatmul.mubr.f32.gmra.mrb[0].mxu0 %v1985
        %v2113 = vpop.f32.mrb[0].mxu0
        %v2114 = vadd.f32 0.0, %v2113
        %v2115 = vpop.f32.mrb[0].mxu0
        %2116 = vmatprep.mubr.f32.mxu0 0.0
        %2117 = vmatmul.mubr.f32.gmra.mrb[0].mxu0 %v1988
        %v2118 = vpop.f32.mrb[0].mxu0
        %v2119 = vpop.f32.mrb[0].mxu0
        %2120 = vmatprep.mubr.f32.mxu0 0.0
        %2121 = vmatmul.mubr.f32.gmra.mrb[0].mxu0 %v1991
        %v2122 = vpop.f32.mrb[0].mxu0
        %v2123 = vadd.f32 0.0, %v2122
        %v2124 = vpop.f32.mrb[0].mxu0
        %2125 = vmatprep.mubr.f32.mxu0 0.0
        %2126 = vmatmul.mubr.f32.gmra.mrb[0].mxu0 %v1994
        %v2127 = vpop.f32.mrb[0].mxu0
        %v2128 = vpop.f32.mrb[0].mxu0
        %2129 = vmatprep.mubr.f32.mxu0 0.0
        %2130 = vmatmul.mubr.f32.gmra.mrb[0].mxu0 %v1997
        %v2131 = vpop.f32.mrb[0].mxu0
        %v2132 = vadd.f32 0.0, %v2131
        %v2133 = vpop.f32.mrb[0].mxu0
        %2134 = vmatprep.mubr.f32.mxu0 0.0
        %2135 = vmatmul.mubr.f32.gmra.mrb[0].mxu0 %v2000
        %v2136 = vpop.f32.mrb[0].mxu0
        %v2137 = vpop.f32.mrb[0].mxu0
        %2138 = vmatprep.mubr.f32.mxu0 0.0
        %2139 = vmatmul.mubr.f32.gmra.mrb[0].mxu0 %v2003
        %v2140 = vpop.f32.mrb[0].mxu0
        %v2141 = vadd.f32 0.0, %v2140
        %v2142 = vpop.f32.mrb[0].mxu0
        %2143 = vmatprep.mubr.f32.mxu0 0.0
        %2144 = vmatmul.mubr.f32.gmra.mrb[0].mxu0 %v2006
        %v2145 = vpop.f32.mrb[0].mxu0
        %v2146 = vpop.f32.mrb[0].mxu0
        %2147 = vdwg.mxu0
        %v2148 = vadd.f32 %v1934, %v2078
        %v2149 = vadd.f32 %v1935, %v2087
        %v2150 = vadd.f32 %v1936, %v2096
        %v2151 = vadd.f32 %v1937, %v2105
        %v2152 = vadd.f32 %v1938, %v2114
        %v2153 = vadd.f32 %v1939, %v2123
        %v2154 = vadd.f32 %v1940, %v2132
        %v2155 = vadd.f32 %v1941, %v2141
        %v2156 = vld [vmem:[#allocation2 + $0x14] sm:$0xff]
        %v2157 = vld [vmem:[#allocation2 + $0x1c] sm:$0xff]
        %v2158 = vld [vmem:[#allocation2 + $0x24] sm:$0xff]
        %v2159 = vld [vmem:[#allocation2 + $0x2c] sm:$0xff]
        %v2160 = vld [vmem:[#allocation2 + $0x34] sm:$0xff]
        %v2161 = vld [vmem:[#allocation2 + $0x3c] sm:$0xff]
        %v2162 = vld [vmem:[#allocation2 + $0x44] sm:$0xff]
        %v2163 = vld [vmem:[#allocation2 + $0x4c] sm:$0xff]
        %v2164 = vld [vmem:[#allocation2 + $0x54] sm:$0xff]
        %v2165 = vld [vmem:[#allocation2 + $0x5c] sm:$0xff]
        %v2166 = vld [vmem:[#allocation2 + $0x64] sm:$0xff]
        %v2167 = vld [vmem:[#allocation2 + $0x6c] sm:$0xff]
        %v2168 = vld [vmem:[#allocation2 + $0x74] sm:$0xff]
        %v2169 = vld [vmem:[#allocation2 + $0x7c] sm:$0xff]
        %v2170 = vld [vmem:[#allocation2 + $0x84] sm:$0xff]
        %v2171 = vld [vmem:[#allocation2 + $0x8c] sm:$0xff]
        %s2172 = scalar_lea.vmem %s1, 36
        %v2173 = vld [vmem:[%s2172] sm:$0xf]
        %v2175 = vsel %vm196, %v2156, 0
        %v2178 = vsel %vm196, %v2157, 0
        %v2181 = vsel %vm196, %v2158, 0
        %v2184 = vsel %vm196, %v2159, 0
        %v2187 = vsel %vm196, %v2160, 0
        %v2190 = vsel %vm196, %v2161, 0
        %v2193 = vsel %vm196, %v2162, 0
        %v2196 = vsel %vm196, %v2163, 0
        %v2199 = vsel %vm196, %v2164, 0
        %v2202 = vsel %vm196, %v2165, 0
        %v2205 = vsel %vm196, %v2166, 0
        %v2208 = vsel %vm196, %v2167, 0
        %v2211 = vsel %vm196, %v2168, 0
        %v2214 = vsel %vm196, %v2169, 0
        %v2217 = vsel %vm196, %v2170, 0
        %v2220 = vsel %vm196, %v2171, 0
        %v2223 = vsel %vm329, %v2173, 0
        %2225 = vmatprep.subr.mxu0 0.0
        %2226 = vmatpush1.msra.mxu0 %v2223
        %2227 = vmatprep.subr.mxu0 0.0
        %2228 = vmatpush1.msra.mxu0 0.0
        %2229 = vmatprep.subr.mxu0 0.0
        %2230 = vmatpush1.msra.mxu0 0.0
        %2231 = vmatprep.subr.mxu0 0.0
        %2232 = vmatpush1.msra.mxu0 0.0
        %2233 = vmatprep.subr.mxu0 0.0
        %2234 = vmatpush1.msra.mxu0 0.0
        %2235 = vmatprep.subr.mxu0 0.0
        %2236 = vmatpush1.msra.mxu0 0.0
        %2237 = vmatprep.subr.mxu0 0.0
        %2238 = vmatpush1.msra.mxu0 0.0
        %2239 = vmatprep.subr.mxu0 0.0
        %2240 = vmatpush1.msra.mxu0 0.0
        %2241 = vmatprep.subr.mxu0 0.0
        %2242 = vmatpush1.msra.mxu0 0.0
        %2243 = vmatprep.subr.mxu0 0.0
        %2244 = vmatpush1.msra.mxu0 0.0
        %2245 = vmatprep.subr.mxu0 0.0
        %2246 = vmatpush1.msra.mxu0 0.0
        %2247 = vmatprep.subr.mxu0 0.0
        %2248 = vmatpush1.msra.mxu0 0.0
        %2249 = vmatprep.subr.mxu0 0.0
        %2250 = vmatpush1.msra.mxu0 0.0
        %2251 = vmatprep.subr.mxu0 0.0
        %2252 = vmatpush1.msra.mxu0 0.0
        %2253 = vmatprep.subr.mxu0 0.0
        %2254 = vmatpush1.msra.mxu0 0.0
        %2255 = vmatprep.subr.mxu0 0.0
        %2256 = vmatpush1.msra.mxu0 0.0
        %2257 = vmatprep.subr.mxu0 0.0
        %2258 = vmatpush1.msra.mxu0 0.0
        %2259 = vmatprep.subr.mxu0 0.0
        %2260 = vmatpush1.msra.mxu0 0.0
        %2261 = vmatprep.subr.mxu0 0.0
        %2262 = vmatpush1.msra.mxu0 0.0
        %2263 = vmatprep.subr.mxu0 0.0
        %2264 = vmatpush1.msra.mxu0 0.0
        %2265 = vmatprep.subr.mxu0 0.0
        %2266 = vmatpush1.msra.mxu0 0.0
        %2267 = vmatprep.subr.mxu0 0.0
        %2268 = vmatpush1.msra.mxu0 0.0
        %2269 = vmatprep.subr.mxu0 0.0
        %2270 = vmatpush1.msra.mxu0 0.0
        %2271 = vmatprep.subr.mxu0 0.0
        %2272 = vmatpush1.msra.mxu0 0.0
        %2273 = vmatprep.subr.mxu0 0.0
        %2274 = vmatpush1.msra.mxu0 0.0
        %2275 = vmatprep.subr.mxu0 0.0
        %2276 = vmatpush1.msra.mxu0 0.0
        %2277 = vmatprep.subr.mxu0 0.0
        %2278 = vmatpush1.msra.mxu0 0.0
        %2279 = vmatprep.subr.mxu0 0.0
        %2280 = vmatpush1.msra.mxu0 0.0
        %2281 = vmatprep.subr.mxu0 0.0
        %2282 = vmatpush1.msra.mxu0 0.0
        %2283 = vmatprep.subr.mxu0 0.0
        %2284 = vmatpush1.msra.mxu0 0.0
        %2285 = vmatprep.subr.mxu0 0.0
        %2286 = vmatpush1.msra.mxu0 0.0
        %2287 = vmatprep.subr.mxu0 0.0
        %2288 = vmatpush1.msra.mxu0 0.0
        %2289 = vmatprep.mubr.f32.mxu0 0.0
        %2290 = vmatmul.mubr.f32.gmra.mrb[0].mxu0 %v2175
        %v2291 = vpop.f32.mrb[0].mxu0
        %v2292 = vadd.f32 0.0, %v2291
        %v2293 = vpop.f32.mrb[0].mxu0
        %2294 = vmatprep.mubr.f32.mxu0 0.0
        %2295 = vmatmul.mubr.f32.gmra.mrb[0].mxu0 %v2178
        %v2296 = vpop.f32.mrb[0].mxu0
        %v2297 = vpop.f32.mrb[0].mxu0
        %2298 = vmatprep.mubr.f32.mxu0 0.0
        %2299 = vmatmul.mubr.f32.gmra.mrb[0].mxu0 %v2181
        %v2300 = vpop.f32.mrb[0].mxu0
        %v2301 = vadd.f32 0.0, %v2300
        %v2302 = vpop.f32.mrb[0].mxu0
        %2303 = vmatprep.mubr.f32.mxu0 0.0
        %2304 = vmatmul.mubr.f32.gmra.mrb[0].mxu0 %v2184
        %v2305 = vpop.f32.mrb[0].mxu0
        %v2306 = vpop.f32.mrb[0].mxu0
        %2307 = vmatprep.mubr.f32.mxu0 0.0
        %2308 = vmatmul.mubr.f32.gmra.mrb[0].mxu0 %v2187
        %v2309 = vpop.f32.mrb[0].mxu0
        %v2310 = vadd.f32 0.0, %v2309
        %v2311 = vpop.f32.mrb[0].mxu0
        %2312 = vmatprep.mubr.f32.mxu0 0.0
        %2313 = vmatmul.mubr.f32.gmra.mrb[0].mxu0 %v2190
        %v2314 = vpop.f32.mrb[0].mxu0
        %v2315 = vpop.f32.mrb[0].mxu0
        %2316 = vmatprep.mubr.f32.mxu0 0.0
        %2317 = vmatmul.mubr.f32.gmra.mrb[0].mxu0 %v2193
        %v2318 = vpop.f32.mrb[0].mxu0
        %v2319 = vadd.f32 0.0, %v2318
        %v2320 = vpop.f32.mrb[0].mxu0
        %2321 = vmatprep.mubr.f32.mxu0 0.0
        %2322 = vmatmul.mubr.f32.gmra.mrb[0].mxu0 %v2196
        %v2323 = vpop.f32.mrb[0].mxu0
        %v2324 = vpop.f32.mrb[0].mxu0
        %2325 = vmatprep.mubr.f32.mxu0 0.0
        %2326 = vmatmul.mubr.f32.gmra.mrb[0].mxu0 %v2199
        %v2327 = vpop.f32.mrb[0].mxu0
        %v2328 = vadd.f32 0.0, %v2327
        %v2329 = vpop.f32.mrb[0].mxu0
        %2330 = vmatprep.mubr.f32.mxu0 0.0
        %2331 = vmatmul.mubr.f32.gmra.mrb[0].mxu0 %v2202
        %v2332 = vpop.f32.mrb[0].mxu0
        %v2333 = vpop.f32.mrb[0].mxu0
        %2334 = vmatprep.mubr.f32.mxu0 0.0
        %2335 = vmatmul.mubr.f32.gmra.mrb[0].mxu0 %v2205
        %v2336 = vpop.f32.mrb[0].mxu0
        %v2337 = vadd.f32 0.0, %v2336
        %v2338 = vpop.f32.mrb[0].mxu0
        %2339 = vmatprep.mubr.f32.mxu0 0.0
        %2340 = vmatmul.mubr.f32.gmra.mrb[0].mxu0 %v2208
        %v2341 = vpop.f32.mrb[0].mxu0
        %v2342 = vpop.f32.mrb[0].mxu0
        %2343 = vmatprep.mubr.f32.mxu0 0.0
        %2344 = vmatmul.mubr.f32.gmra.mrb[0].mxu0 %v2211
        %v2345 = vpop.f32.mrb[0].mxu0
        %v2346 = vadd.f32 0.0, %v2345
        %v2347 = vpop.f32.mrb[0].mxu0
        %2348 = vmatprep.mubr.f32.mxu0 0.0
        %2349 = vmatmul.mubr.f32.gmra.mrb[0].mxu0 %v2214
        %v2350 = vpop.f32.mrb[0].mxu0
        %v2351 = vpop.f32.mrb[0].mxu0
        %2352 = vmatprep.mubr.f32.mxu0 0.0
        %2353 = vmatmul.mubr.f32.gmra.mrb[0].mxu0 %v2217
        %v2354 = vpop.f32.mrb[0].mxu0
        %v2355 = vadd.f32 0.0, %v2354
        %v2356 = vpop.f32.mrb[0].mxu0
        %2357 = vmatprep.mubr.f32.mxu0 0.0
        %2358 = vmatmul.mubr.f32.gmra.mrb[0].mxu0 %v2220
        %v2359 = vpop.f32.mrb[0].mxu0
        %v2360 = vpop.f32.mrb[0].mxu0
        %2361 = vdwg.mxu0
        %v2362 = vadd.f32 %v2148, %v2292
        %v2363 = vadd.f32 %v2149, %v2301
        %v2364 = vadd.f32 %v2150, %v2310
        %v2365 = vadd.f32 %v2151, %v2319
        %v2366 = vadd.f32 %v2152, %v2328
        %v2367 = vadd.f32 %v2153, %v2337
        %v2368 = vadd.f32 %v2154, %v2346
        %v2369 = vadd.f32 %v2155, %v2355
        %v2370 = vld [vmem:[#allocation2 + $0x20] sm:$0xff]
        %v2371 = vld [vmem:[#allocation2 + $0x28] sm:$0xff]
        %v2372 = vld [vmem:[#allocation2 + $0x30] sm:$0xff]
        %v2373 = vld [vmem:[#allocation2 + $0x38] sm:$0xff]
        %v2374 = vld [vmem:[#allocation2 + $0x40] sm:$0xff]
        %v2375 = vld [vmem:[#allocation2 + $0x48] sm:$0xff]
        %v2376 = vld [vmem:[#allocation2 + $0x50] sm:$0xff]
        %v2377 = vld [vmem:[#allocation2 + $0x58] sm:$0xff]
        %v2378 = vld [vmem:[#allocation2 + $0x60] sm:$0xff]
        %v2379 = vld [vmem:[#allocation2 + $0x68] sm:$0xff]
        %v2380 = vld [vmem:[#allocation2 + $0x70] sm:$0xff]
        %v2381 = vld [vmem:[#allocation2 + $0x78] sm:$0xff]
        %v2382 = vld [vmem:[#allocation2 + $0x80] sm:$0xff]
        %v2383 = vld [vmem:[#allocation2 + $0x88] sm:$0xff]
        %v2384 = vld [vmem:[#allocation2 + $0x90] sm:$0xff]
        %v2385 = vld [vmem:[#allocation2 + $0x98] sm:$0xff]
        %s2386 = scalar_lea.vmem %s1, 40
        %v2387 = vld [vmem:[%s2386] sm:$0xf]
        %v2389 = vsel %vm196, %v2370, 0
        %v2392 = vsel %vm196, %v2371, 0
        %v2395 = vsel %vm196, %v2372, 0
        %v2398 = vsel %vm196, %v2373, 0
        %v2401 = vsel %vm196, %v2374, 0
        %v2404 = vsel %vm196, %v2375, 0
        %v2407 = vsel %vm196, %v2376, 0
        %v2410 = vsel %vm196, %v2377, 0
        %v2413 = vsel %vm196, %v2378, 0
        %v2416 = vsel %vm196, %v2379, 0
        %v2419 = vsel %vm196, %v2380, 0
        %v2422 = vsel %vm196, %v2381, 0
        %v2425 = vsel %vm196, %v2382, 0
        %v2428 = vsel %vm196, %v2383, 0
        %v2431 = vsel %vm196, %v2384, 0
        %v2434 = vsel %vm196, %v2385, 0
        %v2437 = vsel %vm329, %v2387, 0
        %2439 = vmatprep.subr.mxu0 0.0
        %2440 = vmatpush1.msra.mxu0 %v2437
        %2441 = vmatprep.subr.mxu0 0.0
        %2442 = vmatpush1.msra.mxu0 0.0
        %2443 = vmatprep.subr.mxu0 0.0
        %2444 = vmatpush1.msra.mxu0 0.0
        %2445 = vmatprep.subr.mxu0 0.0
        %2446 = vmatpush1.msra.mxu0 0.0
        %2447 = vmatprep.subr.mxu0 0.0
        %2448 = vmatpush1.msra.mxu0 0.0
        %2449 = vmatprep.subr.mxu0 0.0
        %2450 = vmatpush1.msra.mxu0 0.0
        %2451 = vmatprep.subr.mxu0 0.0
        %2452 = vmatpush1.msra.mxu0 0.0
        %2453 = vmatprep.subr.mxu0 0.0
        %2454 = vmatpush1.msra.mxu0 0.0
        %2455 = vmatprep.subr.mxu0 0.0
        %2456 = vmatpush1.msra.mxu0 0.0
        %2457 = vmatprep.subr.mxu0 0.0
        %2458 = vmatpush1.msra.mxu0 0.0
        %2459 = vmatprep.subr.mxu0 0.0
        %2460 = vmatpush1.msra.mxu0 0.0
        %2461 = vmatprep.subr.mxu0 0.0
        %2462 = vmatpush1.msra.mxu0 0.0
        %2463 = vmatprep.subr.mxu0 0.0
        %2464 = vmatpush1.msra.mxu0 0.0
        %2465 = vmatprep.subr.mxu0 0.0
        %2466 = vmatpush1.msra.mxu0 0.0
        %2467 = vmatprep.subr.mxu0 0.0
        %2468 = vmatpush1.msra.mxu0 0.0
        %2469 = vmatprep.subr.mxu0 0.0
        %2470 = vmatpush1.msra.mxu0 0.0
        %2471 = vmatprep.subr.mxu0 0.0
        %2472 = vmatpush1.msra.mxu0 0.0
        %2473 = vmatprep.subr.mxu0 0.0
        %2474 = vmatpush1.msra.mxu0 0.0
        %2475 = vmatprep.subr.mxu0 0.0
        %2476 = vmatpush1.msra.mxu0 0.0
        %2477 = vmatprep.subr.mxu0 0.0
        %2478 = vmatpush1.msra.mxu0 0.0
        %2479 = vmatprep.subr.mxu0 0.0
        %2480 = vmatpush1.msra.mxu0 0.0
        %2481 = vmatprep.subr.mxu0 0.0
        %2482 = vmatpush1.msra.mxu0 0.0
        %2483 = vmatprep.subr.mxu0 0.0
        %2484 = vmatpush1.msra.mxu0 0.0
        %2485 = vmatprep.subr.mxu0 0.0
        %2486 = vmatpush1.msra.mxu0 0.0
        %2487 = vmatprep.subr.mxu0 0.0
        %2488 = vmatpush1.msra.mxu0 0.0
        %2489 = vmatprep.subr.mxu0 0.0
        %2490 = vmatpush1.msra.mxu0 0.0
        %2491 = vmatprep.subr.mxu0 0.0
        %2492 = vmatpush1.msra.mxu0 0.0
        %2493 = vmatprep.subr.mxu0 0.0
        %2494 = vmatpush1.msra.mxu0 0.0
        %2495 = vmatprep.subr.mxu0 0.0
        %2496 = vmatpush1.msra.mxu0 0.0
        %2497 = vmatprep.subr.mxu0 0.0
        %2498 = vmatpush1.msra.mxu0 0.0
        %2499 = vmatprep.subr.mxu0 0.0
        %2500 = vmatpush1.msra.mxu0 0.0
        %2501 = vmatprep.subr.mxu0 0.0
        %2502 = vmatpush1.msra.mxu0 0.0
        %2503 = vmatprep.mubr.f32.mxu0 0.0
        %2504 = vmatmul.mubr.f32.gmra.mrb[0].mxu0 %v2389
        %v2505 = vpop.f32.mrb[0].mxu0
        %v2506 = vadd.f32 0.0, %v2505
        %v2507 = vpop.f32.mrb[0].mxu0
        %2508 = vmatprep.mubr.f32.mxu0 0.0
        %2509 = vmatmul.mubr.f32.gmra.mrb[0].mxu0 %v2392
        %v2510 = vpop.f32.mrb[0].mxu0
        %v2511 = vpop.f32.mrb[0].mxu0
        %2512 = vmatprep.mubr.f32.mxu0 0.0
        %2513 = vmatmul.mubr.f32.gmra.mrb[0].mxu0 %v2395
        %v2514 = vpop.f32.mrb[0].mxu0
        %v2515 = vadd.f32 0.0, %v2514
        %v2516 = vpop.f32.mrb[0].mxu0
        %2517 = vmatprep.mubr.f32.mxu0 0.0
        %2518 = vmatmul.mubr.f32.gmra.mrb[0].mxu0 %v2398
        %v2519 = vpop.f32.mrb[0].mxu0
        %v2520 = vpop.f32.mrb[0].mxu0
        %2521 = vmatprep.mubr.f32.mxu0 0.0
        %2522 = vmatmul.mubr.f32.gmra.mrb[0].mxu0 %v2401
        %v2523 = vpop.f32.mrb[0].mxu0
        %v2524 = vadd.f32 0.0, %v2523
        %v2525 = vpop.f32.mrb[0].mxu0
        %2526 = vmatprep.mubr.f32.mxu0 0.0
        %2527 = vmatmul.mubr.f32.gmra.mrb[0].mxu0 %v2404
        %v2528 = vpop.f32.mrb[0].mxu0
        %v2529 = vpop.f32.mrb[0].mxu0
        %2530 = vmatprep.mubr.f32.mxu0 0.0
        %2531 = vmatmul.mubr.f32.gmra.mrb[0].mxu0 %v2407
        %v2532 = vpop.f32.mrb[0].mxu0
        %v2533 = vadd.f32 0.0, %v2532
        %v2534 = vpop.f32.mrb[0].mxu0
        %2535 = vmatprep.mubr.f32.mxu0 0.0
        %2536 = vmatmul.mubr.f32.gmra.mrb[0].mxu0 %v2410
        %v2537 = vpop.f32.mrb[0].mxu0
        %v2538 = vpop.f32.mrb[0].mxu0
        %2539 = vmatprep.mubr.f32.mxu0 0.0
        %2540 = vmatmul.mubr.f32.gmra.mrb[0].mxu0 %v2413
        %v2541 = vpop.f32.mrb[0].mxu0
        %v2542 = vadd.f32 0.0, %v2541
        %v2543 = vpop.f32.mrb[0].mxu0
        %2544 = vmatprep.mubr.f32.mxu0 0.0
        %2545 = vmatmul.mubr.f32.gmra.mrb[0].mxu0 %v2416
        %v2546 = vpop.f32.mrb[0].mxu0
        %v2547 = vpop.f32.mrb[0].mxu0
        %2548 = vmatprep.mubr.f32.mxu0 0.0
        %2549 = vmatmul.mubr.f32.gmra.mrb[0].mxu0 %v2419
        %v2550 = vpop.f32.mrb[0].mxu0
        %v2551 = vadd.f32 0.0, %v2550
        %v2552 = vpop.f32.mrb[0].mxu0
        %2553 = vmatprep.mubr.f32.mxu0 0.0
        %2554 = vmatmul.mubr.f32.gmra.mrb[0].mxu0 %v2422
        %v2555 = vpop.f32.mrb[0].mxu0
        %v2556 = vpop.f32.mrb[0].mxu0
        %2557 = vmatprep.mubr.f32.mxu0 0.0
        %2558 = vmatmul.mubr.f32.gmra.mrb[0].mxu0 %v2425
        %v2559 = vpop.f32.mrb[0].mxu0
        %v2560 = vadd.f32 0.0, %v2559
        %v2561 = vpop.f32.mrb[0].mxu0
        %2562 = vmatprep.mubr.f32.mxu0 0.0
        %2563 = vmatmul.mubr.f32.gmra.mrb[0].mxu0 %v2428
        %v2564 = vpop.f32.mrb[0].mxu0
        %v2565 = vpop.f32.mrb[0].mxu0
        %2566 = vmatprep.mubr.f32.mxu0 0.0
        %2567 = vmatmul.mubr.f32.gmra.mrb[0].mxu0 %v2431
        %v2568 = vpop.f32.mrb[0].mxu0
        %v2569 = vadd.f32 0.0, %v2568
        %v2570 = vpop.f32.mrb[0].mxu0
        %2571 = vmatprep.mubr.f32.mxu0 0.0
        %2572 = vmatmul.mubr.f32.gmra.mrb[0].mxu0 %v2434
        %v2573 = vpop.f32.mrb[0].mxu0
        %v2574 = vpop.f32.mrb[0].mxu0
        %2575 = vdwg.mxu0
        %v2576 = vadd.f32 %v2362, %v2506
        %v2577 = vadd.f32 %v2363, %v2515
        %v2578 = vadd.f32 %v2364, %v2524
        %v2579 = vadd.f32 %v2365, %v2533
        %v2580 = vadd.f32 %v2366, %v2542
        %v2581 = vadd.f32 %v2367, %v2551
        %v2582 = vadd.f32 %v2368, %v2560
        %v2583 = vadd.f32 %v2369, %v2569
        %v2584 = vld [vmem:[#allocation2 + $0x21] sm:$0xff]
        %v2585 = vld [vmem:[#allocation2 + $0x29] sm:$0xff]
        %v2586 = vld [vmem:[#allocation2 + $0x31] sm:$0xff]
        %v2587 = vld [vmem:[#allocation2 + $0x39] sm:$0xff]
        %v2588 = vld [vmem:[#allocation2 + $0x41] sm:$0xff]
        %v2589 = vld [vmem:[#allocation2 + $0x49] sm:$0xff]
        %v2590 = vld [vmem:[#allocation2 + $0x51] sm:$0xff]
        %v2591 = vld [vmem:[#allocation2 + $0x59] sm:$0xff]
        %v2592 = vld [vmem:[#allocation2 + $0x61] sm:$0xff]
        %v2593 = vld [vmem:[#allocation2 + $0x69] sm:$0xff]
        %v2594 = vld [vmem:[#allocation2 + $0x71] sm:$0xff]
        %v2595 = vld [vmem:[#allocation2 + $0x79] sm:$0xff]
        %v2596 = vld [vmem:[#allocation2 + $0x81] sm:$0xff]
        %v2597 = vld [vmem:[#allocation2 + $0x89] sm:$0xff]
        %v2598 = vld [vmem:[#allocation2 + $0x91] sm:$0xff]
        %v2599 = vld [vmem:[#allocation2 + $0x99] sm:$0xff]
        %s2600 = scalar_lea.vmem %s1, 44
        %v2601 = vld [vmem:[%s2600] sm:$0xf]
        %v2603 = vsel %vm196, %v2584, 0
        %v2606 = vsel %vm196, %v2585, 0
        %v2609 = vsel %vm196, %v2586, 0
        %v2612 = vsel %vm196, %v2587, 0
        %v2615 = vsel %vm196, %v2588, 0
        %v2618 = vsel %vm196, %v2589, 0
        %v2621 = vsel %vm196, %v2590, 0
        %v2624 = vsel %vm196, %v2591, 0
        %v2627 = vsel %vm196, %v2592, 0
        %v2630 = vsel %vm196, %v2593, 0
        %v2633 = vsel %vm196, %v2594, 0
        %v2636 = vsel %vm196, %v2595, 0
        %v2639 = vsel %vm196, %v2596, 0
        %v2642 = vsel %vm196, %v2597, 0
        %v2645 = vsel %vm196, %v2598, 0
        %v2648 = vsel %vm196, %v2599, 0
        %v2651 = vsel %vm329, %v2601, 0
        %2653 = vmatprep.subr.mxu0 0.0
        %2654 = vmatpush1.msra.mxu0 %v2651
        %2655 = vmatprep.subr.mxu0 0.0
        %2656 = vmatpush1.msra.mxu0 0.0
        %2657 = vmatprep.subr.mxu0 0.0
        %2658 = vmatpush1.msra.mxu0 0.0
        %2659 = vmatprep.subr.mxu0 0.0
        %2660 = vmatpush1.msra.mxu0 0.0
        %2661 = vmatprep.subr.mxu0 0.0
        %2662 = vmatpush1.msra.mxu0 0.0
        %2663 = vmatprep.subr.mxu0 0.0
        %2664 = vmatpush1.msra.mxu0 0.0
        %2665 = vmatprep.subr.mxu0 0.0
        %2666 = vmatpush1.msra.mxu0 0.0
        %2667 = vmatprep.subr.mxu0 0.0
        %2668 = vmatpush1.msra.mxu0 0.0
        %2669 = vmatprep.subr.mxu0 0.0
        %2670 = vmatpush1.msra.mxu0 0.0
        %2671 = vmatprep.subr.mxu0 0.0
        %2672 = vmatpush1.msra.mxu0 0.0
        %2673 = vmatprep.subr.mxu0 0.0
        %2674 = vmatpush1.msra.mxu0 0.0
        %2675 = vmatprep.subr.mxu0 0.0
        %2676 = vmatpush1.msra.mxu0 0.0
        %2677 = vmatprep.subr.mxu0 0.0
        %2678 = vmatpush1.msra.mxu0 0.0
        %2679 = vmatprep.subr.mxu0 0.0
        %2680 = vmatpush1.msra.mxu0 0.0
        %2681 = vmatprep.subr.mxu0 0.0
        %2682 = vmatpush1.msra.mxu0 0.0
        %2683 = vmatprep.subr.mxu0 0.0
        %2684 = vmatpush1.msra.mxu0 0.0
        %2685 = vmatprep.subr.mxu0 0.0
        %2686 = vmatpush1.msra.mxu0 0.0
        %2687 = vmatprep.subr.mxu0 0.0
        %2688 = vmatpush1.msra.mxu0 0.0
        %2689 = vmatprep.subr.mxu0 0.0
        %2690 = vmatpush1.msra.mxu0 0.0
        %2691 = vmatprep.subr.mxu0 0.0
        %2692 = vmatpush1.msra.mxu0 0.0
        %2693 = vmatprep.subr.mxu0 0.0
        %2694 = vmatpush1.msra.mxu0 0.0
        %2695 = vmatprep.subr.mxu0 0.0
        %2696 = vmatpush1.msra.mxu0 0.0
        %2697 = vmatprep.subr.mxu0 0.0
        %2698 = vmatpush1.msra.mxu0 0.0
        %2699 = vmatprep.subr.mxu0 0.0
        %2700 = vmatpush1.msra.mxu0 0.0
        %2701 = vmatprep.subr.mxu0 0.0
        %2702 = vmatpush1.msra.mxu0 0.0
        %2703 = vmatprep.subr.mxu0 0.0
        %2704 = vmatpush1.msra.mxu0 0.0
        %2705 = vmatprep.subr.mxu0 0.0
        %2706 = vmatpush1.msra.mxu0 0.0
        %2707 = vmatprep.subr.mxu0 0.0
        %2708 = vmatpush1.msra.mxu0 0.0
        %2709 = vmatprep.subr.mxu0 0.0
        %2710 = vmatpush1.msra.mxu0 0.0
        %2711 = vmatprep.subr.mxu0 0.0
        %2712 = vmatpush1.msra.mxu0 0.0
        %2713 = vmatprep.subr.mxu0 0.0
        %2714 = vmatpush1.msra.mxu0 0.0
        %2715 = vmatprep.subr.mxu0 0.0
        %2716 = vmatpush1.msra.mxu0 0.0
        %2717 = vmatprep.mubr.f32.mxu0 0.0
        %2718 = vmatmul.mubr.f32.gmra.mrb[0].mxu0 %v2603
        %v2719 = vpop.f32.mrb[0].mxu0
        %v2720 = vadd.f32 0.0, %v2719
        %v2721 = vpop.f32.mrb[0].mxu0
        %2722 = vmatprep.mubr.f32.mxu0 0.0
        %2723 = vmatmul.mubr.f32.gmra.mrb[0].mxu0 %v2606
        %v2724 = vpop.f32.mrb[0].mxu0
        %v2725 = vpop.f32.mrb[0].mxu0
        %2726 = vmatprep.mubr.f32.mxu0 0.0
        %2727 = vmatmul.mubr.f32.gmra.mrb[0].mxu0 %v2609
        %v2728 = vpop.f32.mrb[0].mxu0
        %v2729 = vadd.f32 0.0, %v2728
        %v2730 = vpop.f32.mrb[0].mxu0
        %2731 = vmatprep.mubr.f32.mxu0 0.0
        %2732 = vmatmul.mubr.f32.gmra.mrb[0].mxu0 %v2612
        %v2733 = vpop.f32.mrb[0].mxu0
        %v2734 = vpop.f32.mrb[0].mxu0
        %2735 = vmatprep.mubr.f32.mxu0 0.0
        %2736 = vmatmul.mubr.f32.gmra.mrb[0].mxu0 %v2615
        %v2737 = vpop.f32.mrb[0].mxu0
        %v2738 = vadd.f32 0.0, %v2737
        %v2739 = vpop.f32.mrb[0].mxu0
        %2740 = vmatprep.mubr.f32.mxu0 0.0
        %2741 = vmatmul.mubr.f32.gmra.mrb[0].mxu0 %v2618
        %v2742 = vpop.f32.mrb[0].mxu0
        %v2743 = vpop.f32.mrb[0].mxu0
        %2744 = vmatprep.mubr.f32.mxu0 0.0
        %2745 = vmatmul.mubr.f32.gmra.mrb[0].mxu0 %v2621
        %v2746 = vpop.f32.mrb[0].mxu0
        %v2747 = vadd.f32 0.0, %v2746
        %v2748 = vpop.f32.mrb[0].mxu0
        %2749 = vmatprep.mubr.f32.mxu0 0.0
        %2750 = vmatmul.mubr.f32.gmra.mrb[0].mxu0 %v2624
        %v2751 = vpop.f32.mrb[0].mxu0
        %v2752 = vpop.f32.mrb[0].mxu0
        %2753 = vmatprep.mubr.f32.mxu0 0.0
        %2754 = vmatmul.mubr.f32.gmra.mrb[0].mxu0 %v2627
        %v2755 = vpop.f32.mrb[0].mxu0
        %v2756 = vadd.f32 0.0, %v2755
        %v2757 = vpop.f32.mrb[0].mxu0
        %2758 = vmatprep.mubr.f32.mxu0 0.0
        %2759 = vmatmul.mubr.f32.gmra.mrb[0].mxu0 %v2630
        %v2760 = vpop.f32.mrb[0].mxu0
        %v2761 = vpop.f32.mrb[0].mxu0
        %2762 = vmatprep.mubr.f32.mxu0 0.0
        %2763 = vmatmul.mubr.f32.gmra.mrb[0].mxu0 %v2633
        %v2764 = vpop.f32.mrb[0].mxu0
        %v2765 = vadd.f32 0.0, %v2764
        %v2766 = vpop.f32.mrb[0].mxu0
        %2767 = vmatprep.mubr.f32.mxu0 0.0
        %2768 = vmatmul.mubr.f32.gmra.mrb[0].mxu0 %v2636
        %v2769 = vpop.f32.mrb[0].mxu0
        %v2770 = vpop.f32.mrb[0].mxu0
        %2771 = vmatprep.mubr.f32.mxu0 0.0
        %2772 = vmatmul.mubr.f32.gmra.mrb[0].mxu0 %v2639
        %v2773 = vpop.f32.mrb[0].mxu0
        %v2774 = vadd.f32 0.0, %v2773
        %v2775 = vpop.f32.mrb[0].mxu0
        %2776 = vmatprep.mubr.f32.mxu0 0.0
        %2777 = vmatmul.mubr.f32.gmra.mrb[0].mxu0 %v2642
        %v2778 = vpop.f32.mrb[0].mxu0
        %v2779 = vpop.f32.mrb[0].mxu0
        %2780 = vmatprep.mubr.f32.mxu0 0.0
        %2781 = vmatmul.mubr.f32.gmra.mrb[0].mxu0 %v2645
        %v2782 = vpop.f32.mrb[0].mxu0
        %v2783 = vadd.f32 0.0, %v2782
        %v2784 = vpop.f32.mrb[0].mxu0
        %2785 = vmatprep.mubr.f32.mxu0 0.0
        %2786 = vmatmul.mubr.f32.gmra.mrb[0].mxu0 %v2648
        %v2787 = vpop.f32.mrb[0].mxu0
        %v2788 = vpop.f32.mrb[0].mxu0
        %2789 = vdwg.mxu0
        %v2790 = vadd.f32 %v2576, %v2720
        %v2791 = vadd.f32 %v2577, %v2729
        %v2792 = vadd.f32 %v2578, %v2738
        %v2793 = vadd.f32 %v2579, %v2747
        %v2794 = vadd.f32 %v2580, %v2756
        %v2795 = vadd.f32 %v2581, %v2765
        %v2796 = vadd.f32 %v2582, %v2774
        %v2797 = vadd.f32 %v2583, %v2783
        %v2798 = vld [vmem:[#allocation2 + $0x22] sm:$0xff]
        %v2799 = vld [vmem:[#allocation2 + $0x2a] sm:$0xff]
        %v2800 = vld [vmem:[#allocation2 + $0x32] sm:$0xff]
        %v2801 = vld [vmem:[#allocation2 + $0x3a] sm:$0xff]
        %v2802 = vld [vmem:[#allocation2 + $0x42] sm:$0xff]
        %v2803 = vld [vmem:[#allocation2 + $0x4a] sm:$0xff]
        %v2804 = vld [vmem:[#allocation2 + $0x52] sm:$0xff]
        %v2805 = vld [vmem:[#allocation2 + $0x5a] sm:$0xff]
        %v2806 = vld [vmem:[#allocation2 + $0x62] sm:$0xff]
        %v2807 = vld [vmem:[#allocation2 + $0x6a] sm:$0xff]
        %v2808 = vld [vmem:[#allocation2 + $0x72] sm:$0xff]
        %v2809 = vld [vmem:[#allocation2 + $0x7a] sm:$0xff]
        %v2810 = vld [vmem:[#allocation2 + $0x82] sm:$0xff]
        %v2811 = vld [vmem:[#allocation2 + $0x8a] sm:$0xff]
        %v2812 = vld [vmem:[#allocation2 + $0x92] sm:$0xff]
        %v2813 = vld [vmem:[#allocation2 + $0x9a] sm:$0xff]
        %s2814 = scalar_lea.vmem %s1, 48
        %v2815 = vld [vmem:[%s2814] sm:$0xf]
        %v2817 = vsel %vm196, %v2798, 0
        %v2820 = vsel %vm196, %v2799, 0
        %v2823 = vsel %vm196, %v2800, 0
        %v2826 = vsel %vm196, %v2801, 0
        %v2829 = vsel %vm196, %v2802, 0
        %v2832 = vsel %vm196, %v2803, 0
        %v2835 = vsel %vm196, %v2804, 0
        %v2838 = vsel %vm196, %v2805, 0
        %v2841 = vsel %vm196, %v2806, 0
        %v2844 = vsel %vm196, %v2807, 0
        %v2847 = vsel %vm196, %v2808, 0
        %v2850 = vsel %vm196, %v2809, 0
        %v2853 = vsel %vm196, %v2810, 0
        %v2856 = vsel %vm196, %v2811, 0
        %v2859 = vsel %vm196, %v2812, 0
        %v2862 = vsel %vm196, %v2813, 0
        %v2865 = vsel %vm329, %v2815, 0
        %2867 = vmatprep.subr.mxu0 0.0
        %2868 = vmatpush1.msra.mxu0 %v2865
        %2869 = vmatprep.subr.mxu0 0.0
        %2870 = vmatpush1.msra.mxu0 0.0
        %2871 = vmatprep.subr.mxu0 0.0
        %2872 = vmatpush1.msra.mxu0 0.0
        %2873 = vmatprep.subr.mxu0 0.0
        %2874 = vmatpush1.msra.mxu0 0.0
        %2875 = vmatprep.subr.mxu0 0.0
        %2876 = vmatpush1.msra.mxu0 0.0
        %2877 = vmatprep.subr.mxu0 0.0
        %2878 = vmatpush1.msra.mxu0 0.0
        %2879 = vmatprep.subr.mxu0 0.0
        %2880 = vmatpush1.msra.mxu0 0.0
        %2881 = vmatprep.subr.mxu0 0.0
        %2882 = vmatpush1.msra.mxu0 0.0
        %2883 = vmatprep.subr.mxu0 0.0
        %2884 = vmatpush1.msra.mxu0 0.0
        %2885 = vmatprep.subr.mxu0 0.0
        %2886 = vmatpush1.msra.mxu0 0.0
        %2887 = vmatprep.subr.mxu0 0.0
        %2888 = vmatpush1.msra.mxu0 0.0
        %2889 = vmatprep.subr.mxu0 0.0
        %2890 = vmatpush1.msra.mxu0 0.0
        %2891 = vmatprep.subr.mxu0 0.0
        %2892 = vmatpush1.msra.mxu0 0.0
        %2893 = vmatprep.subr.mxu0 0.0
        %2894 = vmatpush1.msra.mxu0 0.0
        %2895 = vmatprep.subr.mxu0 0.0
        %2896 = vmatpush1.msra.mxu0 0.0
        %2897 = vmatprep.subr.mxu0 0.0
        %2898 = vmatpush1.msra.mxu0 0.0
        %2899 = vmatprep.subr.mxu0 0.0
        %2900 = vmatpush1.msra.mxu0 0.0
        %2901 = vmatprep.subr.mxu0 0.0
        %2902 = vmatpush1.msra.mxu0 0.0
        %2903 = vmatprep.subr.mxu0 0.0
        %2904 = vmatpush1.msra.mxu0 0.0
        %2905 = vmatprep.subr.mxu0 0.0
        %2906 = vmatpush1.msra.mxu0 0.0
        %2907 = vmatprep.subr.mxu0 0.0
        %2908 = vmatpush1.msra.mxu0 0.0
        %2909 = vmatprep.subr.mxu0 0.0
        %2910 = vmatpush1.msra.mxu0 0.0
        %2911 = vmatprep.subr.mxu0 0.0
        %2912 = vmatpush1.msra.mxu0 0.0
        %2913 = vmatprep.subr.mxu0 0.0
        %2914 = vmatpush1.msra.mxu0 0.0
        %2915 = vmatprep.subr.mxu0 0.0
        %2916 = vmatpush1.msra.mxu0 0.0
        %2917 = vmatprep.subr.mxu0 0.0
        %2918 = vmatpush1.msra.mxu0 0.0
        %2919 = vmatprep.subr.mxu0 0.0
        %2920 = vmatpush1.msra.mxu0 0.0
        %2921 = vmatprep.subr.mxu0 0.0
        %2922 = vmatpush1.msra.mxu0 0.0
        %2923 = vmatprep.subr.mxu0 0.0
        %2924 = vmatpush1.msra.mxu0 0.0
        %2925 = vmatprep.subr.mxu0 0.0
        %2926 = vmatpush1.msra.mxu0 0.0
        %2927 = vmatprep.subr.mxu0 0.0
        %2928 = vmatpush1.msra.mxu0 0.0
        %2929 = vmatprep.subr.mxu0 0.0
        %2930 = vmatpush1.msra.mxu0 0.0
        %2931 = vmatprep.mubr.f32.mxu0 0.0
        %2932 = vmatmul.mubr.f32.gmra.mrb[0].mxu0 %v2817
        %v2933 = vpop.f32.mrb[0].mxu0
        %v2934 = vadd.f32 0.0, %v2933
        %v2935 = vpop.f32.mrb[0].mxu0
        %2936 = vmatprep.mubr.f32.mxu0 0.0
        %2937 = vmatmul.mubr.f32.gmra.mrb[0].mxu0 %v2820
        %v2938 = vpop.f32.mrb[0].mxu0
        %v2939 = vpop.f32.mrb[0].mxu0
        %2940 = vmatprep.mubr.f32.mxu0 0.0
        %2941 = vmatmul.mubr.f32.gmra.mrb[0].mxu0 %v2823
        %v2942 = vpop.f32.mrb[0].mxu0
        %v2943 = vadd.f32 0.0, %v2942
        %v2944 = vpop.f32.mrb[0].mxu0
        %2945 = vmatprep.mubr.f32.mxu0 0.0
        %2946 = vmatmul.mubr.f32.gmra.mrb[0].mxu0 %v2826
        %v2947 = vpop.f32.mrb[0].mxu0
        %v2948 = vpop.f32.mrb[0].mxu0
        %2949 = vmatprep.mubr.f32.mxu0 0.0
        %2950 = vmatmul.mubr.f32.gmra.mrb[0].mxu0 %v2829
        %v2951 = vpop.f32.mrb[0].mxu0
        %v2952 = vadd.f32 0.0, %v2951
        %v2953 = vpop.f32.mrb[0].mxu0
        %2954 = vmatprep.mubr.f32.mxu0 0.0
        %2955 = vmatmul.mubr.f32.gmra.mrb[0].mxu0 %v2832
        %v2956 = vpop.f32.mrb[0].mxu0
        %v2957 = vpop.f32.mrb[0].mxu0
        %2958 = vmatprep.mubr.f32.mxu0 0.0
        %2959 = vmatmul.mubr.f32.gmra.mrb[0].mxu0 %v2835
        %v2960 = vpop.f32.mrb[0].mxu0
        %v2961 = vadd.f32 0.0, %v2960
        %v2962 = vpop.f32.mrb[0].mxu0
        %2963 = vmatprep.mubr.f32.mxu0 0.0
        %2964 = vmatmul.mubr.f32.gmra.mrb[0].mxu0 %v2838
        %v2965 = vpop.f32.mrb[0].mxu0
        %v2966 = vpop.f32.mrb[0].mxu0
        %2967 = vmatprep.mubr.f32.mxu0 0.0
        %2968 = vmatmul.mubr.f32.gmra.mrb[0].mxu0 %v2841
        %v2969 = vpop.f32.mrb[0].mxu0
        %v2970 = vadd.f32 0.0, %v2969
        %v2971 = vpop.f32.mrb[0].mxu0
        %2972 = vmatprep.mubr.f32.mxu0 0.0
        %2973 = vmatmul.mubr.f32.gmra.mrb[0].mxu0 %v2844
        %v2974 = vpop.f32.mrb[0].mxu0
        %v2975 = vpop.f32.mrb[0].mxu0
        %2976 = vmatprep.mubr.f32.mxu0 0.0
        %2977 = vmatmul.mubr.f32.gmra.mrb[0].mxu0 %v2847
        %v2978 = vpop.f32.mrb[0].mxu0
        %v2979 = vadd.f32 0.0, %v2978
        %v2980 = vpop.f32.mrb[0].mxu0
        %2981 = vmatprep.mubr.f32.mxu0 0.0
        %2982 = vmatmul.mubr.f32.gmra.mrb[0].mxu0 %v2850
        %v2983 = vpop.f32.mrb[0].mxu0
        %v2984 = vpop.f32.mrb[0].mxu0
        %2985 = vmatprep.mubr.f32.mxu0 0.0
        %2986 = vmatmul.mubr.f32.gmra.mrb[0].mxu0 %v2853
        %v2987 = vpop.f32.mrb[0].mxu0
        %v2988 = vadd.f32 0.0, %v2987
        %v2989 = vpop.f32.mrb[0].mxu0
        %2990 = vmatprep.mubr.f32.mxu0 0.0
        %2991 = vmatmul.mubr.f32.gmra.mrb[0].mxu0 %v2856
        %v2992 = vpop.f32.mrb[0].mxu0
        %v2993 = vpop.f32.mrb[0].mxu0
        %2994 = vmatprep.mubr.f32.mxu0 0.0
        %2995 = vmatmul.mubr.f32.gmra.mrb[0].mxu0 %v2859
        %v2996 = vpop.f32.mrb[0].mxu0
        %v2997 = vadd.f32 0.0, %v2996
        %v2998 = vpop.f32.mrb[0].mxu0
        %2999 = vmatprep.mubr.f32.mxu0 0.0
        %3000 = vmatmul.mubr.f32.gmra.mrb[0].mxu0 %v2862
        %v3001 = vpop.f32.mrb[0].mxu0
        %v3002 = vpop.f32.mrb[0].mxu0
        %3003 = vdwg.mxu0
        %v3004 = vadd.f32 %v2790, %v2934
        %v3005 = vadd.f32 %v2791, %v2943
        %v3006 = vadd.f32 %v2792, %v2952
        %v3007 = vadd.f32 %v2793, %v2961
        %v3008 = vadd.f32 %v2794, %v2970
        %v3009 = vadd.f32 %v2795, %v2979
        %v3010 = vadd.f32 %v2796, %v2988
        %v3011 = vadd.f32 %v2797, %v2997
        %v3012 = vld [vmem:[#allocation2 + $0x23] sm:$0xff]
        %v3013 = vld [vmem:[#allocation2 + $0x2b] sm:$0xff]
        %v3014 = vld [vmem:[#allocation2 + $0x33] sm:$0xff]
        %v3015 = vld [vmem:[#allocation2 + $0x3b] sm:$0xff]
        %v3016 = vld [vmem:[#allocation2 + $0x43] sm:$0xff]
        %v3017 = vld [vmem:[#allocation2 + $0x4b] sm:$0xff]
        %v3018 = vld [vmem:[#allocation2 + $0x53] sm:$0xff]
        %v3019 = vld [vmem:[#allocation2 + $0x5b] sm:$0xff]
        %v3020 = vld [vmem:[#allocation2 + $0x63] sm:$0xff]
        %v3021 = vld [vmem:[#allocation2 + $0x6b] sm:$0xff]
        %v3022 = vld [vmem:[#allocation2 + $0x73] sm:$0xff]
        %v3023 = vld [vmem:[#allocation2 + $0x7b] sm:$0xff]
        %v3024 = vld [vmem:[#allocation2 + $0x83] sm:$0xff]
        %v3025 = vld [vmem:[#allocation2 + $0x8b] sm:$0xff]
        %v3026 = vld [vmem:[#allocation2 + $0x93] sm:$0xff]
        %v3027 = vld [vmem:[#allocation2 + $0x9b] sm:$0xff]
        %s3028 = scalar_lea.vmem %s1, 52
        %v3029 = vld [vmem:[%s3028] sm:$0xf]
        %v3031 = vsel %vm196, %v3012, 0
        %v3034 = vsel %vm196, %v3013, 0
        %v3037 = vsel %vm196, %v3014, 0
        %v3040 = vsel %vm196, %v3015, 0
        %v3043 = vsel %vm196, %v3016, 0
        %v3046 = vsel %vm196, %v3017, 0
        %v3049 = vsel %vm196, %v3018, 0
        %v3052 = vsel %vm196, %v3019, 0
        %v3055 = vsel %vm196, %v3020, 0
        %v3058 = vsel %vm196, %v3021, 0
        %v3061 = vsel %vm196, %v3022, 0
        %v3064 = vsel %vm196, %v3023, 0
        %v3067 = vsel %vm196, %v3024, 0
        %v3070 = vsel %vm196, %v3025, 0
        %v3073 = vsel %vm196, %v3026, 0
        %v3076 = vsel %vm196, %v3027, 0
        %v3079 = vsel %vm329, %v3029, 0
        %3081 = vmatprep.subr.mxu0 0.0
        %3082 = vmatpush1.msra.mxu0 %v3079
        %3083 = vmatprep.subr.mxu0 0.0
        %3084 = vmatpush1.msra.mxu0 0.0
        %3085 = vmatprep.subr.mxu0 0.0
        %3086 = vmatpush1.msra.mxu0 0.0
        %3087 = vmatprep.subr.mxu0 0.0
        %3088 = vmatpush1.msra.mxu0 0.0
        %3089 = vmatprep.subr.mxu0 0.0
        %3090 = vmatpush1.msra.mxu0 0.0
        %3091 = vmatprep.subr.mxu0 0.0
        %3092 = vmatpush1.msra.mxu0 0.0
        %3093 = vmatprep.subr.mxu0 0.0
        %3094 = vmatpush1.msra.mxu0 0.0
        %3095 = vmatprep.subr.mxu0 0.0
        %3096 = vmatpush1.msra.mxu0 0.0
        %3097 = vmatprep.subr.mxu0 0.0
        %3098 = vmatpush1.msra.mxu0 0.0
        %3099 = vmatprep.subr.mxu0 0.0
        %3100 = vmatpush1.msra.mxu0 0.0
        %3101 = vmatprep.subr.mxu0 0.0
        %3102 = vmatpush1.msra.mxu0 0.0
        %3103 = vmatprep.subr.mxu0 0.0
        %3104 = vmatpush1.msra.mxu0 0.0
        %3105 = vmatprep.subr.mxu0 0.0
        %3106 = vmatpush1.msra.mxu0 0.0
        %3107 = vmatprep.subr.mxu0 0.0
        %3108 = vmatpush1.msra.mxu0 0.0
        %3109 = vmatprep.subr.mxu0 0.0
        %3110 = vmatpush1.msra.mxu0 0.0
        %3111 = vmatprep.subr.mxu0 0.0
        %3112 = vmatpush1.msra.mxu0 0.0
        %3113 = vmatprep.subr.mxu0 0.0
        %3114 = vmatpush1.msra.mxu0 0.0
        %3115 = vmatprep.subr.mxu0 0.0
        %3116 = vmatpush1.msra.mxu0 0.0
        %3117 = vmatprep.subr.mxu0 0.0
        %3118 = vmatpush1.msra.mxu0 0.0
        %3119 = vmatprep.subr.mxu0 0.0
        %3120 = vmatpush1.msra.mxu0 0.0
        %3121 = vmatprep.subr.mxu0 0.0
        %3122 = vmatpush1.msra.mxu0 0.0
        %3123 = vmatprep.subr.mxu0 0.0
        %3124 = vmatpush1.msra.mxu0 0.0
        %3125 = vmatprep.subr.mxu0 0.0
        %3126 = vmatpush1.msra.mxu0 0.0
        %3127 = vmatprep.subr.mxu0 0.0
        %3128 = vmatpush1.msra.mxu0 0.0
        %3129 = vmatprep.subr.mxu0 0.0
        %3130 = vmatpush1.msra.mxu0 0.0
        %3131 = vmatprep.subr.mxu0 0.0
        %3132 = vmatpush1.msra.mxu0 0.0
        %3133 = vmatprep.subr.mxu0 0.0
        %3134 = vmatpush1.msra.mxu0 0.0
        %3135 = vmatprep.subr.mxu0 0.0
        %3136 = vmatpush1.msra.mxu0 0.0
        %3137 = vmatprep.subr.mxu0 0.0
        %3138 = vmatpush1.msra.mxu0 0.0
        %3139 = vmatprep.subr.mxu0 0.0
        %3140 = vmatpush1.msra.mxu0 0.0
        %3141 = vmatprep.subr.mxu0 0.0
        %3142 = vmatpush1.msra.mxu0 0.0
        %3143 = vmatprep.subr.mxu0 0.0
        %3144 = vmatpush1.msra.mxu0 0.0
        %3145 = vmatprep.mubr.f32.mxu0 0.0
        %3146 = vmatmul.mubr.f32.gmra.mrb[0].mxu0 %v3031
        %v3147 = vpop.f32.mrb[0].mxu0
        %v3148 = vadd.f32 0.0, %v3147
        %v3149 = vpop.f32.mrb[0].mxu0
        %3150 = vmatprep.mubr.f32.mxu0 0.0
        %3151 = vmatmul.mubr.f32.gmra.mrb[0].mxu0 %v3034
        %v3152 = vpop.f32.mrb[0].mxu0
        %v3153 = vpop.f32.mrb[0].mxu0
        %3154 = vmatprep.mubr.f32.mxu0 0.0
        %3155 = vmatmul.mubr.f32.gmra.mrb[0].mxu0 %v3037
        %v3156 = vpop.f32.mrb[0].mxu0
        %v3157 = vadd.f32 0.0, %v3156
        %v3158 = vpop.f32.mrb[0].mxu0
        %3159 = vmatprep.mubr.f32.mxu0 0.0
        %3160 = vmatmul.mubr.f32.gmra.mrb[0].mxu0 %v3040
        %v3161 = vpop.f32.mrb[0].mxu0
        %v3162 = vpop.f32.mrb[0].mxu0
        %3163 = vmatprep.mubr.f32.mxu0 0.0
        %3164 = vmatmul.mubr.f32.gmra.mrb[0].mxu0 %v3043
        %v3165 = vpop.f32.mrb[0].mxu0
        %v3166 = vadd.f32 0.0, %v3165
        %v3167 = vpop.f32.mrb[0].mxu0
        %3168 = vmatprep.mubr.f32.mxu0 0.0
        %3169 = vmatmul.mubr.f32.gmra.mrb[0].mxu0 %v3046
        %v3170 = vpop.f32.mrb[0].mxu0
        %v3171 = vpop.f32.mrb[0].mxu0
        %3172 = vmatprep.mubr.f32.mxu0 0.0
        %3173 = vmatmul.mubr.f32.gmra.mrb[0].mxu0 %v3049
        %v3174 = vpop.f32.mrb[0].mxu0
        %v3175 = vadd.f32 0.0, %v3174
        %v3176 = vpop.f32.mrb[0].mxu0
        %3177 = vmatprep.mubr.f32.mxu0 0.0
        %3178 = vmatmul.mubr.f32.gmra.mrb[0].mxu0 %v3052
        %v3179 = vpop.f32.mrb[0].mxu0
        %v3180 = vpop.f32.mrb[0].mxu0
        %3181 = vmatprep.mubr.f32.mxu0 0.0
        %3182 = vmatmul.mubr.f32.gmra.mrb[0].mxu0 %v3055
        %v3183 = vpop.f32.mrb[0].mxu0
        %v3184 = vadd.f32 0.0, %v3183
        %v3185 = vpop.f32.mrb[0].mxu0
        %3186 = vmatprep.mubr.f32.mxu0 0.0
        %3187 = vmatmul.mubr.f32.gmra.mrb[0].mxu0 %v3058
        %v3188 = vpop.f32.mrb[0].mxu0
        %v3189 = vpop.f32.mrb[0].mxu0
        %3190 = vmatprep.mubr.f32.mxu0 0.0
        %3191 = vmatmul.mubr.f32.gmra.mrb[0].mxu0 %v3061
        %v3192 = vpop.f32.mrb[0].mxu0
        %v3193 = vadd.f32 0.0, %v3192
        %v3194 = vpop.f32.mrb[0].mxu0
        %3195 = vmatprep.mubr.f32.mxu0 0.0
        %3196 = vmatmul.mubr.f32.gmra.mrb[0].mxu0 %v3064
        %v3197 = vpop.f32.mrb[0].mxu0
        %v3198 = vpop.f32.mrb[0].mxu0
        %3199 = vmatprep.mubr.f32.mxu0 0.0
        %3200 = vmatmul.mubr.f32.gmra.mrb[0].mxu0 %v3067
        %v3201 = vpop.f32.mrb[0].mxu0
        %v3202 = vadd.f32 0.0, %v3201
        %v3203 = vpop.f32.mrb[0].mxu0
        %3204 = vmatprep.mubr.f32.mxu0 0.0
        %3205 = vmatmul.mubr.f32.gmra.mrb[0].mxu0 %v3070
        %v3206 = vpop.f32.mrb[0].mxu0
        %v3207 = vpop.f32.mrb[0].mxu0
        %3208 = vmatprep.mubr.f32.mxu0 0.0
        %3209 = vmatmul.mubr.f32.gmra.mrb[0].mxu0 %v3073
        %v3210 = vpop.f32.mrb[0].mxu0
        %v3211 = vadd.f32 0.0, %v3210
        %v3212 = vpop.f32.mrb[0].mxu0
        %3213 = vmatprep.mubr.f32.mxu0 0.0
        %3214 = vmatmul.mubr.f32.gmra.mrb[0].mxu0 %v3076
        %v3215 = vpop.f32.mrb[0].mxu0
        %v3216 = vpop.f32.mrb[0].mxu0
        %3217 = vdwg.mxu0
        %v3218 = vadd.f32 %v3004, %v3148
        %v3219 = vadd.f32 %v3005, %v3157
        %v3220 = vadd.f32 %v3006, %v3166
        %v3221 = vadd.f32 %v3007, %v3175
        %v3222 = vadd.f32 %v3008, %v3184
        %v3223 = vadd.f32 %v3009, %v3193
        %v3224 = vadd.f32 %v3010, %v3202
        %v3225 = vadd.f32 %v3011, %v3211
        %v3226 = vld [vmem:[#allocation2 + $0x24] sm:$0xff]
        %v3227 = vld [vmem:[#allocation2 + $0x2c] sm:$0xff]
        %v3228 = vld [vmem:[#allocation2 + $0x34] sm:$0xff]
        %v3229 = vld [vmem:[#allocation2 + $0x3c] sm:$0xff]
        %v3230 = vld [vmem:[#allocation2 + $0x44] sm:$0xff]
        %v3231 = vld [vmem:[#allocation2 + $0x4c] sm:$0xff]
        %v3232 = vld [vmem:[#allocation2 + $0x54] sm:$0xff]
        %v3233 = vld [vmem:[#allocation2 + $0x5c] sm:$0xff]
        %v3234 = vld [vmem:[#allocation2 + $0x64] sm:$0xff]
        %v3235 = vld [vmem:[#allocation2 + $0x6c] sm:$0xff]
        %v3236 = vld [vmem:[#allocation2 + $0x74] sm:$0xff]
        %v3237 = vld [vmem:[#allocation2 + $0x7c] sm:$0xff]
        %v3238 = vld [vmem:[#allocation2 + $0x84] sm:$0xff]
        %v3239 = vld [vmem:[#allocation2 + $0x8c] sm:$0xff]
        %v3240 = vld [vmem:[#allocation2 + $0x94] sm:$0xff]
        %v3241 = vld [vmem:[#allocation2 + $0x9c] sm:$0xff]
        %s3242 = scalar_lea.vmem %s1, 56
        %v3243 = vld [vmem:[%s3242] sm:$0xf]
        %v3245 = vsel %vm196, %v3226, 0
        %v3248 = vsel %vm196, %v3227, 0
        %v3251 = vsel %vm196, %v3228, 0
        %v3254 = vsel %vm196, %v3229, 0
        %v3257 = vsel %vm196, %v3230, 0
        %v3260 = vsel %vm196, %v3231, 0
        %v3263 = vsel %vm196, %v3232, 0
        %v3266 = vsel %vm196, %v3233, 0
        %v3269 = vsel %vm196, %v3234, 0
        %v3272 = vsel %vm196, %v3235, 0
        %v3275 = vsel %vm196, %v3236, 0
        %v3278 = vsel %vm196, %v3237, 0
        %v3281 = vsel %vm196, %v3238, 0
        %v3284 = vsel %vm196, %v3239, 0
        %v3287 = vsel %vm196, %v3240, 0
        %v3290 = vsel %vm196, %v3241, 0
        %v3293 = vsel %vm329, %v3243, 0
        %3295 = vmatprep.subr.mxu0 0.0
        %3296 = vmatpush1.msra.mxu0 %v3293
        %3297 = vmatprep.subr.mxu0 0.0
        %3298 = vmatpush1.msra.mxu0 0.0
        %3299 = vmatprep.subr.mxu0 0.0
        %3300 = vmatpush1.msra.mxu0 0.0
        %3301 = vmatprep.subr.mxu0 0.0
        %3302 = vmatpush1.msra.mxu0 0.0
        %3303 = vmatprep.subr.mxu0 0.0
        %3304 = vmatpush1.msra.mxu0 0.0
        %3305 = vmatprep.subr.mxu0 0.0
        %3306 = vmatpush1.msra.mxu0 0.0
        %3307 = vmatprep.subr.mxu0 0.0
        %3308 = vmatpush1.msra.mxu0 0.0
        %3309 = vmatprep.subr.mxu0 0.0
        %3310 = vmatpush1.msra.mxu0 0.0
        %3311 = vmatprep.subr.mxu0 0.0
        %3312 = vmatpush1.msra.mxu0 0.0
        %3313 = vmatprep.subr.mxu0 0.0
        %3314 = vmatpush1.msra.mxu0 0.0
        %3315 = vmatprep.subr.mxu0 0.0
        %3316 = vmatpush1.msra.mxu0 0.0
        %3317 = vmatprep.subr.mxu0 0.0
        %3318 = vmatpush1.msra.mxu0 0.0
        %3319 = vmatprep.subr.mxu0 0.0
        %3320 = vmatpush1.msra.mxu0 0.0
        %3321 = vmatprep.subr.mxu0 0.0
        %3322 = vmatpush1.msra.mxu0 0.0
        %3323 = vmatprep.subr.mxu0 0.0
        %3324 = vmatpush1.msra.mxu0 0.0
        %3325 = vmatprep.subr.mxu0 0.0
        %3326 = vmatpush1.msra.mxu0 0.0
        %3327 = vmatprep.subr.mxu0 0.0
        %3328 = vmatpush1.msra.mxu0 0.0
        %3329 = vmatprep.subr.mxu0 0.0
        %3330 = vmatpush1.msra.mxu0 0.0
        %3331 = vmatprep.subr.mxu0 0.0
        %3332 = vmatpush1.msra.mxu0 0.0
        %3333 = vmatprep.subr.mxu0 0.0
        %3334 = vmatpush1.msra.mxu0 0.0
        %3335 = vmatprep.subr.mxu0 0.0
        %3336 = vmatpush1.msra.mxu0 0.0
        %3337 = vmatprep.subr.mxu0 0.0
        %3338 = vmatpush1.msra.mxu0 0.0
        %3339 = vmatprep.subr.mxu0 0.0
        %3340 = vmatpush1.msra.mxu0 0.0
        %3341 = vmatprep.subr.mxu0 0.0
        %3342 = vmatpush1.msra.mxu0 0.0
        %3343 = vmatprep.subr.mxu0 0.0
        %3344 = vmatpush1.msra.mxu0 0.0
        %3345 = vmatprep.subr.mxu0 0.0
        %3346 = vmatpush1.msra.mxu0 0.0
        %3347 = vmatprep.subr.mxu0 0.0
        %3348 = vmatpush1.msra.mxu0 0.0
        %3349 = vmatprep.subr.mxu0 0.0
        %3350 = vmatpush1.msra.mxu0 0.0
        %3351 = vmatprep.subr.mxu0 0.0
        %3352 = vmatpush1.msra.mxu0 0.0
        %3353 = vmatprep.subr.mxu0 0.0
        %3354 = vmatpush1.msra.mxu0 0.0
        %3355 = vmatprep.subr.mxu0 0.0
        %3356 = vmatpush1.msra.mxu0 0.0
        %3357 = vmatprep.subr.mxu0 0.0
        %3358 = vmatpush1.msra.mxu0 0.0
        %3359 = vmatprep.mubr.f32.mxu0 0.0
        %3360 = vmatmul.mubr.f32.gmra.mrb[0].mxu0 %v3245
        %v3361 = vpop.f32.mrb[0].mxu0
        %v3362 = vadd.f32 0.0, %v3361
        %v3363 = vpop.f32.mrb[0].mxu0
        %3364 = vmatprep.mubr.f32.mxu0 0.0
        %3365 = vmatmul.mubr.f32.gmra.mrb[0].mxu0 %v3248
        %v3366 = vpop.f32.mrb[0].mxu0
        %v3367 = vpop.f32.mrb[0].mxu0
        %3368 = vmatprep.mubr.f32.mxu0 0.0
        %3369 = vmatmul.mubr.f32.gmra.mrb[0].mxu0 %v3251
        %v3370 = vpop.f32.mrb[0].mxu0
        %v3371 = vadd.f32 0.0, %v3370
        %v3372 = vpop.f32.mrb[0].mxu0
        %3373 = vmatprep.mubr.f32.mxu0 0.0
        %3374 = vmatmul.mubr.f32.gmra.mrb[0].mxu0 %v3254
        %v3375 = vpop.f32.mrb[0].mxu0
        %v3376 = vpop.f32.mrb[0].mxu0
        %3377 = vmatprep.mubr.f32.mxu0 0.0
        %3378 = vmatmul.mubr.f32.gmra.mrb[0].mxu0 %v3257
        %v3379 = vpop.f32.mrb[0].mxu0
        %v3380 = vadd.f32 0.0, %v3379
        %v3381 = vpop.f32.mrb[0].mxu0
        %3382 = vmatprep.mubr.f32.mxu0 0.0
        %3383 = vmatmul.mubr.f32.gmra.mrb[0].mxu0 %v3260
        %v3384 = vpop.f32.mrb[0].mxu0
        %v3385 = vpop.f32.mrb[0].mxu0
        %3386 = vmatprep.mubr.f32.mxu0 0.0
        %3387 = vmatmul.mubr.f32.gmra.mrb[0].mxu0 %v3263
        %v3388 = vpop.f32.mrb[0].mxu0
        %v3389 = vadd.f32 0.0, %v3388
        %v3390 = vpop.f32.mrb[0].mxu0
        %3391 = vmatprep.mubr.f32.mxu0 0.0
        %3392 = vmatmul.mubr.f32.gmra.mrb[0].mxu0 %v3266
        %v3393 = vpop.f32.mrb[0].mxu0
        %v3394 = vpop.f32.mrb[0].mxu0
        %3395 = vmatprep.mubr.f32.mxu0 0.0
        %3396 = vmatmul.mubr.f32.gmra.mrb[0].mxu0 %v3269
        %v3397 = vpop.f32.mrb[0].mxu0
        %v3398 = vadd.f32 0.0, %v3397
        %v3399 = vpop.f32.mrb[0].mxu0
        %3400 = vmatprep.mubr.f32.mxu0 0.0
        %3401 = vmatmul.mubr.f32.gmra.mrb[0].mxu0 %v3272
        %v3402 = vpop.f32.mrb[0].mxu0
        %v3403 = vpop.f32.mrb[0].mxu0
        %3404 = vmatprep.mubr.f32.mxu0 0.0
        %3405 = vmatmul.mubr.f32.gmra.mrb[0].mxu0 %v3275
        %v3406 = vpop.f32.mrb[0].mxu0
        %v3407 = vadd.f32 0.0, %v3406
        %v3408 = vpop.f32.mrb[0].mxu0
        %3409 = vmatprep.mubr.f32.mxu0 0.0
        %3410 = vmatmul.mubr.f32.gmra.mrb[0].mxu0 %v3278
        %v3411 = vpop.f32.mrb[0].mxu0
        %v3412 = vpop.f32.mrb[0].mxu0
        %3413 = vmatprep.mubr.f32.mxu0 0.0
        %3414 = vmatmul.mubr.f32.gmra.mrb[0].mxu0 %v3281
        %v3415 = vpop.f32.mrb[0].mxu0
        %v3416 = vadd.f32 0.0, %v3415
        %v3417 = vpop.f32.mrb[0].mxu0
        %3418 = vmatprep.mubr.f32.mxu0 0.0
        %3419 = vmatmul.mubr.f32.gmra.mrb[0].mxu0 %v3284
        %v3420 = vpop.f32.mrb[0].mxu0
        %v3421 = vpop.f32.mrb[0].mxu0
        %3422 = vmatprep.mubr.f32.mxu0 0.0
        %3423 = vmatmul.mubr.f32.gmra.mrb[0].mxu0 %v3287
        %v3424 = vpop.f32.mrb[0].mxu0
        %v3425 = vadd.f32 0.0, %v3424
        %v3426 = vpop.f32.mrb[0].mxu0
        %3427 = vmatprep.mubr.f32.mxu0 0.0
        %3428 = vmatmul.mubr.f32.gmra.mrb[0].mxu0 %v3290
        %v3429 = vpop.f32.mrb[0].mxu0
        %v3430 = vpop.f32.mrb[0].mxu0
        %3431 = vdwg.mxu0
        %v3432 = vadd.f32 %v3218, %v3362
        %v3433 = vadd.f32 %v3219, %v3371
        %v3434 = vadd.f32 %v3220, %v3380
        %v3435 = vadd.f32 %v3221, %v3389
        %v3436 = vadd.f32 %v3222, %v3398
        %v3437 = vadd.f32 %v3223, %v3407
        %v3438 = vadd.f32 %v3224, %v3416
        %v3439 = vadd.f32 %v3225, %v3425
        %v3440 = vld [vmem:[#allocation2 + $0x30] sm:$0xff]
        %v3441 = vld [vmem:[#allocation2 + $0x38] sm:$0xff]
        %v3442 = vld [vmem:[#allocation2 + $0x40] sm:$0xff]
        %v3443 = vld [vmem:[#allocation2 + $0x48] sm:$0xff]
        %v3444 = vld [vmem:[#allocation2 + $0x50] sm:$0xff]
        %v3445 = vld [vmem:[#allocation2 + $0x58] sm:$0xff]
        %v3446 = vld [vmem:[#allocation2 + $0x60] sm:$0xff]
        %v3447 = vld [vmem:[#allocation2 + $0x68] sm:$0xff]
        %v3448 = vld [vmem:[#allocation2 + $0x70] sm:$0xff]
        %v3449 = vld [vmem:[#allocation2 + $0x78] sm:$0xff]
        %v3450 = vld [vmem:[#allocation2 + $0x80] sm:$0xff]
        %v3451 = vld [vmem:[#allocation2 + $0x88] sm:$0xff]
        %v3452 = vld [vmem:[#allocation2 + $0x90] sm:$0xff]
        %v3453 = vld [vmem:[#allocation2 + $0x98] sm:$0xff]
        %v3454 = vld [vmem:[#allocation2 + $0xa0] sm:$0xff]
        %v3455 = vld [vmem:[#allocation2 + $0xa8] sm:$0xff]
        %s3456 = scalar_lea.vmem %s1, 60
        %v3457 = vld [vmem:[%s3456] sm:$0xf]
        %v3459 = vsel %vm196, %v3440, 0
        %v3462 = vsel %vm196, %v3441, 0
        %v3465 = vsel %vm196, %v3442, 0
        %v3468 = vsel %vm196, %v3443, 0
        %v3471 = vsel %vm196, %v3444, 0
        %v3474 = vsel %vm196, %v3445, 0
        %v3477 = vsel %vm196, %v3446, 0
        %v3480 = vsel %vm196, %v3447, 0
        %v3483 = vsel %vm196, %v3448, 0
        %v3486 = vsel %vm196, %v3449, 0
        %v3489 = vsel %vm196, %v3450, 0
        %v3492 = vsel %vm196, %v3451, 0
        %v3495 = vsel %vm196, %v3452, 0
        %v3498 = vsel %vm196, %v3453, 0
        %v3501 = vsel %vm196, %v3454, 0
        %v3504 = vsel %vm196, %v3455, 0
        %v3507 = vsel %vm329, %v3457, 0
        %3509 = vmatprep.subr.mxu0 0.0
        %3510 = vmatpush1.msra.mxu0 %v3507
        %3511 = vmatprep.subr.mxu0 0.0
        %3512 = vmatpush1.msra.mxu0 0.0
        %3513 = vmatprep.subr.mxu0 0.0
        %3514 = vmatpush1.msra.mxu0 0.0
        %3515 = vmatprep.subr.mxu0 0.0
        %3516 = vmatpush1.msra.mxu0 0.0
        %3517 = vmatprep.subr.mxu0 0.0
        %3518 = vmatpush1.msra.mxu0 0.0
        %3519 = vmatprep.subr.mxu0 0.0
        %3520 = vmatpush1.msra.mxu0 0.0
        %3521 = vmatprep.subr.mxu0 0.0
        %3522 = vmatpush1.msra.mxu0 0.0
        %3523 = vmatprep.subr.mxu0 0.0
        %3524 = vmatpush1.msra.mxu0 0.0
        %3525 = vmatprep.subr.mxu0 0.0
        %3526 = vmatpush1.msra.mxu0 0.0
        %3527 = vmatprep.subr.mxu0 0.0
        %3528 = vmatpush1.msra.mxu0 0.0
        %3529 = vmatprep.subr.mxu0 0.0
        %3530 = vmatpush1.msra.mxu0 0.0
        %3531 = vmatprep.subr.mxu0 0.0
        %3532 = vmatpush1.msra.mxu0 0.0
        %3533 = vmatprep.subr.mxu0 0.0
        %3534 = vmatpush1.msra.mxu0 0.0
        %3535 = vmatprep.subr.mxu0 0.0
        %3536 = vmatpush1.msra.mxu0 0.0
        %3537 = vmatprep.subr.mxu0 0.0
        %3538 = vmatpush1.msra.mxu0 0.0
        %3539 = vmatprep.subr.mxu0 0.0
        %3540 = vmatpush1.msra.mxu0 0.0
        %3541 = vmatprep.subr.mxu0 0.0
        %3542 = vmatpush1.msra.mxu0 0.0
        %3543 = vmatprep.subr.mxu0 0.0
        %3544 = vmatpush1.msra.mxu0 0.0
        %3545 = vmatprep.subr.mxu0 0.0
        %3546 = vmatpush1.msra.mxu0 0.0
        %3547 = vmatprep.subr.mxu0 0.0
        %3548 = vmatpush1.msra.mxu0 0.0
        %3549 = vmatprep.subr.mxu0 0.0
        %3550 = vmatpush1.msra.mxu0 0.0
        %3551 = vmatprep.subr.mxu0 0.0
        %3552 = vmatpush1.msra.mxu0 0.0
        %3553 = vmatprep.subr.mxu0 0.0
        %3554 = vmatpush1.msra.mxu0 0.0
        %3555 = vmatprep.subr.mxu0 0.0
        %3556 = vmatpush1.msra.mxu0 0.0
        %3557 = vmatprep.subr.mxu0 0.0
        %3558 = vmatpush1.msra.mxu0 0.0
        %3559 = vmatprep.subr.mxu0 0.0
        %3560 = vmatpush1.msra.mxu0 0.0
        %3561 = vmatprep.subr.mxu0 0.0
        %3562 = vmatpush1.msra.mxu0 0.0
        %3563 = vmatprep.subr.mxu0 0.0
        %3564 = vmatpush1.msra.mxu0 0.0
        %3565 = vmatprep.subr.mxu0 0.0
        %3566 = vmatpush1.msra.mxu0 0.0
        %3567 = vmatprep.subr.mxu0 0.0
        %3568 = vmatpush1.msra.mxu0 0.0
        %3569 = vmatprep.subr.mxu0 0.0
        %3570 = vmatpush1.msra.mxu0 0.0
        %3571 = vmatprep.subr.mxu0 0.0
        %3572 = vmatpush1.msra.mxu0 0.0
        %3573 = vmatprep.mubr.f32.mxu0 0.0
        %3574 = vmatmul.mubr.f32.gmra.mrb[0].mxu0 %v3459
        %v3575 = vpop.f32.mrb[0].mxu0
        %v3576 = vadd.f32 0.0, %v3575
        %v3577 = vpop.f32.mrb[0].mxu0
        %3578 = vmatprep.mubr.f32.mxu0 0.0
        %3579 = vmatmul.mubr.f32.gmra.mrb[0].mxu0 %v3462
        %v3580 = vpop.f32.mrb[0].mxu0
        %v3581 = vpop.f32.mrb[0].mxu0
        %3582 = vmatprep.mubr.f32.mxu0 0.0
        %3583 = vmatmul.mubr.f32.gmra.mrb[0].mxu0 %v3465
        %v3584 = vpop.f32.mrb[0].mxu0
        %v3585 = vadd.f32 0.0, %v3584
        %v3586 = vpop.f32.mrb[0].mxu0
        %3587 = vmatprep.mubr.f32.mxu0 0.0
        %3588 = vmatmul.mubr.f32.gmra.mrb[0].mxu0 %v3468
        %v3589 = vpop.f32.mrb[0].mxu0
        %v3590 = vpop.f32.mrb[0].mxu0
        %3591 = vmatprep.mubr.f32.mxu0 0.0
        %3592 = vmatmul.mubr.f32.gmra.mrb[0].mxu0 %v3471
        %v3593 = vpop.f32.mrb[0].mxu0
        %v3594 = vadd.f32 0.0, %v3593
        %v3595 = vpop.f32.mrb[0].mxu0
        %3596 = vmatprep.mubr.f32.mxu0 0.0
        %3597 = vmatmul.mubr.f32.gmra.mrb[0].mxu0 %v3474
        %v3598 = vpop.f32.mrb[0].mxu0
        %v3599 = vpop.f32.mrb[0].mxu0
        %3600 = vmatprep.mubr.f32.mxu0 0.0
        %3601 = vmatmul.mubr.f32.gmra.mrb[0].mxu0 %v3477
        %v3602 = vpop.f32.mrb[0].mxu0
        %v3603 = vadd.f32 0.0, %v3602
        %v3604 = vpop.f32.mrb[0].mxu0
        %3605 = vmatprep.mubr.f32.mxu0 0.0
        %3606 = vmatmul.mubr.f32.gmra.mrb[0].mxu0 %v3480
        %v3607 = vpop.f32.mrb[0].mxu0
        %v3608 = vpop.f32.mrb[0].mxu0
        %3609 = vmatprep.mubr.f32.mxu0 0.0
        %3610 = vmatmul.mubr.f32.gmra.mrb[0].mxu0 %v3483
        %v3611 = vpop.f32.mrb[0].mxu0
        %v3612 = vadd.f32 0.0, %v3611
        %v3613 = vpop.f32.mrb[0].mxu0
        %3614 = vmatprep.mubr.f32.mxu0 0.0
        %3615 = vmatmul.mubr.f32.gmra.mrb[0].mxu0 %v3486
        %v3616 = vpop.f32.mrb[0].mxu0
        %v3617 = vpop.f32.mrb[0].mxu0
        %3618 = vmatprep.mubr.f32.mxu0 0.0
        %3619 = vmatmul.mubr.f32.gmra.mrb[0].mxu0 %v3489
        %v3620 = vpop.f32.mrb[0].mxu0
        %v3621 = vadd.f32 0.0, %v3620
        %v3622 = vpop.f32.mrb[0].mxu0
        %3623 = vmatprep.mubr.f32.mxu0 0.0
        %3624 = vmatmul.mubr.f32.gmra.mrb[0].mxu0 %v3492
        %v3625 = vpop.f32.mrb[0].mxu0
        %v3626 = vpop.f32.mrb[0].mxu0
        %3627 = vmatprep.mubr.f32.mxu0 0.0
        %3628 = vmatmul.mubr.f32.gmra.mrb[0].mxu0 %v3495
        %v3629 = vpop.f32.mrb[0].mxu0
        %v3630 = vadd.f32 0.0, %v3629
        %v3631 = vpop.f32.mrb[0].mxu0
        %3632 = vmatprep.mubr.f32.mxu0 0.0
        %3633 = vmatmul.mubr.f32.gmra.mrb[0].mxu0 %v3498
        %v3634 = vpop.f32.mrb[0].mxu0
        %v3635 = vpop.f32.mrb[0].mxu0
        %3636 = vmatprep.mubr.f32.mxu0 0.0
        %3637 = vmatmul.mubr.f32.gmra.mrb[0].mxu0 %v3501
        %v3638 = vpop.f32.mrb[0].mxu0
        %v3639 = vadd.f32 0.0, %v3638
        %v3640 = vpop.f32.mrb[0].mxu0
        %3641 = vmatprep.mubr.f32.mxu0 0.0
        %3642 = vmatmul.mubr.f32.gmra.mrb[0].mxu0 %v3504
        %v3643 = vpop.f32.mrb[0].mxu0
        %v3644 = vpop.f32.mrb[0].mxu0
        %3645 = vdwg.mxu0
        %v3646 = vadd.f32 %v3432, %v3576
        %v3647 = vadd.f32 %v3433, %v3585
        %v3648 = vadd.f32 %v3434, %v3594
        %v3649 = vadd.f32 %v3435, %v3603
        %v3650 = vadd.f32 %v3436, %v3612
        %v3651 = vadd.f32 %v3437, %v3621
        %v3652 = vadd.f32 %v3438, %v3630
        %v3653 = vadd.f32 %v3439, %v3639
        %v3654 = vld [vmem:[#allocation2 + $0x31] sm:$0xff]
        %v3655 = vld [vmem:[#allocation2 + $0x39] sm:$0xff]
        %v3656 = vld [vmem:[#allocation2 + $0x41] sm:$0xff]
        %v3657 = vld [vmem:[#allocation2 + $0x49] sm:$0xff]
        %v3658 = vld [vmem:[#allocation2 + $0x51] sm:$0xff]
        %v3659 = vld [vmem:[#allocation2 + $0x59] sm:$0xff]
        %v3660 = vld [vmem:[#allocation2 + $0x61] sm:$0xff]
        %v3661 = vld [vmem:[#allocation2 + $0x69] sm:$0xff]
        %v3662 = vld [vmem:[#allocation2 + $0x71] sm:$0xff]
        %v3663 = vld [vmem:[#allocation2 + $0x79] sm:$0xff]
        %v3664 = vld [vmem:[#allocation2 + $0x81] sm:$0xff]
        %v3665 = vld [vmem:[#allocation2 + $0x89] sm:$0xff]
        %v3666 = vld [vmem:[#allocation2 + $0x91] sm:$0xff]
        %v3667 = vld [vmem:[#allocation2 + $0x99] sm:$0xff]
        %v3668 = vld [vmem:[#allocation2 + $0xa1] sm:$0xff]
        %v3669 = vld [vmem:[#allocation2 + $0xa9] sm:$0xff]
        %s3670 = scalar_lea.vmem %s1, 64
        %v3671 = vld [vmem:[%s3670] sm:$0xf]
        %v3673 = vsel %vm196, %v3654, 0
        %v3676 = vsel %vm196, %v3655, 0
        %v3679 = vsel %vm196, %v3656, 0
        %v3682 = vsel %vm196, %v3657, 0
        %v3685 = vsel %vm196, %v3658, 0
        %v3688 = vsel %vm196, %v3659, 0
        %v3691 = vsel %vm196, %v3660, 0
        %v3694 = vsel %vm196, %v3661, 0
        %v3697 = vsel %vm196, %v3662, 0
        %v3700 = vsel %vm196, %v3663, 0
        %v3703 = vsel %vm196, %v3664, 0
        %v3706 = vsel %vm196, %v3665, 0
        %v3709 = vsel %vm196, %v3666, 0
        %v3712 = vsel %vm196, %v3667, 0
        %v3715 = vsel %vm196, %v3668, 0
        %v3718 = vsel %vm196, %v3669, 0
        %v3721 = vsel %vm329, %v3671, 0
        %3723 = vmatprep.subr.mxu0 0.0
        %3724 = vmatpush1.msra.mxu0 %v3721
        %3725 = vmatprep.subr.mxu0 0.0
        %3726 = vmatpush1.msra.mxu0 0.0
        %3727 = vmatprep.subr.mxu0 0.0
        %3728 = vmatpush1.msra.mxu0 0.0
        %3729 = vmatprep.subr.mxu0 0.0
        %3730 = vmatpush1.msra.mxu0 0.0
        %3731 = vmatprep.subr.mxu0 0.0
        %3732 = vmatpush1.msra.mxu0 0.0
        %3733 = vmatprep.subr.mxu0 0.0
        %3734 = vmatpush1.msra.mxu0 0.0
        %3735 = vmatprep.subr.mxu0 0.0
        %3736 = vmatpush1.msra.mxu0 0.0
        %3737 = vmatprep.subr.mxu0 0.0
        %3738 = vmatpush1.msra.mxu0 0.0
        %3739 = vmatprep.subr.mxu0 0.0
        %3740 = vmatpush1.msra.mxu0 0.0
        %3741 = vmatprep.subr.mxu0 0.0
        %3742 = vmatpush1.msra.mxu0 0.0
        %3743 = vmatprep.subr.mxu0 0.0
        %3744 = vmatpush1.msra.mxu0 0.0
        %3745 = vmatprep.subr.mxu0 0.0
        %3746 = vmatpush1.msra.mxu0 0.0
        %3747 = vmatprep.subr.mxu0 0.0
        %3748 = vmatpush1.msra.mxu0 0.0
        %3749 = vmatprep.subr.mxu0 0.0
        %3750 = vmatpush1.msra.mxu0 0.0
        %3751 = vmatprep.subr.mxu0 0.0
        %3752 = vmatpush1.msra.mxu0 0.0
        %3753 = vmatprep.subr.mxu0 0.0
        %3754 = vmatpush1.msra.mxu0 0.0
        %3755 = vmatprep.subr.mxu0 0.0
        %3756 = vmatpush1.msra.mxu0 0.0
        %3757 = vmatprep.subr.mxu0 0.0
        %3758 = vmatpush1.msra.mxu0 0.0
        %3759 = vmatprep.subr.mxu0 0.0
        %3760 = vmatpush1.msra.mxu0 0.0
        %3761 = vmatprep.subr.mxu0 0.0
        %3762 = vmatpush1.msra.mxu0 0.0
        %3763 = vmatprep.subr.mxu0 0.0
        %3764 = vmatpush1.msra.mxu0 0.0
        %3765 = vmatprep.subr.mxu0 0.0
        %3766 = vmatpush1.msra.mxu0 0.0
        %3767 = vmatprep.subr.mxu0 0.0
        %3768 = vmatpush1.msra.mxu0 0.0
        %3769 = vmatprep.subr.mxu0 0.0
        %3770 = vmatpush1.msra.mxu0 0.0
        %3771 = vmatprep.subr.mxu0 0.0
        %3772 = vmatpush1.msra.mxu0 0.0
        %3773 = vmatprep.subr.mxu0 0.0
        %3774 = vmatpush1.msra.mxu0 0.0
        %3775 = vmatprep.subr.mxu0 0.0
        %3776 = vmatpush1.msra.mxu0 0.0
        %3777 = vmatprep.subr.mxu0 0.0
        %3778 = vmatpush1.msra.mxu0 0.0
        %3779 = vmatprep.subr.mxu0 0.0
        %3780 = vmatpush1.msra.mxu0 0.0
        %3781 = vmatprep.subr.mxu0 0.0
        %3782 = vmatpush1.msra.mxu0 0.0
        %3783 = vmatprep.subr.mxu0 0.0
        %3784 = vmatpush1.msra.mxu0 0.0
        %3785 = vmatprep.subr.mxu0 0.0
        %3786 = vmatpush1.msra.mxu0 0.0
        %3787 = vmatprep.mubr.f32.mxu0 0.0
        %3788 = vmatmul.mubr.f32.gmra.mrb[0].mxu0 %v3673
        %v3789 = vpop.f32.mrb[0].mxu0
        %v3790 = vadd.f32 0.0, %v3789
        %v3791 = vpop.f32.mrb[0].mxu0
        %3792 = vmatprep.mubr.f32.mxu0 0.0
        %3793 = vmatmul.mubr.f32.gmra.mrb[0].mxu0 %v3676
        %v3794 = vpop.f32.mrb[0].mxu0
        %v3795 = vpop.f32.mrb[0].mxu0
        %3796 = vmatprep.mubr.f32.mxu0 0.0
        %3797 = vmatmul.mubr.f32.gmra.mrb[0].mxu0 %v3679
        %v3798 = vpop.f32.mrb[0].mxu0
        %v3799 = vadd.f32 0.0, %v3798
        %v3800 = vpop.f32.mrb[0].mxu0
        %3801 = vmatprep.mubr.f32.mxu0 0.0
        %3802 = vmatmul.mubr.f32.gmra.mrb[0].mxu0 %v3682
        %v3803 = vpop.f32.mrb[0].mxu0
        %v3804 = vpop.f32.mrb[0].mxu0
        %3805 = vmatprep.mubr.f32.mxu0 0.0
        %3806 = vmatmul.mubr.f32.gmra.mrb[0].mxu0 %v3685
        %v3807 = vpop.f32.mrb[0].mxu0
        %v3808 = vadd.f32 0.0, %v3807
        %v3809 = vpop.f32.mrb[0].mxu0
        %3810 = vmatprep.mubr.f32.mxu0 0.0
        %3811 = vmatmul.mubr.f32.gmra.mrb[0].mxu0 %v3688
        %v3812 = vpop.f32.mrb[0].mxu0
        %v3813 = vpop.f32.mrb[0].mxu0
        %3814 = vmatprep.mubr.f32.mxu0 0.0
        %3815 = vmatmul.mubr.f32.gmra.mrb[0].mxu0 %v3691
        %v3816 = vpop.f32.mrb[0].mxu0
        %v3817 = vadd.f32 0.0, %v3816
        %v3818 = vpop.f32.mrb[0].mxu0
        %3819 = vmatprep.mubr.f32.mxu0 0.0
        %3820 = vmatmul.mubr.f32.gmra.mrb[0].mxu0 %v3694
        %v3821 = vpop.f32.mrb[0].mxu0
        %v3822 = vpop.f32.mrb[0].mxu0
        %3823 = vmatprep.mubr.f32.mxu0 0.0
        %3824 = vmatmul.mubr.f32.gmra.mrb[0].mxu0 %v3697
        %v3825 = vpop.f32.mrb[0].mxu0
        %v3826 = vadd.f32 0.0, %v3825
        %v3827 = vpop.f32.mrb[0].mxu0
        %3828 = vmatprep.mubr.f32.mxu0 0.0
        %3829 = vmatmul.mubr.f32.gmra.mrb[0].mxu0 %v3700
        %v3830 = vpop.f32.mrb[0].mxu0
        %v3831 = vpop.f32.mrb[0].mxu0
        %3832 = vmatprep.mubr.f32.mxu0 0.0
        %3833 = vmatmul.mubr.f32.gmra.mrb[0].mxu0 %v3703
        %v3834 = vpop.f32.mrb[0].mxu0
        %v3835 = vadd.f32 0.0, %v3834
        %v3836 = vpop.f32.mrb[0].mxu0
        %3837 = vmatprep.mubr.f32.mxu0 0.0
        %3838 = vmatmul.mubr.f32.gmra.mrb[0].mxu0 %v3706
        %v3839 = vpop.f32.mrb[0].mxu0
        %v3840 = vpop.f32.mrb[0].mxu0
        %3841 = vmatprep.mubr.f32.mxu0 0.0
        %3842 = vmatmul.mubr.f32.gmra.mrb[0].mxu0 %v3709
        %v3843 = vpop.f32.mrb[0].mxu0
        %v3844 = vadd.f32 0.0, %v3843
        %v3845 = vpop.f32.mrb[0].mxu0
        %3846 = vmatprep.mubr.f32.mxu0 0.0
        %3847 = vmatmul.mubr.f32.gmra.mrb[0].mxu0 %v3712
        %v3848 = vpop.f32.mrb[0].mxu0
        %v3849 = vpop.f32.mrb[0].mxu0
        %3850 = vmatprep.mubr.f32.mxu0 0.0
        %3851 = vmatmul.mubr.f32.gmra.mrb[0].mxu0 %v3715
        %v3852 = vpop.f32.mrb[0].mxu0
        %v3853 = vadd.f32 0.0, %v3852
        %v3854 = vpop.f32.mrb[0].mxu0
        %3855 = vmatprep.mubr.f32.mxu0 0.0
        %3856 = vmatmul.mubr.f32.gmra.mrb[0].mxu0 %v3718
        %v3857 = vpop.f32.mrb[0].mxu0
        %v3858 = vpop.f32.mrb[0].mxu0
        %3859 = vdwg.mxu0
        %v3860 = vadd.f32 %v3646, %v3790
        %v3861 = vadd.f32 %v3647, %v3799
        %v3862 = vadd.f32 %v3648, %v3808
        %v3863 = vadd.f32 %v3649, %v3817
        %v3864 = vadd.f32 %v3650, %v3826
        %v3865 = vadd.f32 %v3651, %v3835
        %v3866 = vadd.f32 %v3652, %v3844
        %v3867 = vadd.f32 %v3653, %v3853
        %v3868 = vld [vmem:[#allocation2 + $0x32] sm:$0xff]
        %v3869 = vld [vmem:[#allocation2 + $0x3a] sm:$0xff]
        %v3870 = vld [vmem:[#allocation2 + $0x42] sm:$0xff]
        %v3871 = vld [vmem:[#allocation2 + $0x4a] sm:$0xff]
        %v3872 = vld [vmem:[#allocation2 + $0x52] sm:$0xff]
        %v3873 = vld [vmem:[#allocation2 + $0x5a] sm:$0xff]
        %v3874 = vld [vmem:[#allocation2 + $0x62] sm:$0xff]
        %v3875 = vld [vmem:[#allocation2 + $0x6a] sm:$0xff]
        %v3876 = vld [vmem:[#allocation2 + $0x72] sm:$0xff]
        %v3877 = vld [vmem:[#allocation2 + $0x7a] sm:$0xff]
        %v3878 = vld [vmem:[#allocation2 + $0x82] sm:$0xff]
        %v3879 = vld [vmem:[#allocation2 + $0x8a] sm:$0xff]
        %v3880 = vld [vmem:[#allocation2 + $0x92] sm:$0xff]
        %v3881 = vld [vmem:[#allocation2 + $0x9a] sm:$0xff]
        %v3882 = vld [vmem:[#allocation2 + $0xa2] sm:$0xff]
        %v3883 = vld [vmem:[#allocation2 + $0xaa] sm:$0xff]
        %s3884 = scalar_lea.vmem %s1, 68
        %v3885 = vld [vmem:[%s3884] sm:$0xf]
        %v3887 = vsel %vm196, %v3868, 0
        %v3890 = vsel %vm196, %v3869, 0
        %v3893 = vsel %vm196, %v3870, 0
        %v3896 = vsel %vm196, %v3871, 0
        %v3899 = vsel %vm196, %v3872, 0
        %v3902 = vsel %vm196, %v3873, 0
        %v3905 = vsel %vm196, %v3874, 0
        %v3908 = vsel %vm196, %v3875, 0
        %v3911 = vsel %vm196, %v3876, 0
        %v3914 = vsel %vm196, %v3877, 0
        %v3917 = vsel %vm196, %v3878, 0
        %v3920 = vsel %vm196, %v3879, 0
        %v3923 = vsel %vm196, %v3880, 0
        %v3926 = vsel %vm196, %v3881, 0
        %v3929 = vsel %vm196, %v3882, 0
        %v3932 = vsel %vm196, %v3883, 0
        %v3935 = vsel %vm329, %v3885, 0
        %3937 = vmatprep.subr.mxu0 0.0
        %3938 = vmatpush1.msra.mxu0 %v3935
        %3939 = vmatprep.subr.mxu0 0.0
        %3940 = vmatpush1.msra.mxu0 0.0
        %3941 = vmatprep.subr.mxu0 0.0
        %3942 = vmatpush1.msra.mxu0 0.0
        %3943 = vmatprep.subr.mxu0 0.0
        %3944 = vmatpush1.msra.mxu0 0.0
        %3945 = vmatprep.subr.mxu0 0.0
        %3946 = vmatpush1.msra.mxu0 0.0
        %3947 = vmatprep.subr.mxu0 0.0
        %3948 = vmatpush1.msra.mxu0 0.0
        %3949 = vmatprep.subr.mxu0 0.0
        %3950 = vmatpush1.msra.mxu0 0.0
        %3951 = vmatprep.subr.mxu0 0.0
        %3952 = vmatpush1.msra.mxu0 0.0
        %3953 = vmatprep.subr.mxu0 0.0
        %3954 = vmatpush1.msra.mxu0 0.0
        %3955 = vmatprep.subr.mxu0 0.0
        %3956 = vmatpush1.msra.mxu0 0.0
        %3957 = vmatprep.subr.mxu0 0.0
        %3958 = vmatpush1.msra.mxu0 0.0
        %3959 = vmatprep.subr.mxu0 0.0
        %3960 = vmatpush1.msra.mxu0 0.0
        %3961 = vmatprep.subr.mxu0 0.0
        %3962 = vmatpush1.msra.mxu0 0.0
        %3963 = vmatprep.subr.mxu0 0.0
        %3964 = vmatpush1.msra.mxu0 0.0
        %3965 = vmatprep.subr.mxu0 0.0
        %3966 = vmatpush1.msra.mxu0 0.0
        %3967 = vmatprep.subr.mxu0 0.0
        %3968 = vmatpush1.msra.mxu0 0.0
        %3969 = vmatprep.subr.mxu0 0.0
        %3970 = vmatpush1.msra.mxu0 0.0
        %3971 = vmatprep.subr.mxu0 0.0
        %3972 = vmatpush1.msra.mxu0 0.0
        %3973 = vmatprep.subr.mxu0 0.0
        %3974 = vmatpush1.msra.mxu0 0.0
        %3975 = vmatprep.subr.mxu0 0.0
        %3976 = vmatpush1.msra.mxu0 0.0
        %3977 = vmatprep.subr.mxu0 0.0
        %3978 = vmatpush1.msra.mxu0 0.0
        %3979 = vmatprep.subr.mxu0 0.0
        %3980 = vmatpush1.msra.mxu0 0.0
        %3981 = vmatprep.subr.mxu0 0.0
        %3982 = vmatpush1.msra.mxu0 0.0
        %3983 = vmatprep.subr.mxu0 0.0
        %3984 = vmatpush1.msra.mxu0 0.0
        %3985 = vmatprep.subr.mxu0 0.0
        %3986 = vmatpush1.msra.mxu0 0.0
        %3987 = vmatprep.subr.mxu0 0.0
        %3988 = vmatpush1.msra.mxu0 0.0
        %3989 = vmatprep.subr.mxu0 0.0
        %3990 = vmatpush1.msra.mxu0 0.0
        %3991 = vmatprep.subr.mxu0 0.0
        %3992 = vmatpush1.msra.mxu0 0.0
        %3993 = vmatprep.subr.mxu0 0.0
        %3994 = vmatpush1.msra.mxu0 0.0
        %3995 = vmatprep.subr.mxu0 0.0
        %3996 = vmatpush1.msra.mxu0 0.0
        %3997 = vmatprep.subr.mxu0 0.0
        %3998 = vmatpush1.msra.mxu0 0.0
        %3999 = vmatprep.subr.mxu0 0.0
        %4000 = vmatpush1.msra.mxu0 0.0
        %4001 = vmatprep.mubr.f32.mxu0 0.0
        %4002 = vmatmul.mubr.f32.gmra.mrb[0].mxu0 %v3887
        %v4003 = vpop.f32.mrb[0].mxu0
        %v4004 = vadd.f32 0.0, %v4003
        %v4005 = vpop.f32.mrb[0].mxu0
        %4006 = vmatprep.mubr.f32.mxu0 0.0
        %4007 = vmatmul.mubr.f32.gmra.mrb[0].mxu0 %v3890
        %v4008 = vpop.f32.mrb[0].mxu0
        %v4009 = vpop.f32.mrb[0].mxu0
        %4010 = vmatprep.mubr.f32.mxu0 0.0
        %4011 = vmatmul.mubr.f32.gmra.mrb[0].mxu0 %v3893
        %v4012 = vpop.f32.mrb[0].mxu0
        %v4013 = vadd.f32 0.0, %v4012
        %v4014 = vpop.f32.mrb[0].mxu0
        %4015 = vmatprep.mubr.f32.mxu0 0.0
        %4016 = vmatmul.mubr.f32.gmra.mrb[0].mxu0 %v3896
        %v4017 = vpop.f32.mrb[0].mxu0
        %v4018 = vpop.f32.mrb[0].mxu0
        %4019 = vmatprep.mubr.f32.mxu0 0.0
        %4020 = vmatmul.mubr.f32.gmra.mrb[0].mxu0 %v3899
        %v4021 = vpop.f32.mrb[0].mxu0
        %v4022 = vadd.f32 0.0, %v4021
        %v4023 = vpop.f32.mrb[0].mxu0
        %4024 = vmatprep.mubr.f32.mxu0 0.0
        %4025 = vmatmul.mubr.f32.gmra.mrb[0].mxu0 %v3902
        %v4026 = vpop.f32.mrb[0].mxu0
        %v4027 = vpop.f32.mrb[0].mxu0
        %4028 = vmatprep.mubr.f32.mxu0 0.0
        %4029 = vmatmul.mubr.f32.gmra.mrb[0].mxu0 %v3905
        %v4030 = vpop.f32.mrb[0].mxu0
        %v4031 = vadd.f32 0.0, %v4030
        %v4032 = vpop.f32.mrb[0].mxu0
        %4033 = vmatprep.mubr.f32.mxu0 0.0
        %4034 = vmatmul.mubr.f32.gmra.mrb[0].mxu0 %v3908
        %v4035 = vpop.f32.mrb[0].mxu0
        %v4036 = vpop.f32.mrb[0].mxu0
        %4037 = vmatprep.mubr.f32.mxu0 0.0
        %4038 = vmatmul.mubr.f32.gmra.mrb[0].mxu0 %v3911
        %v4039 = vpop.f32.mrb[0].mxu0
        %v4040 = vadd.f32 0.0, %v4039
        %v4041 = vpop.f32.mrb[0].mxu0
        %4042 = vmatprep.mubr.f32.mxu0 0.0
        %4043 = vmatmul.mubr.f32.gmra.mrb[0].mxu0 %v3914
        %v4044 = vpop.f32.mrb[0].mxu0
        %v4045 = vpop.f32.mrb[0].mxu0
        %4046 = vmatprep.mubr.f32.mxu0 0.0
        %4047 = vmatmul.mubr.f32.gmra.mrb[0].mxu0 %v3917
        %v4048 = vpop.f32.mrb[0].mxu0
        %v4049 = vadd.f32 0.0, %v4048
        %v4050 = vpop.f32.mrb[0].mxu0
        %4051 = vmatprep.mubr.f32.mxu0 0.0
        %4052 = vmatmul.mubr.f32.gmra.mrb[0].mxu0 %v3920
        %v4053 = vpop.f32.mrb[0].mxu0
        %v4054 = vpop.f32.mrb[0].mxu0
        %4055 = vmatprep.mubr.f32.mxu0 0.0
        %4056 = vmatmul.mubr.f32.gmra.mrb[0].mxu0 %v3923
        %v4057 = vpop.f32.mrb[0].mxu0
        %v4058 = vadd.f32 0.0, %v4057
        %v4059 = vpop.f32.mrb[0].mxu0
        %4060 = vmatprep.mubr.f32.mxu0 0.0
        %4061 = vmatmul.mubr.f32.gmra.mrb[0].mxu0 %v3926
        %v4062 = vpop.f32.mrb[0].mxu0
        %v4063 = vpop.f32.mrb[0].mxu0
        %4064 = vmatprep.mubr.f32.mxu0 0.0
        %4065 = vmatmul.mubr.f32.gmra.mrb[0].mxu0 %v3929
        %v4066 = vpop.f32.mrb[0].mxu0
        %v4067 = vadd.f32 0.0, %v4066
        %v4068 = vpop.f32.mrb[0].mxu0
        %4069 = vmatprep.mubr.f32.mxu0 0.0
        %4070 = vmatmul.mubr.f32.gmra.mrb[0].mxu0 %v3932
        %v4071 = vpop.f32.mrb[0].mxu0
        %v4072 = vpop.f32.mrb[0].mxu0
        %4073 = vdwg.mxu0
        %v4074 = vadd.f32 %v3860, %v4004
        %v4075 = vadd.f32 %v3861, %v4013
        %v4076 = vadd.f32 %v3862, %v4022
        %v4077 = vadd.f32 %v3863, %v4031
        %v4078 = vadd.f32 %v3864, %v4040
        %v4079 = vadd.f32 %v3865, %v4049
        %v4080 = vadd.f32 %v3866, %v4058
        %v4081 = vadd.f32 %v3867, %v4067
        %v4082 = vld [vmem:[#allocation2 + $0x33] sm:$0xff]
        %v4083 = vld [vmem:[#allocation2 + $0x3b] sm:$0xff]
        %v4084 = vld [vmem:[#allocation2 + $0x43] sm:$0xff]
        %v4085 = vld [vmem:[#allocation2 + $0x4b] sm:$0xff]
        %v4086 = vld [vmem:[#allocation2 + $0x53] sm:$0xff]
        %v4087 = vld [vmem:[#allocation2 + $0x5b] sm:$0xff]
        %v4088 = vld [vmem:[#allocation2 + $0x63] sm:$0xff]
        %v4089 = vld [vmem:[#allocation2 + $0x6b] sm:$0xff]
        %v4090 = vld [vmem:[#allocation2 + $0x73] sm:$0xff]
        %v4091 = vld [vmem:[#allocation2 + $0x7b] sm:$0xff]
        %v4092 = vld [vmem:[#allocation2 + $0x83] sm:$0xff]
        %v4093 = vld [vmem:[#allocation2 + $0x8b] sm:$0xff]
        %v4094 = vld [vmem:[#allocation2 + $0x93] sm:$0xff]
        %v4095 = vld [vmem:[#allocation2 + $0x9b] sm:$0xff]
        %v4096 = vld [vmem:[#allocation2 + $0xa3] sm:$0xff]
        %v4097 = vld [vmem:[#allocation2 + $0xab] sm:$0xff]
        %s4098 = scalar_lea.vmem %s1, 72
        %v4099 = vld [vmem:[%s4098] sm:$0xf]
        %v4101 = vsel %vm196, %v4082, 0
        %v4104 = vsel %vm196, %v4083, 0
        %v4107 = vsel %vm196, %v4084, 0
        %v4110 = vsel %vm196, %v4085, 0
        %v4113 = vsel %vm196, %v4086, 0
        %v4116 = vsel %vm196, %v4087, 0
        %v4119 = vsel %vm196, %v4088, 0
        %v4122 = vsel %vm196, %v4089, 0
        %v4125 = vsel %vm196, %v4090, 0
        %v4128 = vsel %vm196, %v4091, 0
        %v4131 = vsel %vm196, %v4092, 0
        %v4134 = vsel %vm196, %v4093, 0
        %v4137 = vsel %vm196, %v4094, 0
        %v4140 = vsel %vm196, %v4095, 0
        %v4143 = vsel %vm196, %v4096, 0
        %v4146 = vsel %vm196, %v4097, 0
        %v4149 = vsel %vm329, %v4099, 0
        %4151 = vmatprep.subr.mxu0 0.0
        %4152 = vmatpush1.msra.mxu0 %v4149
        %4153 = vmatprep.subr.mxu0 0.0
        %4154 = vmatpush1.msra.mxu0 0.0
        %4155 = vmatprep.subr.mxu0 0.0
        %4156 = vmatpush1.msra.mxu0 0.0
        %4157 = vmatprep.subr.mxu0 0.0
        %4158 = vmatpush1.msra.mxu0 0.0
        %4159 = vmatprep.subr.mxu0 0.0
        %4160 = vmatpush1.msra.mxu0 0.0
        %4161 = vmatprep.subr.mxu0 0.0
        %4162 = vmatpush1.msra.mxu0 0.0
        %4163 = vmatprep.subr.mxu0 0.0
        %4164 = vmatpush1.msra.mxu0 0.0
        %4165 = vmatprep.subr.mxu0 0.0
        %4166 = vmatpush1.msra.mxu0 0.0
        %4167 = vmatprep.subr.mxu0 0.0
        %4168 = vmatpush1.msra.mxu0 0.0
        %4169 = vmatprep.subr.mxu0 0.0
        %4170 = vmatpush1.msra.mxu0 0.0
        %4171 = vmatprep.subr.mxu0 0.0
        %4172 = vmatpush1.msra.mxu0 0.0
        %4173 = vmatprep.subr.mxu0 0.0
        %4174 = vmatpush1.msra.mxu0 0.0
        %4175 = vmatprep.subr.mxu0 0.0
        %4176 = vmatpush1.msra.mxu0 0.0
        %4177 = vmatprep.subr.mxu0 0.0
        %4178 = vmatpush1.msra.mxu0 0.0
        %4179 = vmatprep.subr.mxu0 0.0
        %4180 = vmatpush1.msra.mxu0 0.0
        %4181 = vmatprep.subr.mxu0 0.0
        %4182 = vmatpush1.msra.mxu0 0.0
        %4183 = vmatprep.subr.mxu0 0.0
        %4184 = vmatpush1.msra.mxu0 0.0
        %4185 = vmatprep.subr.mxu0 0.0
        %4186 = vmatpush1.msra.mxu0 0.0
        %4187 = vmatprep.subr.mxu0 0.0
        %4188 = vmatpush1.msra.mxu0 0.0
        %4189 = vmatprep.subr.mxu0 0.0
        %4190 = vmatpush1.msra.mxu0 0.0
        %4191 = vmatprep.subr.mxu0 0.0
        %4192 = vmatpush1.msra.mxu0 0.0
        %4193 = vmatprep.subr.mxu0 0.0
        %4194 = vmatpush1.msra.mxu0 0.0
        %4195 = vmatprep.subr.mxu0 0.0
        %4196 = vmatpush1.msra.mxu0 0.0
        %4197 = vmatprep.subr.mxu0 0.0
        %4198 = vmatpush1.msra.mxu0 0.0
        %4199 = vmatprep.subr.mxu0 0.0
        %4200 = vmatpush1.msra.mxu0 0.0
        %4201 = vmatprep.subr.mxu0 0.0
        %4202 = vmatpush1.msra.mxu0 0.0
        %4203 = vmatprep.subr.mxu0 0.0
        %4204 = vmatpush1.msra.mxu0 0.0
        %4205 = vmatprep.subr.mxu0 0.0
        %4206 = vmatpush1.msra.mxu0 0.0
        %4207 = vmatprep.subr.mxu0 0.0
        %4208 = vmatpush1.msra.mxu0 0.0
        %4209 = vmatprep.subr.mxu0 0.0
        %4210 = vmatpush1.msra.mxu0 0.0
        %4211 = vmatprep.subr.mxu0 0.0
        %4212 = vmatpush1.msra.mxu0 0.0
        %4213 = vmatprep.subr.mxu0 0.0
        %4214 = vmatpush1.msra.mxu0 0.0
        %4215 = vmatprep.mubr.f32.mxu0 0.0
        %4216 = vmatmul.mubr.f32.gmra.mrb[0].mxu0 %v4101
        %v4217 = vpop.f32.mrb[0].mxu0
        %v4218 = vadd.f32 0.0, %v4217
        %v4219 = vpop.f32.mrb[0].mxu0
        %4220 = vmatprep.mubr.f32.mxu0 0.0
        %4221 = vmatmul.mubr.f32.gmra.mrb[0].mxu0 %v4104
        %v4222 = vpop.f32.mrb[0].mxu0
        %v4223 = vpop.f32.mrb[0].mxu0
        %4224 = vmatprep.mubr.f32.mxu0 0.0
        %4225 = vmatmul.mubr.f32.gmra.mrb[0].mxu0 %v4107
        %v4226 = vpop.f32.mrb[0].mxu0
        %v4227 = vadd.f32 0.0, %v4226
        %v4228 = vpop.f32.mrb[0].mxu0
        %4229 = vmatprep.mubr.f32.mxu0 0.0
        %4230 = vmatmul.mubr.f32.gmra.mrb[0].mxu0 %v4110
        %v4231 = vpop.f32.mrb[0].mxu0
        %v4232 = vpop.f32.mrb[0].mxu0
        %4233 = vmatprep.mubr.f32.mxu0 0.0
        %4234 = vmatmul.mubr.f32.gmra.mrb[0].mxu0 %v4113
        %v4235 = vpop.f32.mrb[0].mxu0
        %v4236 = vadd.f32 0.0, %v4235
        %v4237 = vpop.f32.mrb[0].mxu0
        %4238 = vmatprep.mubr.f32.mxu0 0.0
        %4239 = vmatmul.mubr.f32.gmra.mrb[0].mxu0 %v4116
        %v4240 = vpop.f32.mrb[0].mxu0
        %v4241 = vpop.f32.mrb[0].mxu0
        %4242 = vmatprep.mubr.f32.mxu0 0.0
        %4243 = vmatmul.mubr.f32.gmra.mrb[0].mxu0 %v4119
        %v4244 = vpop.f32.mrb[0].mxu0
        %v4245 = vadd.f32 0.0, %v4244
        %v4246 = vpop.f32.mrb[0].mxu0
        %4247 = vmatprep.mubr.f32.mxu0 0.0
        %4248 = vmatmul.mubr.f32.gmra.mrb[0].mxu0 %v4122
        %v4249 = vpop.f32.mrb[0].mxu0
        %v4250 = vpop.f32.mrb[0].mxu0
        %4251 = vmatprep.mubr.f32.mxu0 0.0
        %4252 = vmatmul.mubr.f32.gmra.mrb[0].mxu0 %v4125
        %v4253 = vpop.f32.mrb[0].mxu0
        %v4254 = vadd.f32 0.0, %v4253
        %v4255 = vpop.f32.mrb[0].mxu0
        %4256 = vmatprep.mubr.f32.mxu0 0.0
        %4257 = vmatmul.mubr.f32.gmra.mrb[0].mxu0 %v4128
        %v4258 = vpop.f32.mrb[0].mxu0
        %v4259 = vpop.f32.mrb[0].mxu0
        %4260 = vmatprep.mubr.f32.mxu0 0.0
        %4261 = vmatmul.mubr.f32.gmra.mrb[0].mxu0 %v4131
        %v4262 = vpop.f32.mrb[0].mxu0
        %v4263 = vadd.f32 0.0, %v4262
        %v4264 = vpop.f32.mrb[0].mxu0
        %4265 = vmatprep.mubr.f32.mxu0 0.0
        %4266 = vmatmul.mubr.f32.gmra.mrb[0].mxu0 %v4134
        %v4267 = vpop.f32.mrb[0].mxu0
        %v4268 = vpop.f32.mrb[0].mxu0
        %4269 = vmatprep.mubr.f32.mxu0 0.0
        %4270 = vmatmul.mubr.f32.gmra.mrb[0].mxu0 %v4137
        %v4271 = vpop.f32.mrb[0].mxu0
        %v4272 = vadd.f32 0.0, %v4271
        %v4273 = vpop.f32.mrb[0].mxu0
        %4274 = vmatprep.mubr.f32.mxu0 0.0
        %4275 = vmatmul.mubr.f32.gmra.mrb[0].mxu0 %v4140
        %v4276 = vpop.f32.mrb[0].mxu0
        %v4277 = vpop.f32.mrb[0].mxu0
        %4278 = vmatprep.mubr.f32.mxu0 0.0
        %4279 = vmatmul.mubr.f32.gmra.mrb[0].mxu0 %v4143
        %v4280 = vpop.f32.mrb[0].mxu0
        %v4281 = vadd.f32 0.0, %v4280
        %v4282 = vpop.f32.mrb[0].mxu0
        %4283 = vmatprep.mubr.f32.mxu0 0.0
        %4284 = vmatmul.mubr.f32.gmra.mrb[0].mxu0 %v4146
        %v4285 = vpop.f32.mrb[0].mxu0
        %v4286 = vpop.f32.mrb[0].mxu0
        %4287 = vdwg.mxu0
        %v4288 = vadd.f32 %v4074, %v4218
        %v4289 = vadd.f32 %v4075, %v4227
        %v4290 = vadd.f32 %v4076, %v4236
        %v4291 = vadd.f32 %v4077, %v4245
        %v4292 = vadd.f32 %v4078, %v4254
        %v4293 = vadd.f32 %v4079, %v4263
        %v4294 = vadd.f32 %v4080, %v4272
        %v4295 = vadd.f32 %v4081, %v4281
        %v4296 = vld [vmem:[#allocation2 + $0x34] sm:$0xff]
        %v4297 = vld [vmem:[#allocation2 + $0x3c] sm:$0xff]
        %v4298 = vld [vmem:[#allocation2 + $0x44] sm:$0xff]
        %v4299 = vld [vmem:[#allocation2 + $0x4c] sm:$0xff]
        %v4300 = vld [vmem:[#allocation2 + $0x54] sm:$0xff]
        %v4301 = vld [vmem:[#allocation2 + $0x5c] sm:$0xff]
        %v4302 = vld [vmem:[#allocation2 + $0x64] sm:$0xff]
        %v4303 = vld [vmem:[#allocation2 + $0x6c] sm:$0xff]
        %v4304 = vld [vmem:[#allocation2 + $0x74] sm:$0xff]
        %v4305 = vld [vmem:[#allocation2 + $0x7c] sm:$0xff]
        %v4306 = vld [vmem:[#allocation2 + $0x84] sm:$0xff]
        %v4307 = vld [vmem:[#allocation2 + $0x8c] sm:$0xff]
        %v4308 = vld [vmem:[#allocation2 + $0x94] sm:$0xff]
        %v4309 = vld [vmem:[#allocation2 + $0x9c] sm:$0xff]
        %v4310 = vld [vmem:[#allocation2 + $0xa4] sm:$0xff]
        %v4311 = vld [vmem:[#allocation2 + $0xac] sm:$0xff]
        %s4312 = scalar_lea.vmem %s1, 76
        %v4313 = vld [vmem:[%s4312] sm:$0xf]
        %v4315 = vsel %vm196, %v4296, 0
        %v4318 = vsel %vm196, %v4297, 0
        %v4321 = vsel %vm196, %v4298, 0
        %v4324 = vsel %vm196, %v4299, 0
        %v4327 = vsel %vm196, %v4300, 0
        %v4330 = vsel %vm196, %v4301, 0
        %v4333 = vsel %vm196, %v4302, 0
        %v4336 = vsel %vm196, %v4303, 0
        %v4339 = vsel %vm196, %v4304, 0
        %v4342 = vsel %vm196, %v4305, 0
        %v4345 = vsel %vm196, %v4306, 0
        %v4348 = vsel %vm196, %v4307, 0
        %v4351 = vsel %vm196, %v4308, 0
        %v4354 = vsel %vm196, %v4309, 0
        %v4357 = vsel %vm196, %v4310, 0
        %v4360 = vsel %vm196, %v4311, 0
        %v4363 = vsel %vm329, %v4313, 0
        %4365 = vmatprep.subr.mxu0 0.0
        %4366 = vmatpush1.msra.mxu0 %v4363
        %4367 = vmatprep.subr.mxu0 0.0
        %4368 = vmatpush1.msra.mxu0 0.0
        %4369 = vmatprep.subr.mxu0 0.0
        %4370 = vmatpush1.msra.mxu0 0.0
        %4371 = vmatprep.subr.mxu0 0.0
        %4372 = vmatpush1.msra.mxu0 0.0
        %4373 = vmatprep.subr.mxu0 0.0
        %4374 = vmatpush1.msra.mxu0 0.0
        %4375 = vmatprep.subr.mxu0 0.0
        %4376 = vmatpush1.msra.mxu0 0.0
        %4377 = vmatprep.subr.mxu0 0.0
        %4378 = vmatpush1.msra.mxu0 0.0
        %4379 = vmatprep.subr.mxu0 0.0
        %4380 = vmatpush1.msra.mxu0 0.0
        %4381 = vmatprep.subr.mxu0 0.0
        %4382 = vmatpush1.msra.mxu0 0.0
        %4383 = vmatprep.subr.mxu0 0.0
        %4384 = vmatpush1.msra.mxu0 0.0
        %4385 = vmatprep.subr.mxu0 0.0
        %4386 = vmatpush1.msra.mxu0 0.0
        %4387 = vmatprep.subr.mxu0 0.0
        %4388 = vmatpush1.msra.mxu0 0.0
        %4389 = vmatprep.subr.mxu0 0.0
        %4390 = vmatpush1.msra.mxu0 0.0
        %4391 = vmatprep.subr.mxu0 0.0
        %4392 = vmatpush1.msra.mxu0 0.0
        %4393 = vmatprep.subr.mxu0 0.0
        %4394 = vmatpush1.msra.mxu0 0.0
        %4395 = vmatprep.subr.mxu0 0.0
        %4396 = vmatpush1.msra.mxu0 0.0
        %4397 = vmatprep.subr.mxu0 0.0
        %4398 = vmatpush1.msra.mxu0 0.0
        %4399 = vmatprep.subr.mxu0 0.0
        %4400 = vmatpush1.msra.mxu0 0.0
        %4401 = vmatprep.subr.mxu0 0.0
        %4402 = vmatpush1.msra.mxu0 0.0
        %4403 = vmatprep.subr.mxu0 0.0
        %4404 = vmatpush1.msra.mxu0 0.0
        %4405 = vmatprep.subr.mxu0 0.0
        %4406 = vmatpush1.msra.mxu0 0.0
        %4407 = vmatprep.subr.mxu0 0.0
        %4408 = vmatpush1.msra.mxu0 0.0
        %4409 = vmatprep.subr.mxu0 0.0
        %4410 = vmatpush1.msra.mxu0 0.0
        %4411 = vmatprep.subr.mxu0 0.0
        %4412 = vmatpush1.msra.mxu0 0.0
        %4413 = vmatprep.subr.mxu0 0.0
        %4414 = vmatpush1.msra.mxu0 0.0
        %4415 = vmatprep.subr.mxu0 0.0
        %4416 = vmatpush1.msra.mxu0 0.0
        %4417 = vmatprep.subr.mxu0 0.0
        %4418 = vmatpush1.msra.mxu0 0.0
        %4419 = vmatprep.subr.mxu0 0.0
        %4420 = vmatpush1.msra.mxu0 0.0
        %4421 = vmatprep.subr.mxu0 0.0
        %4422 = vmatpush1.msra.mxu0 0.0
        %4423 = vmatprep.subr.mxu0 0.0
        %4424 = vmatpush1.msra.mxu0 0.0
        %4425 = vmatprep.subr.mxu0 0.0
        %4426 = vmatpush1.msra.mxu0 0.0
        %4427 = vmatprep.subr.mxu0 0.0
        %4428 = vmatpush1.msra.mxu0 0.0
        %4429 = vmatprep.mubr.f32.mxu0 0.0
        %4430 = vmatmul.mubr.f32.gmra.mrb[0].mxu0 %v4315
        %v4431 = vpop.f32.mrb[0].mxu0
        %v4432 = vadd.f32 0.0, %v4431
        %v4433 = vpop.f32.mrb[0].mxu0
        %4434 = vmatprep.mubr.f32.mxu0 0.0
        %4435 = vmatmul.mubr.f32.gmra.mrb[0].mxu0 %v4318
        %v4436 = vpop.f32.mrb[0].mxu0
        %v4437 = vpop.f32.mrb[0].mxu0
        %4438 = vmatprep.mubr.f32.mxu0 0.0
        %4439 = vmatmul.mubr.f32.gmra.mrb[0].mxu0 %v4321
        %v4440 = vpop.f32.mrb[0].mxu0
        %v4441 = vadd.f32 0.0, %v4440
        %v4442 = vpop.f32.mrb[0].mxu0
        %4443 = vmatprep.mubr.f32.mxu0 0.0
        %4444 = vmatmul.mubr.f32.gmra.mrb[0].mxu0 %v4324
        %v4445 = vpop.f32.mrb[0].mxu0
        %v4446 = vpop.f32.mrb[0].mxu0
        %4447 = vmatprep.mubr.f32.mxu0 0.0
        %4448 = vmatmul.mubr.f32.gmra.mrb[0].mxu0 %v4327
        %v4449 = vpop.f32.mrb[0].mxu0
        %v4450 = vadd.f32 0.0, %v4449
        %v4451 = vpop.f32.mrb[0].mxu0
        %4452 = vmatprep.mubr.f32.mxu0 0.0
        %4453 = vmatmul.mubr.f32.gmra.mrb[0].mxu0 %v4330
        %v4454 = vpop.f32.mrb[0].mxu0
        %v4455 = vpop.f32.mrb[0].mxu0
        %4456 = vmatprep.mubr.f32.mxu0 0.0
        %4457 = vmatmul.mubr.f32.gmra.mrb[0].mxu0 %v4333
        %v4458 = vpop.f32.mrb[0].mxu0
        %v4459 = vadd.f32 0.0, %v4458
        %v4460 = vpop.f32.mrb[0].mxu0
        %4461 = vmatprep.mubr.f32.mxu0 0.0
        %4462 = vmatmul.mubr.f32.gmra.mrb[0].mxu0 %v4336
        %v4463 = vpop.f32.mrb[0].mxu0
        %v4464 = vpop.f32.mrb[0].mxu0
        %4465 = vmatprep.mubr.f32.mxu0 0.0
        %4466 = vmatmul.mubr.f32.gmra.mrb[0].mxu0 %v4339
        %v4467 = vpop.f32.mrb[0].mxu0
        %v4468 = vadd.f32 0.0, %v4467
        %v4469 = vpop.f32.mrb[0].mxu0
        %4470 = vmatprep.mubr.f32.mxu0 0.0
        %4471 = vmatmul.mubr.f32.gmra.mrb[0].mxu0 %v4342
        %v4472 = vpop.f32.mrb[0].mxu0
        %v4473 = vpop.f32.mrb[0].mxu0
        %4474 = vmatprep.mubr.f32.mxu0 0.0
        %4475 = vmatmul.mubr.f32.gmra.mrb[0].mxu0 %v4345
        %v4476 = vpop.f32.mrb[0].mxu0
        %v4477 = vadd.f32 0.0, %v4476
        %v4478 = vpop.f32.mrb[0].mxu0
        %4479 = vmatprep.mubr.f32.mxu0 0.0
        %4480 = vmatmul.mubr.f32.gmra.mrb[0].mxu0 %v4348
        %v4481 = vpop.f32.mrb[0].mxu0
        %v4482 = vpop.f32.mrb[0].mxu0
        %4483 = vmatprep.mubr.f32.mxu0 0.0
        %4484 = vmatmul.mubr.f32.gmra.mrb[0].mxu0 %v4351
        %v4485 = vpop.f32.mrb[0].mxu0
        %v4486 = vadd.f32 0.0, %v4485
        %v4487 = vpop.f32.mrb[0].mxu0
        %4488 = vmatprep.mubr.f32.mxu0 0.0
        %4489 = vmatmul.mubr.f32.gmra.mrb[0].mxu0 %v4354
        %v4490 = vpop.f32.mrb[0].mxu0
        %v4491 = vpop.f32.mrb[0].mxu0
        %4492 = vmatprep.mubr.f32.mxu0 0.0
        %4493 = vmatmul.mubr.f32.gmra.mrb[0].mxu0 %v4357
        %v4494 = vpop.f32.mrb[0].mxu0
        %v4495 = vadd.f32 0.0, %v4494
        %v4496 = vpop.f32.mrb[0].mxu0
        %4497 = vmatprep.mubr.f32.mxu0 0.0
        %4498 = vmatmul.mubr.f32.gmra.mrb[0].mxu0 %v4360
        %v4499 = vpop.f32.mrb[0].mxu0
        %v4500 = vpop.f32.mrb[0].mxu0
        %4501 = vdwg.mxu0
        %v4502 = vadd.f32 %v4288, %v4432
        %v4503 = vadd.f32 %v4289, %v4441
        %v4504 = vadd.f32 %v4290, %v4450
        %v4505 = vadd.f32 %v4291, %v4459
        %v4506 = vadd.f32 %v4292, %v4468
        %v4507 = vadd.f32 %v4293, %v4477
        %v4508 = vadd.f32 %v4294, %v4486
        %v4509 = vadd.f32 %v4295, %v4495
        %v4510 = vld [vmem:[#allocation2 + $0x40] sm:$0xff]
        %v4511 = vld [vmem:[#allocation2 + $0x48] sm:$0xff]
        %v4512 = vld [vmem:[#allocation2 + $0x50] sm:$0xff]
        %v4513 = vld [vmem:[#allocation2 + $0x58] sm:$0xff]
        %v4514 = vld [vmem:[#allocation2 + $0x60] sm:$0xff]
        %v4515 = vld [vmem:[#allocation2 + $0x68] sm:$0xff]
        %v4516 = vld [vmem:[#allocation2 + $0x70] sm:$0xff]
        %v4517 = vld [vmem:[#allocation2 + $0x78] sm:$0xff]
        %v4518 = vld [vmem:[#allocation2 + $0x80] sm:$0xff]
        %v4519 = vld [vmem:[#allocation2 + $0x88] sm:$0xff]
        %v4520 = vld [vmem:[#allocation2 + $0x90] sm:$0xff]
        %v4521 = vld [vmem:[#allocation2 + $0x98] sm:$0xff]
        %v4522 = vld [vmem:[#allocation2 + $0xa0] sm:$0xff]
        %v4523 = vld [vmem:[#allocation2 + $0xa8] sm:$0xff]
        %v4524 = vld [vmem:[#allocation2 + $0xb0] sm:$0xff]
        %v4525 = vld [vmem:[#allocation2 + $0xb8] sm:$0xff]
        %s4526 = scalar_lea.vmem %s1, 80
        %v4527 = vld [vmem:[%s4526] sm:$0xf]
        %v4529 = vsel %vm196, %v4510, 0
        %v4532 = vsel %vm196, %v4511, 0
        %v4535 = vsel %vm196, %v4512, 0
        %v4538 = vsel %vm196, %v4513, 0
        %v4541 = vsel %vm196, %v4514, 0
        %v4544 = vsel %vm196, %v4515, 0
        %v4547 = vsel %vm196, %v4516, 0
        %v4550 = vsel %vm196, %v4517, 0
        %v4553 = vsel %vm196, %v4518, 0
        %v4556 = vsel %vm196, %v4519, 0
        %v4559 = vsel %vm196, %v4520, 0
        %v4562 = vsel %vm196, %v4521, 0
        %v4565 = vsel %vm196, %v4522, 0
        %v4568 = vsel %vm196, %v4523, 0
        %v4571 = vsel %vm196, %v4524, 0
        %v4574 = vsel %vm196, %v4525, 0
        %v4577 = vsel %vm329, %v4527, 0
        %4579 = vmatprep.subr.mxu0 0.0
        %4580 = vmatpush1.msra.mxu0 %v4577
        %4581 = vmatprep.subr.mxu0 0.0
        %4582 = vmatpush1.msra.mxu0 0.0
        %4583 = vmatprep.subr.mxu0 0.0
        %4584 = vmatpush1.msra.mxu0 0.0
        %4585 = vmatprep.subr.mxu0 0.0
        %4586 = vmatpush1.msra.mxu0 0.0
        %4587 = vmatprep.subr.mxu0 0.0
        %4588 = vmatpush1.msra.mxu0 0.0
        %4589 = vmatprep.subr.mxu0 0.0
        %4590 = vmatpush1.msra.mxu0 0.0
        %4591 = vmatprep.subr.mxu0 0.0
        %4592 = vmatpush1.msra.mxu0 0.0
        %4593 = vmatprep.subr.mxu0 0.0
        %4594 = vmatpush1.msra.mxu0 0.0
        %4595 = vmatprep.subr.mxu0 0.0
        %4596 = vmatpush1.msra.mxu0 0.0
        %4597 = vmatprep.subr.mxu0 0.0
        %4598 = vmatpush1.msra.mxu0 0.0
        %4599 = vmatprep.subr.mxu0 0.0
        %4600 = vmatpush1.msra.mxu0 0.0
        %4601 = vmatprep.subr.mxu0 0.0
        %4602 = vmatpush1.msra.mxu0 0.0
        %4603 = vmatprep.subr.mxu0 0.0
        %4604 = vmatpush1.msra.mxu0 0.0
        %4605 = vmatprep.subr.mxu0 0.0
        %4606 = vmatpush1.msra.mxu0 0.0
        %4607 = vmatprep.subr.mxu0 0.0
        %4608 = vmatpush1.msra.mxu0 0.0
        %4609 = vmatprep.subr.mxu0 0.0
        %4610 = vmatpush1.msra.mxu0 0.0
        %4611 = vmatprep.subr.mxu0 0.0
        %4612 = vmatpush1.msra.mxu0 0.0
        %4613 = vmatprep.subr.mxu0 0.0
        %4614 = vmatpush1.msra.mxu0 0.0
        %4615 = vmatprep.subr.mxu0 0.0
        %4616 = vmatpush1.msra.mxu0 0.0
        %4617 = vmatprep.subr.mxu0 0.0
        %4618 = vmatpush1.msra.mxu0 0.0
        %4619 = vmatprep.subr.mxu0 0.0
        %4620 = vmatpush1.msra.mxu0 0.0
        %4621 = vmatprep.subr.mxu0 0.0
        %4622 = vmatpush1.msra.mxu0 0.0
        %4623 = vmatprep.subr.mxu0 0.0
        %4624 = vmatpush1.msra.mxu0 0.0
        %4625 = vmatprep.subr.mxu0 0.0
        %4626 = vmatpush1.msra.mxu0 0.0
        %4627 = vmatprep.subr.mxu0 0.0
        %4628 = vmatpush1.msra.mxu0 0.0
        %4629 = vmatprep.subr.mxu0 0.0
        %4630 = vmatpush1.msra.mxu0 0.0
        %4631 = vmatprep.subr.mxu0 0.0
        %4632 = vmatpush1.msra.mxu0 0.0
        %4633 = vmatprep.subr.mxu0 0.0
        %4634 = vmatpush1.msra.mxu0 0.0
        %4635 = vmatprep.subr.mxu0 0.0
        %4636 = vmatpush1.msra.mxu0 0.0
        %4637 = vmatprep.subr.mxu0 0.0
        %4638 = vmatpush1.msra.mxu0 0.0
        %4639 = vmatprep.subr.mxu0 0.0
        %4640 = vmatpush1.msra.mxu0 0.0
        %4641 = vmatprep.subr.mxu0 0.0
        %4642 = vmatpush1.msra.mxu0 0.0
        %4643 = vmatprep.mubr.f32.mxu0 0.0
        %4644 = vmatmul.mubr.f32.gmra.mrb[0].mxu0 %v4529
        %v4645 = vpop.f32.mrb[0].mxu0
        %v4646 = vadd.f32 0.0, %v4645
        %v4647 = vpop.f32.mrb[0].mxu0
        %4648 = vmatprep.mubr.f32.mxu0 0.0
        %4649 = vmatmul.mubr.f32.gmra.mrb[0].mxu0 %v4532
        %v4650 = vpop.f32.mrb[0].mxu0
        %v4651 = vpop.f32.mrb[0].mxu0
        %4652 = vmatprep.mubr.f32.mxu0 0.0
        %4653 = vmatmul.mubr.f32.gmra.mrb[0].mxu0 %v4535
        %v4654 = vpop.f32.mrb[0].mxu0
        %v4655 = vadd.f32 0.0, %v4654
        %v4656 = vpop.f32.mrb[0].mxu0
        %4657 = vmatprep.mubr.f32.mxu0 0.0
        %4658 = vmatmul.mubr.f32.gmra.mrb[0].mxu0 %v4538
        %v4659 = vpop.f32.mrb[0].mxu0
        %v4660 = vpop.f32.mrb[0].mxu0
        %4661 = vmatprep.mubr.f32.mxu0 0.0
        %4662 = vmatmul.mubr.f32.gmra.mrb[0].mxu0 %v4541
        %v4663 = vpop.f32.mrb[0].mxu0
        %v4664 = vadd.f32 0.0, %v4663
        %v4665 = vpop.f32.mrb[0].mxu0
        %4666 = vmatprep.mubr.f32.mxu0 0.0
        %4667 = vmatmul.mubr.f32.gmra.mrb[0].mxu0 %v4544
        %v4668 = vpop.f32.mrb[0].mxu0
        %v4669 = vpop.f32.mrb[0].mxu0
        %4670 = vmatprep.mubr.f32.mxu0 0.0
        %4671 = vmatmul.mubr.f32.gmra.mrb[0].mxu0 %v4547
        %v4672 = vpop.f32.mrb[0].mxu0
        %v4673 = vadd.f32 0.0, %v4672
        %v4674 = vpop.f32.mrb[0].mxu0
        %4675 = vmatprep.mubr.f32.mxu0 0.0
        %4676 = vmatmul.mubr.f32.gmra.mrb[0].mxu0 %v4550
        %v4677 = vpop.f32.mrb[0].mxu0
        %v4678 = vpop.f32.mrb[0].mxu0
        %4679 = vmatprep.mubr.f32.mxu0 0.0
        %4680 = vmatmul.mubr.f32.gmra.mrb[0].mxu0 %v4553
        %v4681 = vpop.f32.mrb[0].mxu0
        %v4682 = vadd.f32 0.0, %v4681
        %v4683 = vpop.f32.mrb[0].mxu0
        %4684 = vmatprep.mubr.f32.mxu0 0.0
        %4685 = vmatmul.mubr.f32.gmra.mrb[0].mxu0 %v4556
        %v4686 = vpop.f32.mrb[0].mxu0
        %v4687 = vpop.f32.mrb[0].mxu0
        %4688 = vmatprep.mubr.f32.mxu0 0.0
        %4689 = vmatmul.mubr.f32.gmra.mrb[0].mxu0 %v4559
        %v4690 = vpop.f32.mrb[0].mxu0
        %v4691 = vadd.f32 0.0, %v4690
        %v4692 = vpop.f32.mrb[0].mxu0
        %4693 = vmatprep.mubr.f32.mxu0 0.0
        %4694 = vmatmul.mubr.f32.gmra.mrb[0].mxu0 %v4562
        %v4695 = vpop.f32.mrb[0].mxu0
        %v4696 = vpop.f32.mrb[0].mxu0
        %4697 = vmatprep.mubr.f32.mxu0 0.0
        %4698 = vmatmul.mubr.f32.gmra.mrb[0].mxu0 %v4565
        %v4699 = vpop.f32.mrb[0].mxu0
        %v4700 = vadd.f32 0.0, %v4699
        %v4701 = vpop.f32.mrb[0].mxu0
        %4702 = vmatprep.mubr.f32.mxu0 0.0
        %4703 = vmatmul.mubr.f32.gmra.mrb[0].mxu0 %v4568
        %v4704 = vpop.f32.mrb[0].mxu0
        %v4705 = vpop.f32.mrb[0].mxu0
        %4706 = vmatprep.mubr.f32.mxu0 0.0
        %4707 = vmatmul.mubr.f32.gmra.mrb[0].mxu0 %v4571
        %v4708 = vpop.f32.mrb[0].mxu0
        %v4709 = vadd.f32 0.0, %v4708
        %v4710 = vpop.f32.mrb[0].mxu0
        %4711 = vmatprep.mubr.f32.mxu0 0.0
        %4712 = vmatmul.mubr.f32.gmra.mrb[0].mxu0 %v4574
        %v4713 = vpop.f32.mrb[0].mxu0
        %v4714 = vpop.f32.mrb[0].mxu0
        %4715 = vdwg.mxu0
        %v4716 = vadd.f32 %v4502, %v4646
        %v4717 = vadd.f32 %v4503, %v4655
        %v4718 = vadd.f32 %v4504, %v4664
        %v4719 = vadd.f32 %v4505, %v4673
        %v4720 = vadd.f32 %v4506, %v4682
        %v4721 = vadd.f32 %v4507, %v4691
        %v4722 = vadd.f32 %v4508, %v4700
        %v4723 = vadd.f32 %v4509, %v4709
        %v4724 = vld [vmem:[#allocation2 + $0x41] sm:$0xff]
        %v4725 = vld [vmem:[#allocation2 + $0x49] sm:$0xff]
        %v4726 = vld [vmem:[#allocation2 + $0x51] sm:$0xff]
        %v4727 = vld [vmem:[#allocation2 + $0x59] sm:$0xff]
        %v4728 = vld [vmem:[#allocation2 + $0x61] sm:$0xff]
        %v4729 = vld [vmem:[#allocation2 + $0x69] sm:$0xff]
        %v4730 = vld [vmem:[#allocation2 + $0x71] sm:$0xff]
        %v4731 = vld [vmem:[#allocation2 + $0x79] sm:$0xff]
        %v4732 = vld [vmem:[#allocation2 + $0x81] sm:$0xff]
        %v4733 = vld [vmem:[#allocation2 + $0x89] sm:$0xff]
        %v4734 = vld [vmem:[#allocation2 + $0x91] sm:$0xff]
        %v4735 = vld [vmem:[#allocation2 + $0x99] sm:$0xff]
        %v4736 = vld [vmem:[#allocation2 + $0xa1] sm:$0xff]
        %v4737 = vld [vmem:[#allocation2 + $0xa9] sm:$0xff]
        %v4738 = vld [vmem:[#allocation2 + $0xb1] sm:$0xff]
        %v4739 = vld [vmem:[#allocation2 + $0xb9] sm:$0xff]
        %s4740 = scalar_lea.vmem %s1, 84
        %v4741 = vld [vmem:[%s4740] sm:$0xf]
        %v4743 = vsel %vm196, %v4724, 0
        %v4746 = vsel %vm196, %v4725, 0
        %v4749 = vsel %vm196, %v4726, 0
        %v4752 = vsel %vm196, %v4727, 0
        %v4755 = vsel %vm196, %v4728, 0
        %v4758 = vsel %vm196, %v4729, 0
        %v4761 = vsel %vm196, %v4730, 0
        %v4764 = vsel %vm196, %v4731, 0
        %v4767 = vsel %vm196, %v4732, 0
        %v4770 = vsel %vm196, %v4733, 0
        %v4773 = vsel %vm196, %v4734, 0
        %v4776 = vsel %vm196, %v4735, 0
        %v4779 = vsel %vm196, %v4736, 0
        %v4782 = vsel %vm196, %v4737, 0
        %v4785 = vsel %vm196, %v4738, 0
        %v4788 = vsel %vm196, %v4739, 0
        %v4791 = vsel %vm329, %v4741, 0
        %4793 = vmatprep.subr.mxu0 0.0
        %4794 = vmatpush1.msra.mxu0 %v4791
        %4795 = vmatprep.subr.mxu0 0.0
        %4796 = vmatpush1.msra.mxu0 0.0
        %4797 = vmatprep.subr.mxu0 0.0
        %4798 = vmatpush1.msra.mxu0 0.0
        %4799 = vmatprep.subr.mxu0 0.0
        %4800 = vmatpush1.msra.mxu0 0.0
        %4801 = vmatprep.subr.mxu0 0.0
        %4802 = vmatpush1.msra.mxu0 0.0
        %4803 = vmatprep.subr.mxu0 0.0
        %4804 = vmatpush1.msra.mxu0 0.0
        %4805 = vmatprep.subr.mxu0 0.0
        %4806 = vmatpush1.msra.mxu0 0.0
        %4807 = vmatprep.subr.mxu0 0.0
        %4808 = vmatpush1.msra.mxu0 0.0
        %4809 = vmatprep.subr.mxu0 0.0
        %4810 = vmatpush1.msra.mxu0 0.0
        %4811 = vmatprep.subr.mxu0 0.0
        %4812 = vmatpush1.msra.mxu0 0.0
        %4813 = vmatprep.subr.mxu0 0.0
        %4814 = vmatpush1.msra.mxu0 0.0
        %4815 = vmatprep.subr.mxu0 0.0
        %4816 = vmatpush1.msra.mxu0 0.0
        %4817 = vmatprep.subr.mxu0 0.0
        %4818 = vmatpush1.msra.mxu0 0.0
        %4819 = vmatprep.subr.mxu0 0.0
        %4820 = vmatpush1.msra.mxu0 0.0
        %4821 = vmatprep.subr.mxu0 0.0
        %4822 = vmatpush1.msra.mxu0 0.0
        %4823 = vmatprep.subr.mxu0 0.0
        %4824 = vmatpush1.msra.mxu0 0.0
        %4825 = vmatprep.subr.mxu0 0.0
        %4826 = vmatpush1.msra.mxu0 0.0
        %4827 = vmatprep.subr.mxu0 0.0
        %4828 = vmatpush1.msra.mxu0 0.0
        %4829 = vmatprep.subr.mxu0 0.0
        %4830 = vmatpush1.msra.mxu0 0.0
        %4831 = vmatprep.subr.mxu0 0.0
        %4832 = vmatpush1.msra.mxu0 0.0
        %4833 = vmatprep.subr.mxu0 0.0
        %4834 = vmatpush1.msra.mxu0 0.0
        %4835 = vmatprep.subr.mxu0 0.0
        %4836 = vmatpush1.msra.mxu0 0.0
        %4837 = vmatprep.subr.mxu0 0.0
        %4838 = vmatpush1.msra.mxu0 0.0
        %4839 = vmatprep.subr.mxu0 0.0
        %4840 = vmatpush1.msra.mxu0 0.0
        %4841 = vmatprep.subr.mxu0 0.0
        %4842 = vmatpush1.msra.mxu0 0.0
        %4843 = vmatprep.subr.mxu0 0.0
        %4844 = vmatpush1.msra.mxu0 0.0
        %4845 = vmatprep.subr.mxu0 0.0
        %4846 = vmatpush1.msra.mxu0 0.0
        %4847 = vmatprep.subr.mxu0 0.0
        %4848 = vmatpush1.msra.mxu0 0.0
        %4849 = vmatprep.subr.mxu0 0.0
        %4850 = vmatpush1.msra.mxu0 0.0
        %4851 = vmatprep.subr.mxu0 0.0
        %4852 = vmatpush1.msra.mxu0 0.0
        %4853 = vmatprep.subr.mxu0 0.0
        %4854 = vmatpush1.msra.mxu0 0.0
        %4855 = vmatprep.subr.mxu0 0.0
        %4856 = vmatpush1.msra.mxu0 0.0
        %4857 = vmatprep.mubr.f32.mxu0 0.0
        %4858 = vmatmul.mubr.f32.gmra.mrb[0].mxu0 %v4743
        %v4859 = vpop.f32.mrb[0].mxu0
        %v4860 = vadd.f32 0.0, %v4859
        %v4861 = vpop.f32.mrb[0].mxu0
        %4862 = vmatprep.mubr.f32.mxu0 0.0
        %4863 = vmatmul.mubr.f32.gmra.mrb[0].mxu0 %v4746
        %v4864 = vpop.f32.mrb[0].mxu0
        %v4865 = vpop.f32.mrb[0].mxu0
        %4866 = vmatprep.mubr.f32.mxu0 0.0
        %4867 = vmatmul.mubr.f32.gmra.mrb[0].mxu0 %v4749
        %v4868 = vpop.f32.mrb[0].mxu0
        %v4869 = vadd.f32 0.0, %v4868
        %v4870 = vpop.f32.mrb[0].mxu0
        %4871 = vmatprep.mubr.f32.mxu0 0.0
        %4872 = vmatmul.mubr.f32.gmra.mrb[0].mxu0 %v4752
        %v4873 = vpop.f32.mrb[0].mxu0
        %v4874 = vpop.f32.mrb[0].mxu0
        %4875 = vmatprep.mubr.f32.mxu0 0.0
        %4876 = vmatmul.mubr.f32.gmra.mrb[0].mxu0 %v4755
        %v4877 = vpop.f32.mrb[0].mxu0
        %v4878 = vadd.f32 0.0, %v4877
        %v4879 = vpop.f32.mrb[0].mxu0
        %4880 = vmatprep.mubr.f32.mxu0 0.0
        %4881 = vmatmul.mubr.f32.gmra.mrb[0].mxu0 %v4758
        %v4882 = vpop.f32.mrb[0].mxu0
        %v4883 = vpop.f32.mrb[0].mxu0
        %4884 = vmatprep.mubr.f32.mxu0 0.0
        %4885 = vmatmul.mubr.f32.gmra.mrb[0].mxu0 %v4761
        %v4886 = vpop.f32.mrb[0].mxu0
        %v4887 = vadd.f32 0.0, %v4886
        %v4888 = vpop.f32.mrb[0].mxu0
        %4889 = vmatprep.mubr.f32.mxu0 0.0
        %4890 = vmatmul.mubr.f32.gmra.mrb[0].mxu0 %v4764
        %v4891 = vpop.f32.mrb[0].mxu0
        %v4892 = vpop.f32.mrb[0].mxu0
        %4893 = vmatprep.mubr.f32.mxu0 0.0
        %4894 = vmatmul.mubr.f32.gmra.mrb[0].mxu0 %v4767
        %v4895 = vpop.f32.mrb[0].mxu0
        %v4896 = vadd.f32 0.0, %v4895
        %v4897 = vpop.f32.mrb[0].mxu0
        %4898 = vmatprep.mubr.f32.mxu0 0.0
        %4899 = vmatmul.mubr.f32.gmra.mrb[0].mxu0 %v4770
        %v4900 = vpop.f32.mrb[0].mxu0
        %v4901 = vpop.f32.mrb[0].mxu0
        %4902 = vmatprep.mubr.f32.mxu0 0.0
        %4903 = vmatmul.mubr.f32.gmra.mrb[0].mxu0 %v4773
        %v4904 = vpop.f32.mrb[0].mxu0
        %v4905 = vadd.f32 0.0, %v4904
        %v4906 = vpop.f32.mrb[0].mxu0
        %4907 = vmatprep.mubr.f32.mxu0 0.0
        %4908 = vmatmul.mubr.f32.gmra.mrb[0].mxu0 %v4776
        %v4909 = vpop.f32.mrb[0].mxu0
        %v4910 = vpop.f32.mrb[0].mxu0
        %4911 = vmatprep.mubr.f32.mxu0 0.0
        %4912 = vmatmul.mubr.f32.gmra.mrb[0].mxu0 %v4779
        %v4913 = vpop.f32.mrb[0].mxu0
        %v4914 = vadd.f32 0.0, %v4913
        %v4915 = vpop.f32.mrb[0].mxu0
        %4916 = vmatprep.mubr.f32.mxu0 0.0
        %4917 = vmatmul.mubr.f32.gmra.mrb[0].mxu0 %v4782
        %v4918 = vpop.f32.mrb[0].mxu0
        %v4919 = vpop.f32.mrb[0].mxu0
        %4920 = vmatprep.mubr.f32.mxu0 0.0
        %4921 = vmatmul.mubr.f32.gmra.mrb[0].mxu0 %v4785
        %v4922 = vpop.f32.mrb[0].mxu0
        %v4923 = vadd.f32 0.0, %v4922
        %v4924 = vpop.f32.mrb[0].mxu0
        %4925 = vmatprep.mubr.f32.mxu0 0.0
        %4926 = vmatmul.mubr.f32.gmra.mrb[0].mxu0 %v4788
        %v4927 = vpop.f32.mrb[0].mxu0
        %v4928 = vpop.f32.mrb[0].mxu0
        %4929 = vdwg.mxu0
        %v4930 = vadd.f32 %v4716, %v4860
        %v4931 = vadd.f32 %v4717, %v4869
        %v4932 = vadd.f32 %v4718, %v4878
        %v4933 = vadd.f32 %v4719, %v4887
        %v4934 = vadd.f32 %v4720, %v4896
        %v4935 = vadd.f32 %v4721, %v4905
        %v4936 = vadd.f32 %v4722, %v4914
        %v4937 = vadd.f32 %v4723, %v4923
        %v4938 = vld [vmem:[#allocation2 + $0x42] sm:$0xff]
        %v4939 = vld [vmem:[#allocation2 + $0x4a] sm:$0xff]
        %v4940 = vld [vmem:[#allocation2 + $0x52] sm:$0xff]
        %v4941 = vld [vmem:[#allocation2 + $0x5a] sm:$0xff]
        %v4942 = vld [vmem:[#allocation2 + $0x62] sm:$0xff]
        %v4943 = vld [vmem:[#allocation2 + $0x6a] sm:$0xff]
        %v4944 = vld [vmem:[#allocation2 + $0x72] sm:$0xff]
        %v4945 = vld [vmem:[#allocation2 + $0x7a] sm:$0xff]
        %v4946 = vld [vmem:[#allocation2 + $0x82] sm:$0xff]
        %v4947 = vld [vmem:[#allocation2 + $0x8a] sm:$0xff]
        %v4948 = vld [vmem:[#allocation2 + $0x92] sm:$0xff]
        %v4949 = vld [vmem:[#allocation2 + $0x9a] sm:$0xff]
        %v4950 = vld [vmem:[#allocation2 + $0xa2] sm:$0xff]
        %v4951 = vld [vmem:[#allocation2 + $0xaa] sm:$0xff]
        %v4952 = vld [vmem:[#allocation2 + $0xb2] sm:$0xff]
        %v4953 = vld [vmem:[#allocation2 + $0xba] sm:$0xff]
        %s4954 = scalar_lea.vmem %s1, 88
        %v4955 = vld [vmem:[%s4954] sm:$0xf]
        %v4957 = vsel %vm196, %v4938, 0
        %v4960 = vsel %vm196, %v4939, 0
        %v4963 = vsel %vm196, %v4940, 0
        %v4966 = vsel %vm196, %v4941, 0
        %v4969 = vsel %vm196, %v4942, 0
        %v4972 = vsel %vm196, %v4943, 0
        %v4975 = vsel %vm196, %v4944, 0
        %v4978 = vsel %vm196, %v4945, 0
        %v4981 = vsel %vm196, %v4946, 0
        %v4984 = vsel %vm196, %v4947, 0
        %v4987 = vsel %vm196, %v4948, 0
        %v4990 = vsel %vm196, %v4949, 0
        %v4993 = vsel %vm196, %v4950, 0
        %v4996 = vsel %vm196, %v4951, 0
        %v4999 = vsel %vm196, %v4952, 0
        %v5002 = vsel %vm196, %v4953, 0
        %v5005 = vsel %vm329, %v4955, 0
        %5007 = vmatprep.subr.mxu0 0.0
        %5008 = vmatpush1.msra.mxu0 %v5005
        %5009 = vmatprep.subr.mxu0 0.0
        %5010 = vmatpush1.msra.mxu0 0.0
        %5011 = vmatprep.subr.mxu0 0.0
        %5012 = vmatpush1.msra.mxu0 0.0
        %5013 = vmatprep.subr.mxu0 0.0
        %5014 = vmatpush1.msra.mxu0 0.0
        %5015 = vmatprep.subr.mxu0 0.0
        %5016 = vmatpush1.msra.mxu0 0.0
        %5017 = vmatprep.subr.mxu0 0.0
        %5018 = vmatpush1.msra.mxu0 0.0
        %5019 = vmatprep.subr.mxu0 0.0
        %5020 = vmatpush1.msra.mxu0 0.0
        %5021 = vmatprep.subr.mxu0 0.0
        %5022 = vmatpush1.msra.mxu0 0.0
        %5023 = vmatprep.subr.mxu0 0.0
        %5024 = vmatpush1.msra.mxu0 0.0
        %5025 = vmatprep.subr.mxu0 0.0
        %5026 = vmatpush1.msra.mxu0 0.0
        %5027 = vmatprep.subr.mxu0 0.0
        %5028 = vmatpush1.msra.mxu0 0.0
        %5029 = vmatprep.subr.mxu0 0.0
        %5030 = vmatpush1.msra.mxu0 0.0
        %5031 = vmatprep.subr.mxu0 0.0
        %5032 = vmatpush1.msra.mxu0 0.0
        %5033 = vmatprep.subr.mxu0 0.0
        %5034 = vmatpush1.msra.mxu0 0.0
        %5035 = vmatprep.subr.mxu0 0.0
        %5036 = vmatpush1.msra.mxu0 0.0
        %5037 = vmatprep.subr.mxu0 0.0
        %5038 = vmatpush1.msra.mxu0 0.0
        %5039 = vmatprep.subr.mxu0 0.0
        %5040 = vmatpush1.msra.mxu0 0.0
        %5041 = vmatprep.subr.mxu0 0.0
        %5042 = vmatpush1.msra.mxu0 0.0
        %5043 = vmatprep.subr.mxu0 0.0
        %5044 = vmatpush1.msra.mxu0 0.0
        %5045 = vmatprep.subr.mxu0 0.0
        %5046 = vmatpush1.msra.mxu0 0.0
        %5047 = vmatprep.subr.mxu0 0.0
        %5048 = vmatpush1.msra.mxu0 0.0
        %5049 = vmatprep.subr.mxu0 0.0
        %5050 = vmatpush1.msra.mxu0 0.0
        %5051 = vmatprep.subr.mxu0 0.0
        %5052 = vmatpush1.msra.mxu0 0.0
        %5053 = vmatprep.subr.mxu0 0.0
        %5054 = vmatpush1.msra.mxu0 0.0
        %5055 = vmatprep.subr.mxu0 0.0
        %5056 = vmatpush1.msra.mxu0 0.0
        %5057 = vmatprep.subr.mxu0 0.0
        %5058 = vmatpush1.msra.mxu0 0.0
        %5059 = vmatprep.subr.mxu0 0.0
        %5060 = vmatpush1.msra.mxu0 0.0
        %5061 = vmatprep.subr.mxu0 0.0
        %5062 = vmatpush1.msra.mxu0 0.0
        %5063 = vmatprep.subr.mxu0 0.0
        %5064 = vmatpush1.msra.mxu0 0.0
        %5065 = vmatprep.subr.mxu0 0.0
        %5066 = vmatpush1.msra.mxu0 0.0
        %5067 = vmatprep.subr.mxu0 0.0
        %5068 = vmatpush1.msra.mxu0 0.0
        %5069 = vmatprep.subr.mxu0 0.0
        %5070 = vmatpush1.msra.mxu0 0.0
        %5071 = vmatprep.mubr.f32.mxu0 0.0
        %5072 = vmatmul.mubr.f32.gmra.mrb[0].mxu0 %v4957
        %v5073 = vpop.f32.mrb[0].mxu0
        %v5074 = vadd.f32 0.0, %v5073
        %v5075 = vpop.f32.mrb[0].mxu0
        %5076 = vmatprep.mubr.f32.mxu0 0.0
        %5077 = vmatmul.mubr.f32.gmra.mrb[0].mxu0 %v4960
        %v5078 = vpop.f32.mrb[0].mxu0
        %v5079 = vpop.f32.mrb[0].mxu0
        %5080 = vmatprep.mubr.f32.mxu0 0.0
        %5081 = vmatmul.mubr.f32.gmra.mrb[0].mxu0 %v4963
        %v5082 = vpop.f32.mrb[0].mxu0
        %v5083 = vadd.f32 0.0, %v5082
        %v5084 = vpop.f32.mrb[0].mxu0
        %5085 = vmatprep.mubr.f32.mxu0 0.0
        %5086 = vmatmul.mubr.f32.gmra.mrb[0].mxu0 %v4966
        %v5087 = vpop.f32.mrb[0].mxu0
        %v5088 = vpop.f32.mrb[0].mxu0
        %5089 = vmatprep.mubr.f32.mxu0 0.0
        %5090 = vmatmul.mubr.f32.gmra.mrb[0].mxu0 %v4969
        %v5091 = vpop.f32.mrb[0].mxu0
        %v5092 = vadd.f32 0.0, %v5091
        %v5093 = vpop.f32.mrb[0].mxu0
        %5094 = vmatprep.mubr.f32.mxu0 0.0
        %5095 = vmatmul.mubr.f32.gmra.mrb[0].mxu0 %v4972
        %v5096 = vpop.f32.mrb[0].mxu0
        %v5097 = vpop.f32.mrb[0].mxu0
        %5098 = vmatprep.mubr.f32.mxu0 0.0
        %5099 = vmatmul.mubr.f32.gmra.mrb[0].mxu0 %v4975
        %v5100 = vpop.f32.mrb[0].mxu0
        %v5101 = vadd.f32 0.0, %v5100
        %v5102 = vpop.f32.mrb[0].mxu0
        %5103 = vmatprep.mubr.f32.mxu0 0.0
        %5104 = vmatmul.mubr.f32.gmra.mrb[0].mxu0 %v4978
        %v5105 = vpop.f32.mrb[0].mxu0
        %v5106 = vpop.f32.mrb[0].mxu0
        %5107 = vmatprep.mubr.f32.mxu0 0.0
        %5108 = vmatmul.mubr.f32.gmra.mrb[0].mxu0 %v4981
        %v5109 = vpop.f32.mrb[0].mxu0
        %v5110 = vadd.f32 0.0, %v5109
        %v5111 = vpop.f32.mrb[0].mxu0
        %5112 = vmatprep.mubr.f32.mxu0 0.0
        %5113 = vmatmul.mubr.f32.gmra.mrb[0].mxu0 %v4984
        %v5114 = vpop.f32.mrb[0].mxu0
        %v5115 = vpop.f32.mrb[0].mxu0
        %5116 = vmatprep.mubr.f32.mxu0 0.0
        %5117 = vmatmul.mubr.f32.gmra.mrb[0].mxu0 %v4987
        %v5118 = vpop.f32.mrb[0].mxu0
        %v5119 = vadd.f32 0.0, %v5118
        %v5120 = vpop.f32.mrb[0].mxu0
        %5121 = vmatprep.mubr.f32.mxu0 0.0
        %5122 = vmatmul.mubr.f32.gmra.mrb[0].mxu0 %v4990
        %v5123 = vpop.f32.mrb[0].mxu0
        %v5124 = vpop.f32.mrb[0].mxu0
        %5125 = vmatprep.mubr.f32.mxu0 0.0
        %5126 = vmatmul.mubr.f32.gmra.mrb[0].mxu0 %v4993
        %v5127 = vpop.f32.mrb[0].mxu0
        %v5128 = vadd.f32 0.0, %v5127
        %v5129 = vpop.f32.mrb[0].mxu0
        %5130 = vmatprep.mubr.f32.mxu0 0.0
        %5131 = vmatmul.mubr.f32.gmra.mrb[0].mxu0 %v4996
        %v5132 = vpop.f32.mrb[0].mxu0
        %v5133 = vpop.f32.mrb[0].mxu0
        %5134 = vmatprep.mubr.f32.mxu0 0.0
        %5135 = vmatmul.mubr.f32.gmra.mrb[0].mxu0 %v4999
        %v5136 = vpop.f32.mrb[0].mxu0
        %v5137 = vadd.f32 0.0, %v5136
        %v5138 = vpop.f32.mrb[0].mxu0
        %5139 = vmatprep.mubr.f32.mxu0 0.0
        %5140 = vmatmul.mubr.f32.gmra.mrb[0].mxu0 %v5002
        %v5141 = vpop.f32.mrb[0].mxu0
        %v5142 = vpop.f32.mrb[0].mxu0
        %5143 = vdwg.mxu0
        %v5144 = vadd.f32 %v4930, %v5074
        %v5145 = vadd.f32 %v4931, %v5083
        %v5146 = vadd.f32 %v4932, %v5092
        %v5147 = vadd.f32 %v4933, %v5101
        %v5148 = vadd.f32 %v4934, %v5110
        %v5149 = vadd.f32 %v4935, %v5119
        %v5150 = vadd.f32 %v4936, %v5128
        %v5151 = vadd.f32 %v4937, %v5137
        %v5152 = vld [vmem:[#allocation2 + $0x43] sm:$0xff]
        %v5153 = vld [vmem:[#allocation2 + $0x4b] sm:$0xff]
        %v5154 = vld [vmem:[#allocation2 + $0x53] sm:$0xff]
        %v5155 = vld [vmem:[#allocation2 + $0x5b] sm:$0xff]
        %v5156 = vld [vmem:[#allocation2 + $0x63] sm:$0xff]
        %v5157 = vld [vmem:[#allocation2 + $0x6b] sm:$0xff]
        %v5158 = vld [vmem:[#allocation2 + $0x73] sm:$0xff]
        %v5159 = vld [vmem:[#allocation2 + $0x7b] sm:$0xff]
        %v5160 = vld [vmem:[#allocation2 + $0x83] sm:$0xff]
        %v5161 = vld [vmem:[#allocation2 + $0x8b] sm:$0xff]
        %v5162 = vld [vmem:[#allocation2 + $0x93] sm:$0xff]
        %v5163 = vld [vmem:[#allocation2 + $0x9b] sm:$0xff]
        %v5164 = vld [vmem:[#allocation2 + $0xa3] sm:$0xff]
        %v5165 = vld [vmem:[#allocation2 + $0xab] sm:$0xff]
        %v5166 = vld [vmem:[#allocation2 + $0xb3] sm:$0xff]
        %v5167 = vld [vmem:[#allocation2 + $0xbb] sm:$0xff]
        %s5168 = scalar_lea.vmem %s1, 92
        %v5169 = vld [vmem:[%s5168] sm:$0xf]
        %v5171 = vsel %vm196, %v5152, 0
        %v5174 = vsel %vm196, %v5153, 0
        %v5177 = vsel %vm196, %v5154, 0
        %v5180 = vsel %vm196, %v5155, 0
        %v5183 = vsel %vm196, %v5156, 0
        %v5186 = vsel %vm196, %v5157, 0
        %v5189 = vsel %vm196, %v5158, 0
        %v5192 = vsel %vm196, %v5159, 0
        %v5195 = vsel %vm196, %v5160, 0
        %v5198 = vsel %vm196, %v5161, 0
        %v5201 = vsel %vm196, %v5162, 0
        %v5204 = vsel %vm196, %v5163, 0
        %v5207 = vsel %vm196, %v5164, 0
        %v5210 = vsel %vm196, %v5165, 0
        %v5213 = vsel %vm196, %v5166, 0
        %v5216 = vsel %vm196, %v5167, 0
        %v5219 = vsel %vm329, %v5169, 0
        %5221 = vmatprep.subr.mxu0 0.0
        %5222 = vmatpush1.msra.mxu0 %v5219
        %5223 = vmatprep.subr.mxu0 0.0
        %5224 = vmatpush1.msra.mxu0 0.0
        %5225 = vmatprep.subr.mxu0 0.0
        %5226 = vmatpush1.msra.mxu0 0.0
        %5227 = vmatprep.subr.mxu0 0.0
        %5228 = vmatpush1.msra.mxu0 0.0
        %5229 = vmatprep.subr.mxu0 0.0
        %5230 = vmatpush1.msra.mxu0 0.0
        %5231 = vmatprep.subr.mxu0 0.0
        %5232 = vmatpush1.msra.mxu0 0.0
        %5233 = vmatprep.subr.mxu0 0.0
        %5234 = vmatpush1.msra.mxu0 0.0
        %5235 = vmatprep.subr.mxu0 0.0
        %5236 = vmatpush1.msra.mxu0 0.0
        %5237 = vmatprep.subr.mxu0 0.0
        %5238 = vmatpush1.msra.mxu0 0.0
        %5239 = vmatprep.subr.mxu0 0.0
        %5240 = vmatpush1.msra.mxu0 0.0
        %5241 = vmatprep.subr.mxu0 0.0
        %5242 = vmatpush1.msra.mxu0 0.0
        %5243 = vmatprep.subr.mxu0 0.0
        %5244 = vmatpush1.msra.mxu0 0.0
        %5245 = vmatprep.subr.mxu0 0.0
        %5246 = vmatpush1.msra.mxu0 0.0
        %5247 = vmatprep.subr.mxu0 0.0
        %5248 = vmatpush1.msra.mxu0 0.0
        %5249 = vmatprep.subr.mxu0 0.0
        %5250 = vmatpush1.msra.mxu0 0.0
        %5251 = vmatprep.subr.mxu0 0.0
        %5252 = vmatpush1.msra.mxu0 0.0
        %5253 = vmatprep.subr.mxu0 0.0
        %5254 = vmatpush1.msra.mxu0 0.0
        %5255 = vmatprep.subr.mxu0 0.0
        %5256 = vmatpush1.msra.mxu0 0.0
        %5257 = vmatprep.subr.mxu0 0.0
        %5258 = vmatpush1.msra.mxu0 0.0
        %5259 = vmatprep.subr.mxu0 0.0
        %5260 = vmatpush1.msra.mxu0 0.0
        %5261 = vmatprep.subr.mxu0 0.0
        %5262 = vmatpush1.msra.mxu0 0.0
        %5263 = vmatprep.subr.mxu0 0.0
        %5264 = vmatpush1.msra.mxu0 0.0
        %5265 = vmatprep.subr.mxu0 0.0
        %5266 = vmatpush1.msra.mxu0 0.0
        %5267 = vmatprep.subr.mxu0 0.0
        %5268 = vmatpush1.msra.mxu0 0.0
        %5269 = vmatprep.subr.mxu0 0.0
        %5270 = vmatpush1.msra.mxu0 0.0
        %5271 = vmatprep.subr.mxu0 0.0
        %5272 = vmatpush1.msra.mxu0 0.0
        %5273 = vmatprep.subr.mxu0 0.0
        %5274 = vmatpush1.msra.mxu0 0.0
        %5275 = vmatprep.subr.mxu0 0.0
        %5276 = vmatpush1.msra.mxu0 0.0
        %5277 = vmatprep.subr.mxu0 0.0
        %5278 = vmatpush1.msra.mxu0 0.0
        %5279 = vmatprep.subr.mxu0 0.0
        %5280 = vmatpush1.msra.mxu0 0.0
        %5281 = vmatprep.subr.mxu0 0.0
        %5282 = vmatpush1.msra.mxu0 0.0
        %5283 = vmatprep.subr.mxu0 0.0
        %5284 = vmatpush1.msra.mxu0 0.0
        %5285 = vmatprep.mubr.f32.mxu0 0.0
        %5286 = vmatmul.mubr.f32.gmra.mrb[0].mxu0 %v5171
        %v5287 = vpop.f32.mrb[0].mxu0
        %v5288 = vadd.f32 0.0, %v5287
        %v5289 = vpop.f32.mrb[0].mxu0
        %5290 = vmatprep.mubr.f32.mxu0 0.0
        %5291 = vmatmul.mubr.f32.gmra.mrb[0].mxu0 %v5174
        %v5292 = vpop.f32.mrb[0].mxu0
        %v5293 = vpop.f32.mrb[0].mxu0
        %5294 = vmatprep.mubr.f32.mxu0 0.0
        %5295 = vmatmul.mubr.f32.gmra.mrb[0].mxu0 %v5177
        %v5296 = vpop.f32.mrb[0].mxu0
        %v5297 = vadd.f32 0.0, %v5296
        %v5298 = vpop.f32.mrb[0].mxu0
        %5299 = vmatprep.mubr.f32.mxu0 0.0
        %5300 = vmatmul.mubr.f32.gmra.mrb[0].mxu0 %v5180
        %v5301 = vpop.f32.mrb[0].mxu0
        %v5302 = vpop.f32.mrb[0].mxu0
        %5303 = vmatprep.mubr.f32.mxu0 0.0
        %5304 = vmatmul.mubr.f32.gmra.mrb[0].mxu0 %v5183
        %v5305 = vpop.f32.mrb[0].mxu0
        %v5306 = vadd.f32 0.0, %v5305
        %v5307 = vpop.f32.mrb[0].mxu0
        %5308 = vmatprep.mubr.f32.mxu0 0.0
        %5309 = vmatmul.mubr.f32.gmra.mrb[0].mxu0 %v5186
        %v5310 = vpop.f32.mrb[0].mxu0
        %v5311 = vpop.f32.mrb[0].mxu0
        %5312 = vmatprep.mubr.f32.mxu0 0.0
        %5313 = vmatmul.mubr.f32.gmra.mrb[0].mxu0 %v5189
        %v5314 = vpop.f32.mrb[0].mxu0
        %v5315 = vadd.f32 0.0, %v5314
        %v5316 = vpop.f32.mrb[0].mxu0
        %5317 = vmatprep.mubr.f32.mxu0 0.0
        %5318 = vmatmul.mubr.f32.gmra.mrb[0].mxu0 %v5192
        %v5319 = vpop.f32.mrb[0].mxu0
        %v5320 = vpop.f32.mrb[0].mxu0
        %5321 = vmatprep.mubr.f32.mxu0 0.0
        %5322 = vmatmul.mubr.f32.gmra.mrb[0].mxu0 %v5195
        %v5323 = vpop.f32.mrb[0].mxu0
        %v5324 = vadd.f32 0.0, %v5323
        %v5325 = vpop.f32.mrb[0].mxu0
        %5326 = vmatprep.mubr.f32.mxu0 0.0
        %5327 = vmatmul.mubr.f32.gmra.mrb[0].mxu0 %v5198
        %v5328 = vpop.f32.mrb[0].mxu0
        %v5329 = vpop.f32.mrb[0].mxu0
        %5330 = vmatprep.mubr.f32.mxu0 0.0
        %5331 = vmatmul.mubr.f32.gmra.mrb[0].mxu0 %v5201
        %v5332 = vpop.f32.mrb[0].mxu0
        %v5333 = vadd.f32 0.0, %v5332
        %v5334 = vpop.f32.mrb[0].mxu0
        %5335 = vmatprep.mubr.f32.mxu0 0.0
        %5336 = vmatmul.mubr.f32.gmra.mrb[0].mxu0 %v5204
        %v5337 = vpop.f32.mrb[0].mxu0
        %v5338 = vpop.f32.mrb[0].mxu0
        %5339 = vmatprep.mubr.f32.mxu0 0.0
        %5340 = vmatmul.mubr.f32.gmra.mrb[0].mxu0 %v5207
        %v5341 = vpop.f32.mrb[0].mxu0
        %v5342 = vadd.f32 0.0, %v5341
        %v5343 = vpop.f32.mrb[0].mxu0
        %5344 = vmatprep.mubr.f32.mxu0 0.0
        %5345 = vmatmul.mubr.f32.gmra.mrb[0].mxu0 %v5210
        %v5346 = vpop.f32.mrb[0].mxu0
        %v5347 = vpop.f32.mrb[0].mxu0
        %5348 = vmatprep.mubr.f32.mxu0 0.0
        %5349 = vmatmul.mubr.f32.gmra.mrb[0].mxu0 %v5213
        %v5350 = vpop.f32.mrb[0].mxu0
        %v5351 = vadd.f32 0.0, %v5350
        %v5352 = vpop.f32.mrb[0].mxu0
        %5353 = vmatprep.mubr.f32.mxu0 0.0
        %5354 = vmatmul.mubr.f32.gmra.mrb[0].mxu0 %v5216
        %v5355 = vpop.f32.mrb[0].mxu0
        %v5356 = vpop.f32.mrb[0].mxu0
        %5357 = vdwg.mxu0
        %v5358 = vadd.f32 %v5144, %v5288
        %v5359 = vadd.f32 %v5145, %v5297
        %v5360 = vadd.f32 %v5146, %v5306
        %v5361 = vadd.f32 %v5147, %v5315
        %v5362 = vadd.f32 %v5148, %v5324
        %v5363 = vadd.f32 %v5149, %v5333
        %v5364 = vadd.f32 %v5150, %v5342
        %v5365 = vadd.f32 %v5151, %v5351
        %v5366 = vld [vmem:[#allocation2 + $0x44] sm:$0xff]
        %v5367 = vld [vmem:[#allocation2 + $0x4c] sm:$0xff]
        %v5368 = vld [vmem:[#allocation2 + $0x54] sm:$0xff]
        %v5369 = vld [vmem:[#allocation2 + $0x5c] sm:$0xff]
        %v5370 = vld [vmem:[#allocation2 + $0x64] sm:$0xff]
        %v5371 = vld [vmem:[#allocation2 + $0x6c] sm:$0xff]
        %v5372 = vld [vmem:[#allocation2 + $0x74] sm:$0xff]
        %v5373 = vld [vmem:[#allocation2 + $0x7c] sm:$0xff]
        %v5374 = vld [vmem:[#allocation2 + $0x84] sm:$0xff]
        %v5375 = vld [vmem:[#allocation2 + $0x8c] sm:$0xff]
        %v5376 = vld [vmem:[#allocation2 + $0x94] sm:$0xff]
        %v5377 = vld [vmem:[#allocation2 + $0x9c] sm:$0xff]
        %v5378 = vld [vmem:[#allocation2 + $0xa4] sm:$0xff]
        %v5379 = vld [vmem:[#allocation2 + $0xac] sm:$0xff]
        %v5380 = vld [vmem:[#allocation2 + $0xb4] sm:$0xff]
        %v5381 = vld [vmem:[#allocation2 + $0xbc] sm:$0xff]
        %s5382 = scalar_lea.vmem %s1, 96
        %v5383 = vld [vmem:[%s5382] sm:$0xf]
        %v5385 = vsel %vm196, %v5366, 0
        %v5388 = vsel %vm196, %v5367, 0
        %v5391 = vsel %vm196, %v5368, 0
        %v5394 = vsel %vm196, %v5369, 0
        %v5397 = vsel %vm196, %v5370, 0
        %v5400 = vsel %vm196, %v5371, 0
        %v5403 = vsel %vm196, %v5372, 0
        %v5406 = vsel %vm196, %v5373, 0
        %v5409 = vsel %vm196, %v5374, 0
        %v5412 = vsel %vm196, %v5375, 0
        %v5415 = vsel %vm196, %v5376, 0
        %v5418 = vsel %vm196, %v5377, 0
        %v5421 = vsel %vm196, %v5378, 0
        %v5424 = vsel %vm196, %v5379, 0
        %v5427 = vsel %vm196, %v5380, 0
        %v5430 = vsel %vm196, %v5381, 0
        %v5433 = vsel %vm329, %v5383, 0
        %5435 = vmatprep.subr.mxu0 0.0
        %5436 = vmatpush1.msra.mxu0 %v5433
        %5437 = vmatprep.subr.mxu0 0.0
        %5438 = vmatpush1.msra.mxu0 0.0
        %5439 = vmatprep.subr.mxu0 0.0
        %5440 = vmatpush1.msra.mxu0 0.0
        %5441 = vmatprep.subr.mxu0 0.0
        %5442 = vmatpush1.msra.mxu0 0.0
        %5443 = vmatprep.subr.mxu0 0.0
        %5444 = vmatpush1.msra.mxu0 0.0
        %5445 = vmatprep.subr.mxu0 0.0
        %5446 = vmatpush1.msra.mxu0 0.0
        %5447 = vmatprep.subr.mxu0 0.0
        %5448 = vmatpush1.msra.mxu0 0.0
        %5449 = vmatprep.subr.mxu0 0.0
        %5450 = vmatpush1.msra.mxu0 0.0
        %5451 = vmatprep.subr.mxu0 0.0
        %5452 = vmatpush1.msra.mxu0 0.0
        %5453 = vmatprep.subr.mxu0 0.0
        %5454 = vmatpush1.msra.mxu0 0.0
        %5455 = vmatprep.subr.mxu0 0.0
        %5456 = vmatpush1.msra.mxu0 0.0
        %5457 = vmatprep.subr.mxu0 0.0
        %5458 = vmatpush1.msra.mxu0 0.0
        %5459 = vmatprep.subr.mxu0 0.0
        %5460 = vmatpush1.msra.mxu0 0.0
        %5461 = vmatprep.subr.mxu0 0.0
        %5462 = vmatpush1.msra.mxu0 0.0
        %5463 = vmatprep.subr.mxu0 0.0
        %5464 = vmatpush1.msra.mxu0 0.0
        %5465 = vmatprep.subr.mxu0 0.0
        %5466 = vmatpush1.msra.mxu0 0.0
        %5467 = vmatprep.subr.mxu0 0.0
        %5468 = vmatpush1.msra.mxu0 0.0
        %5469 = vmatprep.subr.mxu0 0.0
        %5470 = vmatpush1.msra.mxu0 0.0
        %5471 = vmatprep.subr.mxu0 0.0
        %5472 = vmatpush1.msra.mxu0 0.0
        %5473 = vmatprep.subr.mxu0 0.0
        %5474 = vmatpush1.msra.mxu0 0.0
        %5475 = vmatprep.subr.mxu0 0.0
        %5476 = vmatpush1.msra.mxu0 0.0
        %5477 = vmatprep.subr.mxu0 0.0
        %5478 = vmatpush1.msra.mxu0 0.0
        %5479 = vmatprep.subr.mxu0 0.0
        %5480 = vmatpush1.msra.mxu0 0.0
        %5481 = vmatprep.subr.mxu0 0.0
        %5482 = vmatpush1.msra.mxu0 0.0
        %5483 = vmatprep.subr.mxu0 0.0
        %5484 = vmatpush1.msra.mxu0 0.0
        %5485 = vmatprep.subr.mxu0 0.0
        %5486 = vmatpush1.msra.mxu0 0.0
        %5487 = vmatprep.subr.mxu0 0.0
        %5488 = vmatpush1.msra.mxu0 0.0
        %5489 = vmatprep.subr.mxu0 0.0
        %5490 = vmatpush1.msra.mxu0 0.0
        %5491 = vmatprep.subr.mxu0 0.0
        %5492 = vmatpush1.msra.mxu0 0.0
        %5493 = vmatprep.subr.mxu0 0.0
        %5494 = vmatpush1.msra.mxu0 0.0
        %5495 = vmatprep.subr.mxu0 0.0
        %5496 = vmatpush1.msra.mxu0 0.0
        %5497 = vmatprep.subr.mxu0 0.0
        %5498 = vmatpush1.msra.mxu0 0.0
        %5499 = vmatprep.mubr.f32.mxu0 0.0
        %5500 = vmatmul.mubr.f32.gmra.mrb[0].mxu0 %v5385
        %v5501 = vpop.f32.mrb[0].mxu0
        %v5502 = vadd.f32 0.0, %v5501
        %v5503 = vpop.f32.mrb[0].mxu0
        %5504 = vmatprep.mubr.f32.mxu0 0.0
        %5505 = vmatmul.mubr.f32.gmra.mrb[0].mxu0 %v5388
        %v5506 = vpop.f32.mrb[0].mxu0
        %v5507 = vpop.f32.mrb[0].mxu0
        %5508 = vmatprep.mubr.f32.mxu0 0.0
        %5509 = vmatmul.mubr.f32.gmra.mrb[0].mxu0 %v5391
        %v5510 = vpop.f32.mrb[0].mxu0
        %v5511 = vadd.f32 0.0, %v5510
        %v5512 = vpop.f32.mrb[0].mxu0
        %5513 = vmatprep.mubr.f32.mxu0 0.0
        %5514 = vmatmul.mubr.f32.gmra.mrb[0].mxu0 %v5394
        %v5515 = vpop.f32.mrb[0].mxu0
        %v5516 = vpop.f32.mrb[0].mxu0
        %5517 = vmatprep.mubr.f32.mxu0 0.0
        %5518 = vmatmul.mubr.f32.gmra.mrb[0].mxu0 %v5397
        %v5519 = vpop.f32.mrb[0].mxu0
        %v5520 = vadd.f32 0.0, %v5519
        %v5521 = vpop.f32.mrb[0].mxu0
        %5522 = vmatprep.mubr.f32.mxu0 0.0
        %5523 = vmatmul.mubr.f32.gmra.mrb[0].mxu0 %v5400
        %v5524 = vpop.f32.mrb[0].mxu0
        %v5525 = vpop.f32.mrb[0].mxu0
        %5526 = vmatprep.mubr.f32.mxu0 0.0
        %5527 = vmatmul.mubr.f32.gmra.mrb[0].mxu0 %v5403
        %v5528 = vpop.f32.mrb[0].mxu0
        %v5529 = vadd.f32 0.0, %v5528
        %v5530 = vpop.f32.mrb[0].mxu0
        %5531 = vmatprep.mubr.f32.mxu0 0.0
        %5532 = vmatmul.mubr.f32.gmra.mrb[0].mxu0 %v5406
        %v5533 = vpop.f32.mrb[0].mxu0
        %v5534 = vpop.f32.mrb[0].mxu0
        %5535 = vmatprep.mubr.f32.mxu0 0.0
        %5536 = vmatmul.mubr.f32.gmra.mrb[0].mxu0 %v5409
        %v5537 = vpop.f32.mrb[0].mxu0
        %v5538 = vadd.f32 0.0, %v5537
        %v5539 = vpop.f32.mrb[0].mxu0
        %5540 = vmatprep.mubr.f32.mxu0 0.0
        %5541 = vmatmul.mubr.f32.gmra.mrb[0].mxu0 %v5412
        %v5542 = vpop.f32.mrb[0].mxu0
        %v5543 = vpop.f32.mrb[0].mxu0
        %5544 = vmatprep.mubr.f32.mxu0 0.0
        %5545 = vmatmul.mubr.f32.gmra.mrb[0].mxu0 %v5415
        %v5546 = vpop.f32.mrb[0].mxu0
        %v5547 = vadd.f32 0.0, %v5546
        %v5548 = vpop.f32.mrb[0].mxu0
        %5549 = vmatprep.mubr.f32.mxu0 0.0
        %5550 = vmatmul.mubr.f32.gmra.mrb[0].mxu0 %v5418
        %v5551 = vpop.f32.mrb[0].mxu0
        %v5552 = vpop.f32.mrb[0].mxu0
        %5553 = vmatprep.mubr.f32.mxu0 0.0
        %5554 = vmatmul.mubr.f32.gmra.mrb[0].mxu0 %v5421
        %v5555 = vpop.f32.mrb[0].mxu0
        %v5556 = vadd.f32 0.0, %v5555
        %v5557 = vpop.f32.mrb[0].mxu0
        %5558 = vmatprep.mubr.f32.mxu0 0.0
        %5559 = vmatmul.mubr.f32.gmra.mrb[0].mxu0 %v5424
        %v5560 = vpop.f32.mrb[0].mxu0
        %v5561 = vpop.f32.mrb[0].mxu0
        %5562 = vmatprep.mubr.f32.mxu0 0.0
        %5563 = vmatmul.mubr.f32.gmra.mrb[0].mxu0 %v5427
        %v5564 = vpop.f32.mrb[0].mxu0
        %v5565 = vadd.f32 0.0, %v5564
        %v5566 = vpop.f32.mrb[0].mxu0
        %5567 = vmatprep.mubr.f32.mxu0 0.0
        %5568 = vmatmul.mubr.f32.gmra.mrb[0].mxu0 %v5430
        %v5569 = vpop.f32.mrb[0].mxu0
        %v5570 = vpop.f32.mrb[0].mxu0
        %5571 = vdwg.mxu0
        %v5572 = vadd.f32 %v5358, %v5502
        %v5573 = vadd.f32 %v5359, %v5511
        %v5574 = vadd.f32 %v5360, %v5520
        %v5575 = vadd.f32 %v5361, %v5529
        %v5576 = vadd.f32 %v5362, %v5538
        %v5577 = vadd.f32 %v5363, %v5547
        %v5578 = vadd.f32 %v5364, %v5556
        %v5579 = vadd.f32 %v5365, %v5565
        %v5580 = vld [vmem:[%s2] sm:$0x1]
        %v5582 = vlaneseq
        %v5583 = vshrl.u32 %v5582, 7
        %v5584 = vsub.s32 0, %v5583
        %v5585 = vrot.slane %v5580, %v5584
        %v5587 = vmul.f32 %v5572, %v5585
        %v5588 = vmul.f32 %v5573, %v5585
        %v5589 = vmul.f32 %v5574, %v5585
        %v5590 = vmul.f32 %v5575, %v5585
        %v5591 = vmul.f32 %v5576, %v5585
        %v5592 = vmul.f32 %v5577, %v5585
        %v5593 = vmul.f32 %v5578, %v5585
        %v5594 = vmul.f32 %v5579, %v5585
        %v5595 = vld [vmem:[%s3] sm:$0x1]
        %v5597 = vlaneseq
        %v5598 = vshrl.u32 %v5597, 7
        %v5599 = vsub.s32 0, %v5598
        %v5600 = vrot.slane %v5595, %v5599
        %v5602 = vadd.f32 %v5587, %v5600
        %v5603 = vadd.f32 %v5588, %v5600
        %v5604 = vadd.f32 %v5589, %v5600
        %v5605 = vadd.f32 %v5590, %v5600
        %v5606 = vadd.f32 %v5591, %v5600
        %v5607 = vadd.f32 %v5592, %v5600
        %v5608 = vadd.f32 %v5593, %v5600
        %v5609 = vadd.f32 %v5594, %v5600
        %v5610 = vmax.f32 %v5602, 0.0
        %v5611 = vmax.f32 %v5603, 0.0
        %v5612 = vmax.f32 %v5604, 0.0
        %v5613 = vmax.f32 %v5605, 0.0
        %v5614 = vmax.f32 %v5606, 0.0
        %v5615 = vmax.f32 %v5607, 0.0
        %v5616 = vmax.f32 %v5608, 0.0
        %v5617 = vmax.f32 %v5609, 0.0
        %vm5618 = vcmask 261120
        %5619 = vst.msk [vmem:[%s190] sm:$0xff] %vm5618, %v5610
        %5620 = vst.msk [vmem:[%s190 + $0x8] sm:$0xff] %vm5618, %v5611
        %5621 = vst.msk [vmem:[%s190 + $0x10] sm:$0xff] %vm5618, %v5612
        %5622 = vst.msk [vmem:[%s190 + $0x18] sm:$0xff] %vm5618, %v5613
        %5623 = vst.msk [vmem:[%s190 + $0x20] sm:$0xff] %vm5618, %v5614
        %5624 = vst.msk [vmem:[%s190 + $0x28] sm:$0xff] %vm5618, %v5615
        %5625 = vst.msk [vmem:[%s190 + $0x30] sm:$0xff] %vm5618, %v5616
        %5626 = vst.msk [vmem:[%s190 + $0x38] sm:$0xff] %vm5618, %v5617
        %s5627 = sand.u32 %s115, 1
        %s5628 = scalar_lea.sflag [#allocation4], %s5627
        %s5629 = sand.u32 %s115, 1
        %s5630 = smul.addr %s5629, 64
        %s5631 = scalar_lea.vmem [#allocation3], %s5630
        // Predicated region
        $region37: #{tpu_custom_call.1} parent=35 // pred_check
          %p5632 = pneg %p125
        $region38: #{tpu_custom_call.1} parent=35 // pred_check_branch
          %5634 = sbr.rel (%p5632) target = $region40
        $region39: #{tpu_custom_call.1} parent=35 // pred_region
          %s5636 = ssub.s32 1024, 1024
          %5637 = vsyncadd %s5628, %s5636
          %s5638 = smul.addr %s18, 8
          %s5639 = smul.addr %s5638, 128
          %s5640 = scalar_lea.hbm %s4, %s5639
          %s5641 = sshll.u32 %s5631, 4
          %s5642 = int_to_ptr.vmem [resolvable:$true] %s5641
          %5647 = dma.vmem_to_hbm [thread:$0]  %s5642, 1024, %s5640, %s5628, 128, 128, 8
        $region40: #{tpu_custom_call.1} parent=35 // pred_fallthru
          _
      $region36: #{tpu_custom_call.1} parent=5 // pred_fallthru
        _
      %p5648 = scmp.le.s32.totalorder 2, %s13
      // Predicated region
      $region41: #{tpu_custom_call.1} parent=5 // pred_check
        %p5649 = pneg %p5648
      $region42: #{tpu_custom_call.1} parent=5 // pred_check_branch
        %5651 = sbr.rel (%p5649) target = $region44
      $region43: #{tpu_custom_call.1} parent=5 // pred_region
        %s5652 = ssub.s32 %s13, 2
        // Predicated region
        $region45: #{tpu_custom_call.1} parent=43 // pred_check
          %p5653 = pneg %p131
        $region46: #{tpu_custom_call.1} parent=43 // pred_check_branch
          %5655 = sbr.rel (%p5653) target = $region48
        $region47: #{tpu_custom_call.1} parent=43 // pred_region
          %s5656 = sand.u32 %s116, 1
          %s5657 = scalar_lea.sflag [#allocation4], %s5656
          %s5658 = sand.u32 %s116, 1
          %s5659 = smul.addr %s5658, 64
          %s5660 = scalar_lea.vmem [#allocation3], %s5659
          %5661 = dma.done %s5657, 1024
        $region48: #{tpu_custom_call.1} parent=43 // pred_fallthru
          _
      $region44: #{tpu_custom_call.1} parent=5 // pred_fallthru
        _
    $region6: #{tpu_custom_call.1} parent=1 // loop_footer
      %s17 = sadd.s32 1, %s13
    $region7: #{tpu_custom_call.1} parent=1 // loop_footer_branch
      %12 = sbr.rel target = $region3
    $region8: #{tpu_custom_call.1} parent=1 // loop_exit
      _
    %5662 = vsyncpa [#allocation4], 1
    %s5663 = scalar_lea.sflag [#allocation4], 1
    %5664 = vsyncpa %s5663, 1

</llo_original>
